<compile_context>
chip_gen: v7x
topology: tpu7x:2x2x1
jax: 0.10.0
libtpu: 0.0.40
codegen_flags: <defaults>
</compile_context>

<pallas_src>
import functools

import jax
import jax.numpy as jnp
from jax.experimental import pallas as pl
from jax.experimental.pallas import tpu as pltpu

_EPS = 1e-5            # nn.BatchNorm2d default eps
_SCORE_PAD = 128       # pad nClasses to a full 128-lane tile (unmasked stores)


def _vmem_limit_bytes():
    """Generation-aware scoped-VMEM budget (v7x has 64 MiB physical, v5e/v6e 128 MiB)."""
    try:
        cap = int(pltpu.get_tpu_info().vmem_capacity_bytes)
    except Exception:
        cap = 128 * 1024 * 1024
    return max(24 * 1024 * 1024, min(int(cap * 0.45), 96 * 1024 * 1024))


_CP = pltpu.CompilerParams(vmem_limit_bytes=_vmem_limit_bytes())


# --------------------------------------------------------------------------- #
# In-kernel helpers
# --------------------------------------------------------------------------- #
def _batchnorm(v, gamma, beta, inv_m):
    """Training-mode BN on a (rows, C) f32 value: two-pass (centered) mean/var in f32."""
    mean = jnp.sum(v, axis=0, keepdims=True) * inv_m
    cen = v - mean
    var = jnp.sum(cen * cen, axis=0, keepdims=True) * inv_m
    scale = gamma * jax.lax.rsqrt(var + _EPS)
    return cen * scale + beta


# --------------------------------------------------------------------------- #
# Pallas kernels
# --------------------------------------------------------------------------- #
def _head_kernel(p_ref, w_ref, b_ref, g_ref, be_ref, o_ref):
    """7x7/s2 head conv (im2col matmul, bf16 operands) fused with bn_1 (batch stats) + ReLU."""
    y = jnp.dot(p_ref[...], w_ref[...], preferred_element_type=jnp.float32) + b_ref[...]
    inv_m = 1.0 / y.shape[0]
    o_ref[...] = jnp.maximum(_batchnorm(y, g_ref[...], be_ref[...], inv_m), 0.0)


def _resblock_kernel(*refs, H, W, has_skip, has_add):
    """Full HgResBlcok, everything VMEM-resident:
       bn1 -> conv1(1x1) -> relu -> bn2 -> conv2(3x3, pad 1) -> relu -> bn3 -> conv3(1x1)
       -> relu, then += residual (conv_skip(x) if channel change else x).
       The 3x3 conv is 9 row-shifted matmuls on the flat (N*H*W, mid) layout with
       image-boundary masks (zero padding semantics)."""
    it = iter(refs)
    x_ref = next(it)
    x2_ref = next(it) if has_add else None
    g1, be1 = next(it), next(it)
    w1, b1 = next(it), next(it)
    g2, be2 = next(it), next(it)
    w2, b2 = next(it), next(it)
    g3, be3 = next(it), next(it)
    w3, b3 = next(it), next(it)
    wsk, bsk = (next(it), next(it)) if has_skip else (None, None)
    o_ref = next(it)

    x = x_ref[...]
    if has_add:
        x = x + x2_ref[...]                  # fused hourglass up1 + up2 add
    m = x.shape[0]
    inv_m = 1.0 / m

    # bn1 -> conv1 (1x1) -> relu
    xn = _batchnorm(x, g1[...], be1[...], inv_m)
    y1 = jnp.dot(xn.astype(jnp.bfloat16), w1[...],
                 preferred_element_type=jnp.float32) + b1[...]
    y1 = jnp.maximum(y1, 0.0)

    # bn2 -> conv2 (3x3, pad 1) -> relu
    y1n = _batchnorm(y1, g2[...], be2[...], inv_m).astype(jnp.bfloat16)
    mid = y1n.shape[1]
    w2_all = w2[...]                         # (9*mid, mid) bf16, tap-blocked rows
    ridx = jax.lax.broadcasted_iota(jnp.int32, (m, mid), 0)
    rem = ridx % (H * W)
    i_idx = rem // W
    j_idx = rem - i_idx * W
    wp = W + 1
    zpad = jnp.zeros((wp, mid), jnp.bfloat16)
    ypad = jnp.concatenate([zpad, y1n, zpad], axis=0)
    acc = jnp.zeros((m, mid), jnp.float32)
    tap = 0
    for di in (-1, 0, 1):
        for dj in (-1, 0, 1):
            off = di * W + dj
            shifted = ypad[wp + off:wp + off + m, :]
            conds = []
            if di == -1:
                conds.append(i_idx >= 1)
            elif di == 1:
                conds.append(i_idx < H - 1)
            if dj == -1:
                conds.append(j_idx >= 1)
            elif dj == 1:
                conds.append(j_idx < W - 1)
            if conds:
                valid = conds[0]
                for cnd in conds[1:]:
                    valid = jnp.logical_and(valid, cnd)
                shifted = jnp.where(valid, shifted, jnp.zeros_like(shifted))
            acc = acc + jnp.dot(shifted, w2_all[tap * mid:(tap + 1) * mid, :],
                                preferred_element_type=jnp.float32)
            tap += 1
    y2 = jnp.maximum(acc + b2[...], 0.0)

    # bn3 -> conv3 (1x1) -> relu, then residual add (reference order: relu before +=).
    y2n = _batchnorm(y2, g3[...], be3[...], inv_m)
    out = jnp.dot(y2n.astype(jnp.bfloat16), w3[...],
                  preferred_element_type=jnp.float32) + b3[...]
    out = jnp.maximum(out, 0.0)
    if has_skip:
        res = jnp.dot(x.astype(jnp.bfloat16), wsk[...],
                      preferred_element_type=jnp.float32) + bsk[...]
    else:
        res = x
    o_ref[...] = out + res


def _fc_score_kernel(*refs, has_next):
    """Per-stack tail: fc (1x1 conv + BN + ReLU) -> score conv (lane-padded to 128), and
       optionally the inter-stack update x_next = x + fc_(y) + score_(score)."""
    it = iter(refs)
    yin = next(it)
    gfc, befc = next(it), next(it)
    wfc, bfc = next(it), next(it)
    wsc, bsc = next(it), next(it)
    if has_next:
        xb = next(it)
        wf_, bf_ = next(it), next(it)
        ws_, bs_ = next(it), next(it)
    score_ref = next(it)
    next_ref = next(it) if has_next else None

    x = yin[...]
    inv_m = 1.0 / x.shape[0]
    t = jnp.dot(x.astype(jnp.bfloat16), wfc[...],
                preferred_element_type=jnp.float32) + bfc[...]
    y = jnp.maximum(_batchnorm(t, gfc[...], befc[...], inv_m), 0.0)
    yb = y.astype(jnp.bfloat16)
    score = jnp.dot(yb, wsc[...], preferred_element_type=jnp.float32) + bsc[...]
    score_ref[...] = score
    if has_next:
        nxt = xb[...] + jnp.dot(yb, wf_[...],
                                preferred_element_type=jnp.float32) + bf_[...]
        nxt = nxt + jnp.dot(score.astype(jnp.bfloat16), ws_[...],
                            preferred_element_type=jnp.float32) + bs_[...]
        next_ref[...] = nxt


# --------------------------------------------------------------------------- #
# Glue (plain JAX): im2col (head only), pooling, upsample
# --------------------------------------------------------------------------- #
def im2col(x, kh, kw, stride, pad):
    n, h, w, c = x.shape
    xp = jnp.pad(x, ((0, 0), (pad, pad), (pad, pad), (0, 0)))
    oh = (h + 2 * pad - kh) // stride + 1
    ow = (w + 2 * pad - kw) // stride + 1
    cols = []
    for i in range(kh):
        for j in range(kw):
            cols.append(xp[:, i:i + stride * oh:stride, j:j + stride * ow:stride, :])
    patches = jnp.concatenate(cols, axis=-1)              # (N, oh, ow, kh*kw*C)
    return patches.reshape(n * oh * ow, kh * kw * c), oh, ow


def maxpool2x2(x):
    n, h, w, c = x.shape
    return x.reshape(n, h // 2, 2, w // 2, 2, c).max(axis=(2, 4))


def upsample2x_nearest(x):
    return jnp.repeat(jnp.repeat(x, 2, axis=1), 2, axis=2)


# --------------------------------------------------------------------------- #
# Layer wrappers (pallas_call sites)
# --------------------------------------------------------------------------- #
@jax.jit
def head_forward(x, conv_p, bn_p):
    """conv_1 (7x7 s2 p3) + bn_1 + ReLU, fused in one grid-less kernel."""
    n = x.shape[0]
    patches, oh, ow = im2col(x.astype(jnp.bfloat16), 7, 7, 2, 3)
    k = patches.shape[1]
    kp = ((k + 15) // 16) * 16                             # 147 -> 160 for clean bf16 tiling
    w = conv_p['w']
    if kp != k:
        patches = jnp.pad(patches, ((0, 0), (0, kp - k)))
        w = jnp.pad(w, ((0, kp - k), (0, 0)))
    cout = w.shape[1]
    out = pl.pallas_call(
        _head_kernel,
        out_shape=jax.ShapeDtypeStruct((patches.shape[0], cout), jnp.float32),
        compiler_params=_CP,
    )(patches, w.astype(jnp.bfloat16), conv_p['b'].reshape(1, cout),
      bn_p['gamma'].reshape(1, cout), bn_p['beta'].reshape(1, cout))
    return out.reshape(n, oh, ow, cout)


@jax.jit
def resblock_forward(x, p, x_add=None):
    """One fused pallas_call per HgResBlcok (optionally adding x_add to the input)."""
    n, h, w, cin = x.shape
    mid = p['conv2']['b'].shape[0]
    cout = p['conv3']['b'].shape[0]
    m = n * h * w
    has_skip = 'conv_skip' in p
    has_add = x_add is not None

    args = [x.reshape(m, cin).astype(jnp.float32)]
    if has_add:
        args.append(x_add.reshape(m, cin).astype(jnp.float32))
    args += [
        p['bn1']['gamma'].reshape(1, cin), p['bn1']['beta'].reshape(1, cin),
        p['conv1']['w'].astype(jnp.bfloat16), p['conv1']['b'].reshape(1, mid),
        p['bn2']['gamma'].reshape(1, mid), p['bn2']['beta'].reshape(1, mid),
        p['conv2']['w'].astype(jnp.bfloat16), p['conv2']['b'].reshape(1, mid),
        p['bn3']['gamma'].reshape(1, mid), p['bn3']['beta'].reshape(1, mid),
        p['conv3']['w'].astype(jnp.bfloat16), p['conv3']['b'].reshape(1, cout),
    ]
    if has_skip:
        args += [p['conv_skip']['w'].astype(jnp.bfloat16),
                 p['conv_skip']['b'].reshape(1, cout)]
    out = pl.pallas_call(
        functools.partial(_resblock_kernel, H=h, W=w,
                          has_skip=has_skip, has_add=has_add),
        out_shape=jax.ShapeDtypeStruct((m, cout), jnp.float32),
        compiler_params=_CP,
    )(*args)
    return out.reshape(n, h, w, cout)


def _fc_score_common_args(y4, fc_p, score_p):
    n, h, w, f = y4.shape
    m = n * h * w
    nc = score_p['b'].shape[0]
    ncp = ((nc + _SCORE_PAD - 1) // _SCORE_PAD) * _SCORE_PAD
    args = [
        y4.reshape(m, f).astype(jnp.float32),
        fc_p['bn']['gamma'].reshape(1, f), fc_p['bn']['beta'].reshape(1, f),
        fc_p['conv']['w'].astype(jnp.bfloat16), fc_p['conv']['b'].reshape(1, f),
        jnp.pad(score_p['w'], ((0, 0), (0, ncp - nc))).astype(jnp.bfloat16),
        jnp.pad(score_p['b'], (0, ncp - nc)).reshape(1, ncp),
    ]
    return args, m, f, nc, ncp


@jax.jit
def fc_score_last(y4, fc_p, score_p):
    args, m, _, _, ncp = _fc_score_common_args(y4, fc_p, score_p)
    return pl.pallas_call(
        functools.partial(_fc_score_kernel, has_next=False),
        out_shape=jax.ShapeDtypeStruct((m, ncp), jnp.float32),
        compiler_params=_CP,
    )(*args)


@jax.jit
def fc_score_next(y4, x4, fc_p, score_p, fc__p, score__p):
    n, h, w, _ = y4.shape
    args, m, f, nc, ncp = _fc_score_common_args(y4, fc_p, score_p)
    args += [
        x4.reshape(m, f).astype(jnp.float32),
        fc__p['w'].astype(jnp.bfloat16), fc__p['b'].reshape(1, f),
        jnp.pad(score__p['w'], ((0, ncp - nc), (0, 0))).astype(jnp.bfloat16),
        score__p['b'].reshape(1, f),
    ]
    score_pad, xn = pl.pallas_call(
        functools.partial(_fc_score_kernel, has_next=True),
        out_shape=(jax.ShapeDtypeStruct((m, ncp), jnp.float32),
                   jax.ShapeDtypeStruct((m, f), jnp.float32)),
        compiler_params=_CP,
    )(*args)
    return score_pad, xn.reshape(n, h, w, f)


# --------------------------------------------------------------------------- #
# Network structure
# --------------------------------------------------------------------------- #
def seq_forward(x, blocks, x_add=None):
    if not blocks:
        return x if x_add is None else x + x_add
    for k, bp in enumerate(blocks):
        x = resblock_forward(x, bp, x_add if k == 0 else None)
    return x


def hourglass_forward(hp, depth, d, x):
    """Returns the (up1, up2) pair; their sum is fused into the consumer's first resblock."""
    up1 = seq_forward(x, hp[d][0])
    low1 = seq_forward(maxpool2x2(x), hp[d][1])
    if d == depth - 1:
        low2 = seq_forward(low1, hp[d][3])
        low3 = seq_forward(low2, hp[d][2])
    else:
        u1, u2 = hourglass_forward(hp, depth, d + 1, low1)
        low3 = seq_forward(u1, hp[d][2], x_add=u2)
    # TODO(synk): nearest-2x upsample and 2x2 max-pool stay as tiny plain-JAX ops; the
    # following add is fused into the next resblock kernel instead of an in-kernel upsample.
    return up1, upsample2x_nearest(low3)


def hourglassnet_forward(x_nchw, params, n_stacks):
    x = jnp.transpose(x_nchw, (0, 2, 3, 1)).astype(jnp.float32)   # NCHW -> NHWC
    x = head_forward(x, params['conv_1'], params['bn_1'])
    x = resblock_forward(x, params['res_1'])
    x = maxpool2x2(x)
    x = resblock_forward(x, params['res_2'])
    x = resblock_forward(x, params['res_3'])

    outs = []
    for i in range(n_stacks):
        u1, u2 = hourglass_forward(params['hg'][i], 4, 0, x)
        y = seq_forward(u1, params['res'][i], x_add=u2)
        nb, hb, wb, _ = y.shape
        nclasses = params['score'][i]['b'].shape[0]
        if i < n_stacks - 1:
            score_pad, x = fc_score_next(y, x, params['fc'][i], params['score'][i],
                                         params['fc_'][i], params['score_'][i])
        else:
            score_pad = fc_score_last(y, params['fc'][i], params['score'][i])
        score = score_pad[:, :nclasses].reshape(nb, hb, wb, nclasses)
        outs.append(score)
    # TODO(synk): the reference forward() returns an empty list (`out.append(score)` is
    # missing in the original PyTorch code); we return the computed per-stack score maps.
    return [jnp.transpose(o, (0, 3, 1, 2)) for o in outs]          # back to NCHW


# --------------------------------------------------------------------------- #
# Deterministic parameter construction (shapes from the PyTorch __init__)
# --------------------------------------------------------------------------- #
class ParamGen:
    def __init__(self, seed=0):
        self.key = jax.random.PRNGKey(seed)

    def _draw(self, shape, scale):
        self.key, sub = jax.random.split(self.key)
        return scale * jax.random.normal(sub, shape, dtype=jnp.float32)

    def conv(self, cin, cout, k=1):
        fan_in = cin * k * k
        return {'w': self._draw((k * k * cin, cout), 1.0 / (fan_in ** 0.5)),
                'b': self._draw((cout,), 0.01)}

    def bn(self, c):
        return {'gamma': 1.0 + self._draw((c,), 0.05),
                'beta': self._draw((c,), 0.05)}

    def resblock(self, cin, cout):
        mid = cout // 2
        p = {'bn1': self.bn(cin), 'conv1': self.conv(cin, mid, 1),
             'bn2': self.bn(mid), 'conv2': self.conv(mid, mid, 3),
             'bn3': self.bn(mid), 'conv3': self.conv(mid, cout, 1)}
        if cin != cout:
            p['conv_skip'] = self.conv(cin, cout, 1)
        return p

    def residual_seq(self, n_modules, c):
        return [self.resblock(c, c) for _ in range(n_modules)]

    def hourglass(self, depth, n_feat, n_modules):
        hg = []
        for d in range(depth):
            n_res = 4 if d == depth - 1 else 3
            hg.append([self.residual_seq(n_modules, n_feat) for _ in range(n_res)])
        return hg


def build_params(n_stacks, n_modules, n_feat, n_classes, inplanes=3, seed=0):
    g = ParamGen(seed)
    return {
        'conv_1': g.conv(inplanes, 64, 7),
        'bn_1': g.bn(64),
        'res_1': g.resblock(64, 128),
        'res_2': g.resblock(128, 128),
        'res_3': g.resblock(128, n_feat),
        'hg': [g.hourglass(4, n_feat, n_modules) for _ in range(n_stacks)],
        'res': [g.residual_seq(n_modules, n_feat) for _ in range(n_stacks)],
        'fc': [{'conv': g.conv(n_feat, n_feat, 1), 'bn': g.bn(n_feat)} for _ in range(n_stacks)],
        'score': [g.conv(n_feat, n_classes, 1) for _ in range(n_stacks)],
        'fc_': [g.conv(n_feat, n_feat, 1) for _ in range(n_stacks - 1)],
        'score_': [g.conv(n_classes, n_feat, 1) for _ in range(n_stacks - 1)],
    }


# --------------------------------------------------------------------------- #
if __name__ == "__main__":
    nStacks, nModules, nFeat, nClasses, inplanes = 2, 1, 32, 4, 3
    params = build_params(nStacks, nModules, nFeat, nClasses, inplanes, seed=0)

    # Spatial size: head /4, then the depth-4 hourglass needs the base res divisible by 8.
    x = jax.random.normal(jax.random.PRNGKey(0), (2, inplanes, 64, 64), dtype=jnp.float32)

    outs = hourglassnet_forward(x, params, nStacks)
    outs = [jax.block_until_ready(o) for o in outs]

    assert len(outs) == nStacks
    assert all(o.shape == (2, nClasses, 16, 16) for o in outs), [o.shape for o in outs]
    assert all(bool(jnp.all(jnp.isfinite(o))) for o in outs)
    print("KERNEL_OK")
</pallas_src>

<mosaic_0001>
module attributes {stable_mosaic.version = 11 : i64} {
  func.func @_head_kernel(%arg0: memref<2048x160xbf16, #tpu.memory_space<vmem>>, %arg1: memref<160x64xbf16, #tpu.memory_space<vmem>>, %arg2: memref<1x64xf32, #tpu.memory_space<vmem>>, %arg3: memref<1x64xf32, #tpu.memory_space<vmem>>, %arg4: memref<1x64xf32, #tpu.memory_space<vmem>>, %arg5: memref<2048x64xf32, #tpu.memory_space<vmem>>) attributes {dimension_semantics = [], scalar_prefetch = 0 : i64, scratch_operands = 0 : i64, tpu.core_type = #tpu.core_type<tc>} {
    %c0 = arith.constant 0 : index
    %c0_0 = arith.constant 0 : index
    %0 = vector.load %arg0[%c0, %c0_0] : memref<2048x160xbf16, #tpu.memory_space<vmem>>, vector<2048x160xbf16>
    %c0_1 = arith.constant 0 : index
    %c0_2 = arith.constant 0 : index
    %1 = vector.load %arg1[%c0_1, %c0_2] : memref<160x64xbf16, #tpu.memory_space<vmem>>, vector<160x64xbf16>
    %cst = arith.constant dense<0.000000e+00> : vector<2048x64xf32>
    %2 = tpu.matmul %0, %1, %cst {dimension_numbers = #tpu.dot_dimension_numbers<[1], [0], [0], [1], [0, 0, 1, 1], [], []>} : vector<2048x160xbf16>, vector<160x64xbf16>, vector<2048x64xf32> -> vector<2048x64xf32>
    %c0_3 = arith.constant 0 : index
    %c0_4 = arith.constant 0 : index
    %3 = vector.load %arg2[%c0_3, %c0_4] : memref<1x64xf32, #tpu.memory_space<vmem>>, vector<1x64xf32>
    %4 = vector.broadcast %3 : vector<1x64xf32> to vector<2048x64xf32>
    %5 = arith.addf %2, %4 : vector<2048x64xf32>
    %c0_5 = arith.constant 0 : index
    %c0_6 = arith.constant 0 : index
    %6 = vector.load %arg3[%c0_5, %c0_6] : memref<1x64xf32, #tpu.memory_space<vmem>>, vector<1x64xf32>
    %c0_7 = arith.constant 0 : index
    %c0_8 = arith.constant 0 : index
    %7 = vector.load %arg4[%c0_7, %c0_8] : memref<1x64xf32, #tpu.memory_space<vmem>>, vector<1x64xf32>
    %cst_9 = arith.constant dense<0.000000e+00> : vector<64xf32>
    %8 = vector.multi_reduction <add>, %5, %cst_9 [0] : vector<2048x64xf32> to vector<64xf32>
    %9 = vector.shape_cast %8 : vector<64xf32> to vector<1x64xf32>
    %cst_10 = arith.constant 4.8828125E-4 : f32
    %10 = vector.broadcast %cst_10 : f32 to vector<1x64xf32>
    %11 = arith.mulf %9, %10 : vector<1x64xf32>
    %12 = vector.broadcast %11 : vector<1x64xf32> to vector<2048x64xf32>
    %13 = arith.subf %5, %12 : vector<2048x64xf32>
    %14 = arith.mulf %13, %13 : vector<2048x64xf32>
    %cst_11 = arith.constant dense<0.000000e+00> : vector<64xf32>
    %15 = vector.multi_reduction <add>, %14, %cst_11 [0] : vector<2048x64xf32> to vector<64xf32>
    %16 = vector.shape_cast %15 : vector<64xf32> to vector<1x64xf32>
    %cst_12 = arith.constant 4.8828125E-4 : f32
    %17 = vector.broadcast %cst_12 : f32 to vector<1x64xf32>
    %18 = arith.mulf %16, %17 : vector<1x64xf32>
    %cst_13 = arith.constant 9.99999974E-6 : f32
    %19 = vector.broadcast %cst_13 : f32 to vector<1x64xf32>
    %20 = arith.addf %18, %19 : vector<1x64xf32>
    %21 = math.rsqrt %20 : vector<1x64xf32>
    %22 = arith.mulf %6, %21 : vector<1x64xf32>
    %23 = vector.broadcast %22 : vector<1x64xf32> to vector<2048x64xf32>
    %24 = arith.mulf %13, %23 : vector<2048x64xf32>
    %25 = vector.broadcast %7 : vector<1x64xf32> to vector<2048x64xf32>
    %26 = arith.addf %24, %25 : vector<2048x64xf32>
    %cst_14 = arith.constant 0.000000e+00 : f32
    %27 = vector.broadcast %cst_14 : f32 to vector<2048x64xf32>
    %28 = arith.maximumf %26, %27 : vector<2048x64xf32>
    %c0_15 = arith.constant 0 : index
    %c0_16 = arith.constant 0 : index
    %29 = vector.load %arg5[%c0_15, %c0_16] : memref<2048x64xf32, #tpu.memory_space<vmem>>, vector<2048x64xf32>
    tpu.vector_store %arg5[%c0_15, %c0_16], %28 {strides = array<i32>} : memref<2048x64xf32, #tpu.memory_space<vmem>>, vector<2048x64xf32>,
    return
  }
}

</mosaic_0001>

<llo_original>
// kernel: head_forward.1
$region0: #{head_forward.1}
  #allocation0 [shape = 'u32[]', space=smem, size = 0x4, offset = 0x4, fixed_abs, tag = 'smem constant byte address 0x4 - core index']
  #allocation1 [shape = 'u32[144,128]{1,0:T(1,128)}', space=vmem, size = 0x12000, scoped, tag = 'internal scratch']
  %s0 = inlined_call_operand.vmem [shape: bf16[2048,160], index: 0, kind: input, shape index: {}]
  %s1 = inlined_call_operand.vmem [shape: bf16[160,64], index: 1, kind: input, shape index: {}]
  %s2 = inlined_call_operand.vmem [shape: f32[1,64], index: 2, kind: input, shape index: {}]
  %s3 = inlined_call_operand.vmem [shape: f32[1,64], index: 3, kind: input, shape index: {}]
  %s4 = inlined_call_operand.vmem [shape: f32[1,64], index: 4, kind: input, shape index: {}]
  %s5 = inlined_call_operand.hbm [shape: f32[2048,64], index: 5, kind: output, shape index: {}]
  %s6 = sld [smem:[#allocation0]]
  $region30: #{head_forward.1} parent=0
    _
  %s8 = ssub.s32 1, %s6
  %s9 = scalar_select 0, %s8, %s6
  $region1: #{head_forward.1} parent=0
    #allocation2 [shape = 'u8[1048576]{0}', space=vmem, size = 0x100000, scoped, tag = 'output window, operand 0, single buffered']
    #allocation3 [shape = 's32[1]{0}', space=sflag, size = 0x4, scoped, tag = 'scoped memory for head_forward.1']
    %10 = vsyncpa [#allocation3], 0
    // Predicated region
    $region2: #{head_forward.1} parent=1 // pred_check
      _
    $region3: #{head_forward.1} parent=1 // pred_check_branch
      %12 = sbr.rel (0) target = $region5
    $region4: #{head_forward.1} parent=1 // pred_region
      _
    $region5: #{head_forward.1} parent=1 // pred_fallthru
      _
    // Predicated region
    $region6: #{head_forward.1} parent=1 // pred_check
      _
    $region7: #{head_forward.1} parent=1 // pred_check_branch
      %14 = sbr.rel (0) target = $region9
    $region8: #{head_forward.1} parent=1 // pred_region
      _
    $region9: #{head_forward.1} parent=1 // pred_fallthru
      _
    // Predicated region
    $region10: #{head_forward.1} parent=1 // pred_check
      _
    $region11: #{head_forward.1} parent=1 // pred_check_branch
      %16 = sbr.rel (0) target = $region13
    $region12: #{head_forward.1} parent=1 // pred_region
      _
    $region13: #{head_forward.1} parent=1 // pred_fallthru
      _
    // Predicated region
    $region14: #{head_forward.1} parent=1 // pred_check
      _
    $region15: #{head_forward.1} parent=1 // pred_check_branch
      %18 = sbr.rel (0) target = $region17
    $region16: #{head_forward.1} parent=1 // pred_region
      _
    $region17: #{head_forward.1} parent=1 // pred_fallthru
      _
    // Predicated region
    $region18: #{head_forward.1} parent=1 // pred_check
      _
    $region19: #{head_forward.1} parent=1 // pred_check_branch
      %20 = sbr.rel (0) target = $region21
    $region20: #{head_forward.1} parent=1 // pred_region
      _
    $region21: #{head_forward.1} parent=1 // pred_fallthru
      _
    %v22 = vld [vmem:[%s0] sm:$0xff]
    %v23 = vld [vmem:[%s0 + $0x8] sm:$0xff]
    %v24 = vld [vmem:[%s0 + $0x10] sm:$0xff]
    %v25 = vld [vmem:[%s0 + $0x18] sm:$0xff]
    %v26 = vld [vmem:[%s0 + $0x20] sm:$0xff]
    %v27 = vld [vmem:[%s0 + $0x28] sm:$0xff]
    %v28 = vld [vmem:[%s0 + $0x30] sm:$0xff]
    %v29 = vld [vmem:[%s0 + $0x38] sm:$0xff]
    %v30 = vld [vmem:[%s0 + $0x40] sm:$0xff]
    %v31 = vld [vmem:[%s0 + $0x48] sm:$0xff]
    %v32 = vld [vmem:[%s0 + $0x50] sm:$0xff]
    %v33 = vld [vmem:[%s0 + $0x58] sm:$0xff]
    %v34 = vld [vmem:[%s0 + $0x60] sm:$0xff]
    %v35 = vld [vmem:[%s0 + $0x68] sm:$0xff]
    %v36 = vld [vmem:[%s0 + $0x70] sm:$0xff]
    %v37 = vld [vmem:[%s0 + $0x78] sm:$0xff]
    %v38 = vld [vmem:[%s0 + $0x80] sm:$0xff]
    %v39 = vld [vmem:[%s0 + $0x88] sm:$0xff]
    %v40 = vld [vmem:[%s0 + $0x90] sm:$0xff]
    %v41 = vld [vmem:[%s0 + $0x98] sm:$0xff]
    %v42 = vld [vmem:[%s0 + $0xa0] sm:$0xff]
    %v43 = vld [vmem:[%s0 + $0xa8] sm:$0xff]
    %v44 = vld [vmem:[%s0 + $0xb0] sm:$0xff]
    %v45 = vld [vmem:[%s0 + $0xb8] sm:$0xff]
    %v46 = vld [vmem:[%s0 + $0xc0] sm:$0xff]
    %v47 = vld [vmem:[%s0 + $0xc8] sm:$0xff]
    %v48 = vld [vmem:[%s0 + $0xd0] sm:$0xff]
    %v49 = vld [vmem:[%s0 + $0xd8] sm:$0xff]
    %v50 = vld [vmem:[%s0 + $0xe0] sm:$0xff]
    %v51 = vld [vmem:[%s0 + $0xe8] sm:$0xff]
    %v52 = vld [vmem:[%s0 + $0xf0] sm:$0xff]
    %v53 = vld [vmem:[%s0 + $0xf8] sm:$0xff]
    %v54 = vld [vmem:[%s0 + $0x100] sm:$0xff]
    %v55 = vld [vmem:[%s0 + $0x108] sm:$0xff]
    %v56 = vld [vmem:[%s0 + $0x110] sm:$0xff]
    %v57 = vld [vmem:[%s0 + $0x118] sm:$0xff]
    %v58 = vld [vmem:[%s0 + $0x120] sm:$0xff]
    %v59 = vld [vmem:[%s0 + $0x128] sm:$0xff]
    %v60 = vld [vmem:[%s0 + $0x130] sm:$0xff]
    %v61 = vld [vmem:[%s0 + $0x138] sm:$0xff]
    %v62 = vld [vmem:[%s0 + $0x140] sm:$0xff]
    %v63 = vld [vmem:[%s0 + $0x148] sm:$0xff]
    %v64 = vld [vmem:[%s0 + $0x150] sm:$0xff]
    %v65 = vld [vmem:[%s0 + $0x158] sm:$0xff]
    %v66 = vld [vmem:[%s0 + $0x160] sm:$0xff]
    %v67 = vld [vmem:[%s0 + $0x168] sm:$0xff]
    %v68 = vld [vmem:[%s0 + $0x170] sm:$0xff]
    %v69 = vld [vmem:[%s0 + $0x178] sm:$0xff]
    %v70 = vld [vmem:[%s0 + $0x180] sm:$0xff]
    %v71 = vld [vmem:[%s0 + $0x188] sm:$0xff]
    %v72 = vld [vmem:[%s0 + $0x190] sm:$0xff]
    %v73 = vld [vmem:[%s0 + $0x198] sm:$0xff]
    %v74 = vld [vmem:[%s0 + $0x1a0] sm:$0xff]
    %v75 = vld [vmem:[%s0 + $0x1a8] sm:$0xff]
    %v76 = vld [vmem:[%s0 + $0x1b0] sm:$0xff]
    %v77 = vld [vmem:[%s0 + $0x1b8] sm:$0xff]
    %v78 = vld [vmem:[%s0 + $0x1c0] sm:$0xff]
    %v79 = vld [vmem:[%s0 + $0x1c8] sm:$0xff]
    %v80 = vld [vmem:[%s0 + $0x1d0] sm:$0xff]
    %v81 = vld [vmem:[%s0 + $0x1d8] sm:$0xff]
    %v82 = vld [vmem:[%s0 + $0x1e0] sm:$0xff]
    %v83 = vld [vmem:[%s0 + $0x1e8] sm:$0xff]
    %v84 = vld [vmem:[%s0 + $0x1f0] sm:$0xff]
    %v85 = vld [vmem:[%s0 + $0x1f8] sm:$0xff]
    %v86 = vld [vmem:[%s0 + $0x200] sm:$0xff]
    %v87 = vld [vmem:[%s0 + $0x208] sm:$0xff]
    %v88 = vld [vmem:[%s0 + $0x210] sm:$0xff]
    %v89 = vld [vmem:[%s0 + $0x218] sm:$0xff]
    %v90 = vld [vmem:[%s0 + $0x220] sm:$0xff]
    %v91 = vld [vmem:[%s0 + $0x228] sm:$0xff]
    %v92 = vld [vmem:[%s0 + $0x230] sm:$0xff]
    %v93 = vld [vmem:[%s0 + $0x238] sm:$0xff]
    %v94 = vld [vmem:[%s0 + $0x240] sm:$0xff]
    %v95 = vld [vmem:[%s0 + $0x248] sm:$0xff]
    %v96 = vld [vmem:[%s0 + $0x250] sm:$0xff]
    %v97 = vld [vmem:[%s0 + $0x258] sm:$0xff]
    %v98 = vld [vmem:[%s0 + $0x260] sm:$0xff]
    %v99 = vld [vmem:[%s0 + $0x268] sm:$0xff]
    %v100 = vld [vmem:[%s0 + $0x270] sm:$0xff]
    %v101 = vld [vmem:[%s0 + $0x278] sm:$0xff]
    %v102 = vld [vmem:[%s0 + $0x280] sm:$0xff]
    %v103 = vld [vmem:[%s0 + $0x288] sm:$0xff]
    %v104 = vld [vmem:[%s0 + $0x290] sm:$0xff]
    %v105 = vld [vmem:[%s0 + $0x298] sm:$0xff]
    %v106 = vld [vmem:[%s0 + $0x2a0] sm:$0xff]
    %v107 = vld [vmem:[%s0 + $0x2a8] sm:$0xff]
    %v108 = vld [vmem:[%s0 + $0x2b0] sm:$0xff]
    %v109 = vld [vmem:[%s0 + $0x2b8] sm:$0xff]
    %v110 = vld [vmem:[%s0 + $0x2c0] sm:$0xff]
    %v111 = vld [vmem:[%s0 + $0x2c8] sm:$0xff]
    %v112 = vld [vmem:[%s0 + $0x2d0] sm:$0xff]
    %v113 = vld [vmem:[%s0 + $0x2d8] sm:$0xff]
    %v114 = vld [vmem:[%s0 + $0x2e0] sm:$0xff]
    %v115 = vld [vmem:[%s0 + $0x2e8] sm:$0xff]
    %v116 = vld [vmem:[%s0 + $0x2f0] sm:$0xff]
    %v117 = vld [vmem:[%s0 + $0x2f8] sm:$0xff]
    %v118 = vld [vmem:[%s0 + $0x300] sm:$0xff]
    %v119 = vld [vmem:[%s0 + $0x308] sm:$0xff]
    %v120 = vld [vmem:[%s0 + $0x310] sm:$0xff]
    %v121 = vld [vmem:[%s0 + $0x318] sm:$0xff]
    %v122 = vld [vmem:[%s0 + $0x320] sm:$0xff]
    %v123 = vld [vmem:[%s0 + $0x328] sm:$0xff]
    %v124 = vld [vmem:[%s0 + $0x330] sm:$0xff]
    %v125 = vld [vmem:[%s0 + $0x338] sm:$0xff]
    %v126 = vld [vmem:[%s0 + $0x340] sm:$0xff]
    %v127 = vld [vmem:[%s0 + $0x348] sm:$0xff]
    %v128 = vld [vmem:[%s0 + $0x350] sm:$0xff]
    %v129 = vld [vmem:[%s0 + $0x358] sm:$0xff]
    %v130 = vld [vmem:[%s0 + $0x360] sm:$0xff]
    %v131 = vld [vmem:[%s0 + $0x368] sm:$0xff]
    %v132 = vld [vmem:[%s0 + $0x370] sm:$0xff]
    %v133 = vld [vmem:[%s0 + $0x378] sm:$0xff]
    %v134 = vld [vmem:[%s0 + $0x380] sm:$0xff]
    %v135 = vld [vmem:[%s0 + $0x388] sm:$0xff]
    %v136 = vld [vmem:[%s0 + $0x390] sm:$0xff]
    %v137 = vld [vmem:[%s0 + $0x398] sm:$0xff]
    %v138 = vld [vmem:[%s0 + $0x3a0] sm:$0xff]
    %v139 = vld [vmem:[%s0 + $0x3a8] sm:$0xff]
    %v140 = vld [vmem:[%s0 + $0x3b0] sm:$0xff]
    %v141 = vld [vmem:[%s0 + $0x3b8] sm:$0xff]
    %v142 = vld [vmem:[%s0 + $0x3c0] sm:$0xff]
    %v143 = vld [vmem:[%s0 + $0x3c8] sm:$0xff]
    %v144 = vld [vmem:[%s0 + $0x3d0] sm:$0xff]
    %v145 = vld [vmem:[%s0 + $0x3d8] sm:$0xff]
    %v146 = vld [vmem:[%s0 + $0x3e0] sm:$0xff]
    %v147 = vld [vmem:[%s0 + $0x3e8] sm:$0xff]
    %v148 = vld [vmem:[%s0 + $0x3f0] sm:$0xff]
    %v149 = vld [vmem:[%s0 + $0x3f8] sm:$0xff]
    %v150 = vld [vmem:[%s0 + $0x400] sm:$0xff]
    %v151 = vld [vmem:[%s0 + $0x408] sm:$0xff]
    %v152 = vld [vmem:[%s0 + $0x410] sm:$0xff]
    %v153 = vld [vmem:[%s0 + $0x418] sm:$0xff]
    %v154 = vld [vmem:[%s0 + $0x420] sm:$0xff]
    %v155 = vld [vmem:[%s0 + $0x428] sm:$0xff]
    %v156 = vld [vmem:[%s0 + $0x430] sm:$0xff]
    %v157 = vld [vmem:[%s0 + $0x438] sm:$0xff]
    %v158 = vld [vmem:[%s0 + $0x440] sm:$0xff]
    %v159 = vld [vmem:[%s0 + $0x448] sm:$0xff]
    %v160 = vld [vmem:[%s0 + $0x450] sm:$0xff]
    %v161 = vld [vmem:[%s0 + $0x458] sm:$0xff]
    %v162 = vld [vmem:[%s0 + $0x460] sm:$0xff]
    %v163 = vld [vmem:[%s0 + $0x468] sm:$0xff]
    %v164 = vld [vmem:[%s0 + $0x470] sm:$0xff]
    %v165 = vld [vmem:[%s0 + $0x478] sm:$0xff]
    %v166 = vld [vmem:[%s0 + $0x480] sm:$0xff]
    %v167 = vld [vmem:[%s0 + $0x488] sm:$0xff]
    %v168 = vld [vmem:[%s0 + $0x490] sm:$0xff]
    %v169 = vld [vmem:[%s0 + $0x498] sm:$0xff]
    %v170 = vld [vmem:[%s0 + $0x4a0] sm:$0xff]
    %v171 = vld [vmem:[%s0 + $0x4a8] sm:$0xff]
    %v172 = vld [vmem:[%s0 + $0x4b0] sm:$0xff]
    %v173 = vld [vmem:[%s0 + $0x4b8] sm:$0xff]
    %v174 = vld [vmem:[%s0 + $0x4c0] sm:$0xff]
    %v175 = vld [vmem:[%s0 + $0x4c8] sm:$0xff]
    %v176 = vld [vmem:[%s0 + $0x4d0] sm:$0xff]
    %v177 = vld [vmem:[%s0 + $0x4d8] sm:$0xff]
    %v178 = vld [vmem:[%s0 + $0x4e0] sm:$0xff]
    %v179 = vld [vmem:[%s0 + $0x4e8] sm:$0xff]
    %v180 = vld [vmem:[%s0 + $0x4f0] sm:$0xff]
    %v181 = vld [vmem:[%s0 + $0x4f8] sm:$0xff]
    %v182 = vld [vmem:[%s0 + $0x500] sm:$0xff]
    %v183 = vld [vmem:[%s0 + $0x508] sm:$0xff]
    %v184 = vld [vmem:[%s0 + $0x510] sm:$0xff]
    %v185 = vld [vmem:[%s0 + $0x518] sm:$0xff]
    %v186 = vld [vmem:[%s0 + $0x520] sm:$0xff]
    %v187 = vld [vmem:[%s0 + $0x528] sm:$0xff]
    %v188 = vld [vmem:[%s0 + $0x530] sm:$0xff]
    %v189 = vld [vmem:[%s0 + $0x538] sm:$0xff]
    %v190 = vld [vmem:[%s0 + $0x540] sm:$0xff]
    %v191 = vld [vmem:[%s0 + $0x548] sm:$0xff]
    %v192 = vld [vmem:[%s0 + $0x550] sm:$0xff]
    %v193 = vld [vmem:[%s0 + $0x558] sm:$0xff]
    %v194 = vld [vmem:[%s0 + $0x560] sm:$0xff]
    %v195 = vld [vmem:[%s0 + $0x568] sm:$0xff]
    %v196 = vld [vmem:[%s0 + $0x570] sm:$0xff]
    %v197 = vld [vmem:[%s0 + $0x578] sm:$0xff]
    %v198 = vld [vmem:[%s0 + $0x580] sm:$0xff]
    %v199 = vld [vmem:[%s0 + $0x588] sm:$0xff]
    %v200 = vld [vmem:[%s0 + $0x590] sm:$0xff]
    %v201 = vld [vmem:[%s0 + $0x598] sm:$0xff]
    %v202 = vld [vmem:[%s0 + $0x5a0] sm:$0xff]
    %v203 = vld [vmem:[%s0 + $0x5a8] sm:$0xff]
    %v204 = vld [vmem:[%s0 + $0x5b0] sm:$0xff]
    %v205 = vld [vmem:[%s0 + $0x5b8] sm:$0xff]
    %v206 = vld [vmem:[%s0 + $0x5c0] sm:$0xff]
    %v207 = vld [vmem:[%s0 + $0x5c8] sm:$0xff]
    %v208 = vld [vmem:[%s0 + $0x5d0] sm:$0xff]
    %v209 = vld [vmem:[%s0 + $0x5d8] sm:$0xff]
    %v210 = vld [vmem:[%s0 + $0x5e0] sm:$0xff]
    %v211 = vld [vmem:[%s0 + $0x5e8] sm:$0xff]
    %v212 = vld [vmem:[%s0 + $0x5f0] sm:$0xff]
    %v213 = vld [vmem:[%s0 + $0x5f8] sm:$0xff]
    %v214 = vld [vmem:[%s0 + $0x600] sm:$0xff]
    %v215 = vld [vmem:[%s0 + $0x608] sm:$0xff]
    %v216 = vld [vmem:[%s0 + $0x610] sm:$0xff]
    %v217 = vld [vmem:[%s0 + $0x618] sm:$0xff]
    %v218 = vld [vmem:[%s0 + $0x620] sm:$0xff]
    %v219 = vld [vmem:[%s0 + $0x628] sm:$0xff]
    %v220 = vld [vmem:[%s0 + $0x630] sm:$0xff]
    %v221 = vld [vmem:[%s0 + $0x638] sm:$0xff]
    %v222 = vld [vmem:[%s0 + $0x640] sm:$0xff]
    %v223 = vld [vmem:[%s0 + $0x648] sm:$0xff]
    %v224 = vld [vmem:[%s0 + $0x650] sm:$0xff]
    %v225 = vld [vmem:[%s0 + $0x658] sm:$0xff]
    %v226 = vld [vmem:[%s0 + $0x660] sm:$0xff]
    %v227 = vld [vmem:[%s0 + $0x668] sm:$0xff]
    %v228 = vld [vmem:[%s0 + $0x670] sm:$0xff]
    %v229 = vld [vmem:[%s0 + $0x678] sm:$0xff]
    %v230 = vld [vmem:[%s0 + $0x680] sm:$0xff]
    %v231 = vld [vmem:[%s0 + $0x688] sm:$0xff]
    %v232 = vld [vmem:[%s0 + $0x690] sm:$0xff]
    %v233 = vld [vmem:[%s0 + $0x698] sm:$0xff]
    %v234 = vld [vmem:[%s0 + $0x6a0] sm:$0xff]
    %v235 = vld [vmem:[%s0 + $0x6a8] sm:$0xff]
    %v236 = vld [vmem:[%s0 + $0x6b0] sm:$0xff]
    %v237 = vld [vmem:[%s0 + $0x6b8] sm:$0xff]
    %v238 = vld [vmem:[%s0 + $0x6c0] sm:$0xff]
    %v239 = vld [vmem:[%s0 + $0x6c8] sm:$0xff]
    %v240 = vld [vmem:[%s0 + $0x6d0] sm:$0xff]
    %v241 = vld [vmem:[%s0 + $0x6d8] sm:$0xff]
    %v242 = vld [vmem:[%s0 + $0x6e0] sm:$0xff]
    %v243 = vld [vmem:[%s0 + $0x6e8] sm:$0xff]
    %v244 = vld [vmem:[%s0 + $0x6f0] sm:$0xff]
    %v245 = vld [vmem:[%s0 + $0x6f8] sm:$0xff]
    %v246 = vld [vmem:[%s0 + $0x700] sm:$0xff]
    %v247 = vld [vmem:[%s0 + $0x708] sm:$0xff]
    %v248 = vld [vmem:[%s0 + $0x710] sm:$0xff]
    %v249 = vld [vmem:[%s0 + $0x718] sm:$0xff]
    %v250 = vld [vmem:[%s0 + $0x720] sm:$0xff]
    %v251 = vld [vmem:[%s0 + $0x728] sm:$0xff]
    %v252 = vld [vmem:[%s0 + $0x730] sm:$0xff]
    %v253 = vld [vmem:[%s0 + $0x738] sm:$0xff]
    %v254 = vld [vmem:[%s0 + $0x740] sm:$0xff]
    %v255 = vld [vmem:[%s0 + $0x748] sm:$0xff]
    %v256 = vld [vmem:[%s0 + $0x750] sm:$0xff]
    %v257 = vld [vmem:[%s0 + $0x758] sm:$0xff]
    %v258 = vld [vmem:[%s0 + $0x760] sm:$0xff]
    %v259 = vld [vmem:[%s0 + $0x768] sm:$0xff]
    %v260 = vld [vmem:[%s0 + $0x770] sm:$0xff]
    %v261 = vld [vmem:[%s0 + $0x778] sm:$0xff]
    %v262 = vld [vmem:[%s0 + $0x780] sm:$0xff]
    %v263 = vld [vmem:[%s0 + $0x788] sm:$0xff]
    %v264 = vld [vmem:[%s0 + $0x790] sm:$0xff]
    %v265 = vld [vmem:[%s0 + $0x798] sm:$0xff]
    %v266 = vld [vmem:[%s0 + $0x7a0] sm:$0xff]
    %v267 = vld [vmem:[%s0 + $0x7a8] sm:$0xff]
    %v268 = vld [vmem:[%s0 + $0x7b0] sm:$0xff]
    %v269 = vld [vmem:[%s0 + $0x7b8] sm:$0xff]
    %v270 = vld [vmem:[%s0 + $0x7c0] sm:$0xff]
    %v271 = vld [vmem:[%s0 + $0x7c8] sm:$0xff]
    %v272 = vld [vmem:[%s0 + $0x7d0] sm:$0xff]
    %v273 = vld [vmem:[%s0 + $0x7d8] sm:$0xff]
    %v274 = vld [vmem:[%s0 + $0x7e0] sm:$0xff]
    %v275 = vld [vmem:[%s0 + $0x7e8] sm:$0xff]
    %v276 = vld [vmem:[%s0 + $0x7f0] sm:$0xff]
    %v277 = vld [vmem:[%s0 + $0x7f8] sm:$0xff]
    %v278 = vld [vmem:[%s1] sm:$0xf]
    %v279 = vld [vmem:[%s1 + $0x4] sm:$0xf]
    %v280 = vld [vmem:[%s1 + $0x8] sm:$0xf]
    %v281 = vld [vmem:[%s1 + $0xc] sm:$0xf]
    %v282 = vld [vmem:[%s1 + $0x10] sm:$0xf]
    %v283 = vld [vmem:[%s1 + $0x14] sm:$0xf]
    %v284 = vld [vmem:[%s1 + $0x18] sm:$0xf]
    %v285 = vld [vmem:[%s1 + $0x1c] sm:$0xf]
    %v286 = vld [vmem:[%s1 + $0x20] sm:$0xf]
    %v287 = vld [vmem:[%s1 + $0x24] sm:$0xf]
    %v288 = vld [vmem:[%s1 + $0x28] sm:$0xf]
    %v289 = vld [vmem:[%s1 + $0x2c] sm:$0xf]
    %v290 = vld [vmem:[%s1 + $0x30] sm:$0xf]
    %v291 = vld [vmem:[%s1 + $0x34] sm:$0xf]
    %v292 = vld [vmem:[%s1 + $0x38] sm:$0xf]
    %v293 = vld [vmem:[%s1 + $0x3c] sm:$0xf]
    %v294 = vld [vmem:[%s1 + $0x40] sm:$0xf]
    %v295 = vld [vmem:[%s1 + $0x44] sm:$0xf]
    %v296 = vld [vmem:[%s1 + $0x48] sm:$0xf]
    %v297 = vld [vmem:[%s1 + $0x4c] sm:$0xf]
    %v298 = vld [vmem:[%s2] sm:$0x1]
    %v300 = vlaneseq
    %v301 = vshrl.u32 %v300, 7
    %v302 = vsub.s32 0, %v301
    %v303 = vrot.slane %v298, %v302
    %v561 = vunpack.c.l.b16 %v22
    %v562 = vunpack.c.h.b16 %v22
    %v563 = vunpack.c.l.b16 %v23
    %v564 = vunpack.c.h.b16 %v23
    %v565 = vunpack.c.l.b16 %v24
    %v566 = vunpack.c.h.b16 %v24
    %v567 = vunpack.c.l.b16 %v25
    %v568 = vunpack.c.h.b16 %v25
    %v569 = vunpack.c.l.b16 %v26
    %v570 = vunpack.c.h.b16 %v26
    %v571 = vunpack.c.l.b16 %v27
    %v572 = vunpack.c.h.b16 %v27
    %v573 = vunpack.c.l.b16 %v28
    %v574 = vunpack.c.h.b16 %v28
    %v575 = vunpack.c.l.b16 %v29
    %v576 = vunpack.c.h.b16 %v29
    %v577 = vunpack.c.l.b16 %v30
    %v578 = vunpack.c.h.b16 %v30
    %v579 = vunpack.c.l.b16 %v31
    %v580 = vunpack.c.h.b16 %v31
    %v581 = vunpack.c.l.b16 %v32
    %v582 = vunpack.c.h.b16 %v32
    %v583 = vunpack.c.l.b16 %v33
    %v584 = vunpack.c.h.b16 %v33
    %v585 = vunpack.c.l.b16 %v34
    %v586 = vunpack.c.h.b16 %v34
    %v587 = vunpack.c.l.b16 %v35
    %v588 = vunpack.c.h.b16 %v35
    %v589 = vunpack.c.l.b16 %v36
    %v590 = vunpack.c.h.b16 %v36
    %v591 = vunpack.c.l.b16 %v37
    %v592 = vunpack.c.h.b16 %v37
    %v593 = vunpack.c.l.b16 %v38
    %v594 = vunpack.c.h.b16 %v38
    %v595 = vunpack.c.l.b16 %v39
    %v596 = vunpack.c.h.b16 %v39
    %v597 = vunpack.c.l.b16 %v40
    %v598 = vunpack.c.h.b16 %v40
    %v599 = vunpack.c.l.b16 %v41
    %v600 = vunpack.c.h.b16 %v41
    %v601 = vunpack.c.l.b16 %v42
    %v602 = vunpack.c.h.b16 %v42
    %v603 = vunpack.c.l.b16 %v43
    %v604 = vunpack.c.h.b16 %v43
    %v605 = vunpack.c.l.b16 %v44
    %v606 = vunpack.c.h.b16 %v44
    %v607 = vunpack.c.l.b16 %v45
    %v608 = vunpack.c.h.b16 %v45
    %v609 = vunpack.c.l.b16 %v46
    %v610 = vunpack.c.h.b16 %v46
    %v611 = vunpack.c.l.b16 %v47
    %v612 = vunpack.c.h.b16 %v47
    %v613 = vunpack.c.l.b16 %v48
    %v614 = vunpack.c.h.b16 %v48
    %v615 = vunpack.c.l.b16 %v49
    %v616 = vunpack.c.h.b16 %v49
    %v617 = vunpack.c.l.b16 %v50
    %v618 = vunpack.c.h.b16 %v50
    %v619 = vunpack.c.l.b16 %v51
    %v620 = vunpack.c.h.b16 %v51
    %v621 = vunpack.c.l.b16 %v52
    %v622 = vunpack.c.h.b16 %v52
    %v623 = vunpack.c.l.b16 %v53
    %v624 = vunpack.c.h.b16 %v53
    %v625 = vunpack.c.l.b16 %v54
    %v626 = vunpack.c.h.b16 %v54
    %v627 = vunpack.c.l.b16 %v55
    %v628 = vunpack.c.h.b16 %v55
    %v629 = vunpack.c.l.b16 %v56
    %v630 = vunpack.c.h.b16 %v56
    %v631 = vunpack.c.l.b16 %v57
    %v632 = vunpack.c.h.b16 %v57
    %v633 = vunpack.c.l.b16 %v58
    %v634 = vunpack.c.h.b16 %v58
    %v635 = vunpack.c.l.b16 %v59
    %v636 = vunpack.c.h.b16 %v59
    %v637 = vunpack.c.l.b16 %v60
    %v638 = vunpack.c.h.b16 %v60
    %v639 = vunpack.c.l.b16 %v61
    %v640 = vunpack.c.h.b16 %v61
    %v641 = vunpack.c.l.b16 %v62
    %v642 = vunpack.c.h.b16 %v62
    %v643 = vunpack.c.l.b16 %v63
    %v644 = vunpack.c.h.b16 %v63
    %v645 = vunpack.c.l.b16 %v64
    %v646 = vunpack.c.h.b16 %v64
    %v647 = vunpack.c.l.b16 %v65
    %v648 = vunpack.c.h.b16 %v65
    %v649 = vunpack.c.l.b16 %v66
    %v650 = vunpack.c.h.b16 %v66
    %v651 = vunpack.c.l.b16 %v67
    %v652 = vunpack.c.h.b16 %v67
    %v653 = vunpack.c.l.b16 %v68
    %v654 = vunpack.c.h.b16 %v68
    %v655 = vunpack.c.l.b16 %v69
    %v656 = vunpack.c.h.b16 %v69
    %v657 = vunpack.c.l.b16 %v70
    %v658 = vunpack.c.h.b16 %v70
    %v659 = vunpack.c.l.b16 %v71
    %v660 = vunpack.c.h.b16 %v71
    %v661 = vunpack.c.l.b16 %v72
    %v662 = vunpack.c.h.b16 %v72
    %v663 = vunpack.c.l.b16 %v73
    %v664 = vunpack.c.h.b16 %v73
    %v665 = vunpack.c.l.b16 %v74
    %v666 = vunpack.c.h.b16 %v74
    %v667 = vunpack.c.l.b16 %v75
    %v668 = vunpack.c.h.b16 %v75
    %v669 = vunpack.c.l.b16 %v76
    %v670 = vunpack.c.h.b16 %v76
    %v671 = vunpack.c.l.b16 %v77
    %v672 = vunpack.c.h.b16 %v77
    %v673 = vunpack.c.l.b16 %v78
    %v674 = vunpack.c.h.b16 %v78
    %v675 = vunpack.c.l.b16 %v79
    %v676 = vunpack.c.h.b16 %v79
    %v677 = vunpack.c.l.b16 %v80
    %v678 = vunpack.c.h.b16 %v80
    %v679 = vunpack.c.l.b16 %v81
    %v680 = vunpack.c.h.b16 %v81
    %v681 = vunpack.c.l.b16 %v82
    %v682 = vunpack.c.h.b16 %v82
    %v683 = vunpack.c.l.b16 %v83
    %v684 = vunpack.c.h.b16 %v83
    %v685 = vunpack.c.l.b16 %v84
    %v686 = vunpack.c.h.b16 %v84
    %v687 = vunpack.c.l.b16 %v85
    %v688 = vunpack.c.h.b16 %v85
    %v689 = vunpack.c.l.b16 %v86
    %v690 = vunpack.c.h.b16 %v86
    %v691 = vunpack.c.l.b16 %v87
    %v692 = vunpack.c.h.b16 %v87
    %v693 = vunpack.c.l.b16 %v88
    %v694 = vunpack.c.h.b16 %v88
    %v695 = vunpack.c.l.b16 %v89
    %v696 = vunpack.c.h.b16 %v89
    %v697 = vunpack.c.l.b16 %v90
    %v698 = vunpack.c.h.b16 %v90
    %v699 = vunpack.c.l.b16 %v91
    %v700 = vunpack.c.h.b16 %v91
    %v701 = vunpack.c.l.b16 %v92
    %v702 = vunpack.c.h.b16 %v92
    %v703 = vunpack.c.l.b16 %v93
    %v704 = vunpack.c.h.b16 %v93
    %v705 = vunpack.c.l.b16 %v94
    %v706 = vunpack.c.h.b16 %v94
    %v707 = vunpack.c.l.b16 %v95
    %v708 = vunpack.c.h.b16 %v95
    %v709 = vunpack.c.l.b16 %v96
    %v710 = vunpack.c.h.b16 %v96
    %v711 = vunpack.c.l.b16 %v97
    %v712 = vunpack.c.h.b16 %v97
    %v713 = vunpack.c.l.b16 %v98
    %v714 = vunpack.c.h.b16 %v98
    %v715 = vunpack.c.l.b16 %v99
    %v716 = vunpack.c.h.b16 %v99
    %v717 = vunpack.c.l.b16 %v100
    %v718 = vunpack.c.h.b16 %v100
    %v719 = vunpack.c.l.b16 %v101
    %v720 = vunpack.c.h.b16 %v101
    %v721 = vunpack.c.l.b16 %v102
    %v722 = vunpack.c.h.b16 %v102
    %v723 = vunpack.c.l.b16 %v103
    %v724 = vunpack.c.h.b16 %v103
    %v725 = vunpack.c.l.b16 %v104
    %v726 = vunpack.c.h.b16 %v104
    %v727 = vunpack.c.l.b16 %v105
    %v728 = vunpack.c.h.b16 %v105
    %v729 = vunpack.c.l.b16 %v106
    %v730 = vunpack.c.h.b16 %v106
    %v731 = vunpack.c.l.b16 %v107
    %v732 = vunpack.c.h.b16 %v107
    %v733 = vunpack.c.l.b16 %v108
    %v734 = vunpack.c.h.b16 %v108
    %v735 = vunpack.c.l.b16 %v109
    %v736 = vunpack.c.h.b16 %v109
    %v737 = vunpack.c.l.b16 %v110
    %v738 = vunpack.c.h.b16 %v110
    %v739 = vunpack.c.l.b16 %v111
    %v740 = vunpack.c.h.b16 %v111
    %v741 = vunpack.c.l.b16 %v112
    %v742 = vunpack.c.h.b16 %v112
    %v743 = vunpack.c.l.b16 %v113
    %v744 = vunpack.c.h.b16 %v113
    %v745 = vunpack.c.l.b16 %v114
    %v746 = vunpack.c.h.b16 %v114
    %v747 = vunpack.c.l.b16 %v115
    %v748 = vunpack.c.h.b16 %v115
    %v749 = vunpack.c.l.b16 %v116
    %v750 = vunpack.c.h.b16 %v116
    %v751 = vunpack.c.l.b16 %v117
    %v752 = vunpack.c.h.b16 %v117
    %v753 = vunpack.c.l.b16 %v118
    %v754 = vunpack.c.h.b16 %v118
    %v755 = vunpack.c.l.b16 %v119
    %v756 = vunpack.c.h.b16 %v119
    %v757 = vunpack.c.l.b16 %v120
    %v758 = vunpack.c.h.b16 %v120
    %v759 = vunpack.c.l.b16 %v121
    %v760 = vunpack.c.h.b16 %v121
    %v761 = vunpack.c.l.b16 %v122
    %v762 = vunpack.c.h.b16 %v122
    %v763 = vunpack.c.l.b16 %v123
    %v764 = vunpack.c.h.b16 %v123
    %v765 = vunpack.c.l.b16 %v124
    %v766 = vunpack.c.h.b16 %v124
    %v767 = vunpack.c.l.b16 %v125
    %v768 = vunpack.c.h.b16 %v125
    %v769 = vunpack.c.l.b16 %v126
    %v770 = vunpack.c.h.b16 %v126
    %v771 = vunpack.c.l.b16 %v127
    %v772 = vunpack.c.h.b16 %v127
    %v773 = vunpack.c.l.b16 %v128
    %v774 = vunpack.c.h.b16 %v128
    %v775 = vunpack.c.l.b16 %v129
    %v776 = vunpack.c.h.b16 %v129
    %v777 = vunpack.c.l.b16 %v130
    %v778 = vunpack.c.h.b16 %v130
    %v779 = vunpack.c.l.b16 %v131
    %v780 = vunpack.c.h.b16 %v131
    %v781 = vunpack.c.l.b16 %v132
    %v782 = vunpack.c.h.b16 %v132
    %v783 = vunpack.c.l.b16 %v133
    %v784 = vunpack.c.h.b16 %v133
    %v785 = vunpack.c.l.b16 %v134
    %v786 = vunpack.c.h.b16 %v134
    %v787 = vunpack.c.l.b16 %v135
    %v788 = vunpack.c.h.b16 %v135
    %v789 = vunpack.c.l.b16 %v136
    %v790 = vunpack.c.h.b16 %v136
    %v791 = vunpack.c.l.b16 %v137
    %v792 = vunpack.c.h.b16 %v137
    %v793 = vunpack.c.l.b16 %v138
    %v794 = vunpack.c.h.b16 %v138
    %v795 = vunpack.c.l.b16 %v139
    %v796 = vunpack.c.h.b16 %v139
    %v797 = vunpack.c.l.b16 %v140
    %v798 = vunpack.c.h.b16 %v140
    %v799 = vunpack.c.l.b16 %v141
    %v800 = vunpack.c.h.b16 %v141
    %v801 = vunpack.c.l.b16 %v142
    %v802 = vunpack.c.h.b16 %v142
    %v803 = vunpack.c.l.b16 %v143
    %v804 = vunpack.c.h.b16 %v143
    %v805 = vunpack.c.l.b16 %v144
    %v806 = vunpack.c.h.b16 %v144
    %v807 = vunpack.c.l.b16 %v145
    %v808 = vunpack.c.h.b16 %v145
    %v809 = vunpack.c.l.b16 %v146
    %v810 = vunpack.c.h.b16 %v146
    %v811 = vunpack.c.l.b16 %v147
    %v812 = vunpack.c.h.b16 %v147
    %v813 = vunpack.c.l.b16 %v148
    %v814 = vunpack.c.h.b16 %v148
    %v815 = vunpack.c.l.b16 %v149
    %v816 = vunpack.c.h.b16 %v149
    %v817 = vunpack.c.l.b16 %v150
    %v818 = vunpack.c.h.b16 %v150
    %v819 = vunpack.c.l.b16 %v151
    %v820 = vunpack.c.h.b16 %v151
    %v821 = vunpack.c.l.b16 %v152
    %v822 = vunpack.c.h.b16 %v152
    %v823 = vunpack.c.l.b16 %v153
    %v824 = vunpack.c.h.b16 %v153
    %v825 = vunpack.c.l.b16 %v154
    %v826 = vunpack.c.h.b16 %v154
    %v827 = vunpack.c.l.b16 %v155
    %v828 = vunpack.c.h.b16 %v155
    %v829 = vunpack.c.l.b16 %v156
    %v830 = vunpack.c.h.b16 %v156
    %v831 = vunpack.c.l.b16 %v157
    %v832 = vunpack.c.h.b16 %v157
    %v833 = vunpack.c.l.b16 %v158
    %v834 = vunpack.c.h.b16 %v158
    %v835 = vunpack.c.l.b16 %v159
    %v836 = vunpack.c.h.b16 %v159
    %v837 = vunpack.c.l.b16 %v160
    %v838 = vunpack.c.h.b16 %v160
    %v839 = vunpack.c.l.b16 %v161
    %v840 = vunpack.c.h.b16 %v161
    %v841 = vunpack.c.l.b16 %v162
    %v842 = vunpack.c.h.b16 %v162
    %v843 = vunpack.c.l.b16 %v163
    %v844 = vunpack.c.h.b16 %v163
    %v845 = vunpack.c.l.b16 %v164
    %v846 = vunpack.c.h.b16 %v164
    %v847 = vunpack.c.l.b16 %v165
    %v848 = vunpack.c.h.b16 %v165
    %v849 = vunpack.c.l.b16 %v166
    %v850 = vunpack.c.h.b16 %v166
    %v851 = vunpack.c.l.b16 %v167
    %v852 = vunpack.c.h.b16 %v167
    %v853 = vunpack.c.l.b16 %v168
    %v854 = vunpack.c.h.b16 %v168
    %v855 = vunpack.c.l.b16 %v169
    %v856 = vunpack.c.h.b16 %v169
    %v857 = vunpack.c.l.b16 %v170
    %v858 = vunpack.c.h.b16 %v170
    %v859 = vunpack.c.l.b16 %v171
    %v860 = vunpack.c.h.b16 %v171
    %v861 = vunpack.c.l.b16 %v172
    %v862 = vunpack.c.h.b16 %v172
    %v863 = vunpack.c.l.b16 %v173
    %v864 = vunpack.c.h.b16 %v173
    %v865 = vunpack.c.l.b16 %v174
    %v866 = vunpack.c.h.b16 %v174
    %v867 = vunpack.c.l.b16 %v175
    %v868 = vunpack.c.h.b16 %v175
    %v869 = vunpack.c.l.b16 %v176
    %v870 = vunpack.c.h.b16 %v176
    %v871 = vunpack.c.l.b16 %v177
    %v872 = vunpack.c.h.b16 %v177
    %v873 = vunpack.c.l.b16 %v178
    %v874 = vunpack.c.h.b16 %v178
    %v875 = vunpack.c.l.b16 %v179
    %v876 = vunpack.c.h.b16 %v179
    %v877 = vunpack.c.l.b16 %v180
    %v878 = vunpack.c.h.b16 %v180
    %v879 = vunpack.c.l.b16 %v181
    %v880 = vunpack.c.h.b16 %v181
    %v881 = vunpack.c.l.b16 %v182
    %v882 = vunpack.c.h.b16 %v182
    %v883 = vunpack.c.l.b16 %v183
    %v884 = vunpack.c.h.b16 %v183
    %v885 = vunpack.c.l.b16 %v184
    %v886 = vunpack.c.h.b16 %v184
    %v887 = vunpack.c.l.b16 %v185
    %v888 = vunpack.c.h.b16 %v185
    %v889 = vunpack.c.l.b16 %v186
    %v890 = vunpack.c.h.b16 %v186
    %v891 = vunpack.c.l.b16 %v187
    %v892 = vunpack.c.h.b16 %v187
    %v893 = vunpack.c.l.b16 %v188
    %v894 = vunpack.c.h.b16 %v188
    %v895 = vunpack.c.l.b16 %v189
    %v896 = vunpack.c.h.b16 %v189
    %v897 = vunpack.c.l.b16 %v190
    %v898 = vunpack.c.h.b16 %v190
    %v899 = vunpack.c.l.b16 %v191
    %v900 = vunpack.c.h.b16 %v191
    %v901 = vunpack.c.l.b16 %v192
    %v902 = vunpack.c.h.b16 %v192
    %v903 = vunpack.c.l.b16 %v193
    %v904 = vunpack.c.h.b16 %v193
    %v905 = vunpack.c.l.b16 %v194
    %v906 = vunpack.c.h.b16 %v194
    %v907 = vunpack.c.l.b16 %v195
    %v908 = vunpack.c.h.b16 %v195
    %v909 = vunpack.c.l.b16 %v196
    %v910 = vunpack.c.h.b16 %v196
    %v911 = vunpack.c.l.b16 %v197
    %v912 = vunpack.c.h.b16 %v197
    %v913 = vunpack.c.l.b16 %v198
    %v914 = vunpack.c.h.b16 %v198
    %v915 = vunpack.c.l.b16 %v199
    %v916 = vunpack.c.h.b16 %v199
    %v917 = vunpack.c.l.b16 %v200
    %v918 = vunpack.c.h.b16 %v200
    %v919 = vunpack.c.l.b16 %v201
    %v920 = vunpack.c.h.b16 %v201
    %v921 = vunpack.c.l.b16 %v202
    %v922 = vunpack.c.h.b16 %v202
    %v923 = vunpack.c.l.b16 %v203
    %v924 = vunpack.c.h.b16 %v203
    %v925 = vunpack.c.l.b16 %v204
    %v926 = vunpack.c.h.b16 %v204
    %v927 = vunpack.c.l.b16 %v205
    %v928 = vunpack.c.h.b16 %v205
    %v929 = vunpack.c.l.b16 %v206
    %v930 = vunpack.c.h.b16 %v206
    %v931 = vunpack.c.l.b16 %v207
    %v932 = vunpack.c.h.b16 %v207
    %v933 = vunpack.c.l.b16 %v208
    %v934 = vunpack.c.h.b16 %v208
    %v935 = vunpack.c.l.b16 %v209
    %v936 = vunpack.c.h.b16 %v209
    %v937 = vunpack.c.l.b16 %v210
    %v938 = vunpack.c.h.b16 %v210
    %v939 = vunpack.c.l.b16 %v211
    %v940 = vunpack.c.h.b16 %v211
    %v941 = vunpack.c.l.b16 %v212
    %v942 = vunpack.c.h.b16 %v212
    %v943 = vunpack.c.l.b16 %v213
    %v944 = vunpack.c.h.b16 %v213
    %v945 = vunpack.c.l.b16 %v214
    %v946 = vunpack.c.h.b16 %v214
    %v947 = vunpack.c.l.b16 %v215
    %v948 = vunpack.c.h.b16 %v215
    %v949 = vunpack.c.l.b16 %v216
    %v950 = vunpack.c.h.b16 %v216
    %v951 = vunpack.c.l.b16 %v217
    %v952 = vunpack.c.h.b16 %v217
    %v953 = vunpack.c.l.b16 %v218
    %v954 = vunpack.c.h.b16 %v218
    %v955 = vunpack.c.l.b16 %v219
    %v956 = vunpack.c.h.b16 %v219
    %v957 = vunpack.c.l.b16 %v220
    %v958 = vunpack.c.h.b16 %v220
    %v959 = vunpack.c.l.b16 %v221
    %v960 = vunpack.c.h.b16 %v221
    %v961 = vunpack.c.l.b16 %v222
    %v962 = vunpack.c.h.b16 %v222
    %v963 = vunpack.c.l.b16 %v223
    %v964 = vunpack.c.h.b16 %v223
    %v965 = vunpack.c.l.b16 %v224
    %v966 = vunpack.c.h.b16 %v224
    %v967 = vunpack.c.l.b16 %v225
    %v968 = vunpack.c.h.b16 %v225
    %v969 = vunpack.c.l.b16 %v226
    %v970 = vunpack.c.h.b16 %v226
    %v971 = vunpack.c.l.b16 %v227
    %v972 = vunpack.c.h.b16 %v227
    %v973 = vunpack.c.l.b16 %v228
    %v974 = vunpack.c.h.b16 %v228
    %v975 = vunpack.c.l.b16 %v229
    %v976 = vunpack.c.h.b16 %v229
    %v977 = vunpack.c.l.b16 %v230
    %v978 = vunpack.c.h.b16 %v230
    %v979 = vunpack.c.l.b16 %v231
    %v980 = vunpack.c.h.b16 %v231
    %v981 = vunpack.c.l.b16 %v232
    %v982 = vunpack.c.h.b16 %v232
    %v983 = vunpack.c.l.b16 %v233
    %v984 = vunpack.c.h.b16 %v233
    %v985 = vunpack.c.l.b16 %v234
    %v986 = vunpack.c.h.b16 %v234
    %v987 = vunpack.c.l.b16 %v235
    %v988 = vunpack.c.h.b16 %v235
    %v989 = vunpack.c.l.b16 %v236
    %v990 = vunpack.c.h.b16 %v236
    %v991 = vunpack.c.l.b16 %v237
    %v992 = vunpack.c.h.b16 %v237
    %v993 = vunpack.c.l.b16 %v238
    %v994 = vunpack.c.h.b16 %v238
    %v995 = vunpack.c.l.b16 %v239
    %v996 = vunpack.c.h.b16 %v239
    %v997 = vunpack.c.l.b16 %v240
    %v998 = vunpack.c.h.b16 %v240
    %v999 = vunpack.c.l.b16 %v241
    %v1000 = vunpack.c.h.b16 %v241
    %v1001 = vunpack.c.l.b16 %v242
    %v1002 = vunpack.c.h.b16 %v242
    %v1003 = vunpack.c.l.b16 %v243
    %v1004 = vunpack.c.h.b16 %v243
    %v1005 = vunpack.c.l.b16 %v244
    %v1006 = vunpack.c.h.b16 %v244
    %v1007 = vunpack.c.l.b16 %v245
    %v1008 = vunpack.c.h.b16 %v245
    %v1009 = vunpack.c.l.b16 %v246
    %v1010 = vunpack.c.h.b16 %v246
    %v1011 = vunpack.c.l.b16 %v247
    %v1012 = vunpack.c.h.b16 %v247
    %v1013 = vunpack.c.l.b16 %v248
    %v1014 = vunpack.c.h.b16 %v248
    %v1015 = vunpack.c.l.b16 %v249
    %v1016 = vunpack.c.h.b16 %v249
    %v1017 = vunpack.c.l.b16 %v250
    %v1018 = vunpack.c.h.b16 %v250
    %v1019 = vunpack.c.l.b16 %v251
    %v1020 = vunpack.c.h.b16 %v251
    %v1021 = vunpack.c.l.b16 %v252
    %v1022 = vunpack.c.h.b16 %v252
    %v1023 = vunpack.c.l.b16 %v253
    %v1024 = vunpack.c.h.b16 %v253
    %v1025 = vunpack.c.l.b16 %v254
    %v1026 = vunpack.c.h.b16 %v254
    %v1027 = vunpack.c.l.b16 %v255
    %v1028 = vunpack.c.h.b16 %v255
    %v1029 = vunpack.c.l.b16 %v256
    %v1030 = vunpack.c.h.b16 %v256
    %v1031 = vunpack.c.l.b16 %v257
    %v1032 = vunpack.c.h.b16 %v257
    %v1033 = vunpack.c.l.b16 %v258
    %v1034 = vunpack.c.h.b16 %v258
    %v1035 = vunpack.c.l.b16 %v259
    %v1036 = vunpack.c.h.b16 %v259
    %v1037 = vunpack.c.l.b16 %v260
    %v1038 = vunpack.c.h.b16 %v260
    %v1039 = vunpack.c.l.b16 %v261
    %v1040 = vunpack.c.h.b16 %v261
    %v1041 = vunpack.c.l.b16 %v262
    %v1042 = vunpack.c.h.b16 %v262
    %v1043 = vunpack.c.l.b16 %v263
    %v1044 = vunpack.c.h.b16 %v263
    %v1045 = vunpack.c.l.b16 %v264
    %v1046 = vunpack.c.h.b16 %v264
    %v1047 = vunpack.c.l.b16 %v265
    %v1048 = vunpack.c.h.b16 %v265
    %v1049 = vunpack.c.l.b16 %v266
    %v1050 = vunpack.c.h.b16 %v266
    %v1051 = vunpack.c.l.b16 %v267
    %v1052 = vunpack.c.h.b16 %v267
    %v1053 = vunpack.c.l.b16 %v268
    %v1054 = vunpack.c.h.b16 %v268
    %v1055 = vunpack.c.l.b16 %v269
    %v1056 = vunpack.c.h.b16 %v269
    %v1057 = vunpack.c.l.b16 %v270
    %v1058 = vunpack.c.h.b16 %v270
    %v1059 = vunpack.c.l.b16 %v271
    %v1060 = vunpack.c.h.b16 %v271
    %v1061 = vunpack.c.l.b16 %v272
    %v1062 = vunpack.c.h.b16 %v272
    %v1063 = vunpack.c.l.b16 %v273
    %v1064 = vunpack.c.h.b16 %v273
    %v1065 = vunpack.c.l.b16 %v274
    %v1066 = vunpack.c.h.b16 %v274
    %v1067 = vunpack.c.l.b16 %v275
    %v1068 = vunpack.c.h.b16 %v275
    %v1069 = vunpack.c.l.b16 %v276
    %v1070 = vunpack.c.h.b16 %v276
    %v1071 = vunpack.c.l.b16 %v277
    %v1072 = vunpack.c.h.b16 %v277
    %v1073 = vpack.c.b16 %v563, %v561
    %v1074 = vpack.c.b16 %v564, %v562
    %v1075 = vpack.c.b16 %v567, %v565
    %v1076 = vpack.c.b16 %v568, %v566
    %v1077 = vpack.c.b16 %v571, %v569
    %v1078 = vpack.c.b16 %v572, %v570
    %v1079 = vpack.c.b16 %v575, %v573
    %v1080 = vpack.c.b16 %v576, %v574
    %v1081 = vpack.c.b16 %v579, %v577
    %v1082 = vpack.c.b16 %v580, %v578
    %v1083 = vpack.c.b16 %v583, %v581
    %v1084 = vpack.c.b16 %v584, %v582
    %v1085 = vpack.c.b16 %v587, %v585
    %v1086 = vpack.c.b16 %v588, %v586
    %v1087 = vpack.c.b16 %v591, %v589
    %v1088 = vpack.c.b16 %v592, %v590
    %v1089 = vpack.c.b16 %v595, %v593
    %v1090 = vpack.c.b16 %v596, %v594
    %v1091 = vpack.c.b16 %v599, %v597
    %v1092 = vpack.c.b16 %v600, %v598
    %v1093 = vpack.c.b16 %v603, %v601
    %v1094 = vpack.c.b16 %v604, %v602
    %v1095 = vpack.c.b16 %v607, %v605
    %v1096 = vpack.c.b16 %v608, %v606
    %v1097 = vpack.c.b16 %v611, %v609
    %v1098 = vpack.c.b16 %v612, %v610
    %v1099 = vpack.c.b16 %v615, %v613
    %v1100 = vpack.c.b16 %v616, %v614
    %v1101 = vpack.c.b16 %v619, %v617
    %v1102 = vpack.c.b16 %v620, %v618
    %v1103 = vpack.c.b16 %v623, %v621
    %v1104 = vpack.c.b16 %v624, %v622
    %v1105 = vpack.c.b16 %v627, %v625
    %v1106 = vpack.c.b16 %v628, %v626
    %v1107 = vpack.c.b16 %v631, %v629
    %v1108 = vpack.c.b16 %v632, %v630
    %v1109 = vpack.c.b16 %v635, %v633
    %v1110 = vpack.c.b16 %v636, %v634
    %v1111 = vpack.c.b16 %v639, %v637
    %v1112 = vpack.c.b16 %v640, %v638
    %v1113 = vpack.c.b16 %v643, %v641
    %v1114 = vpack.c.b16 %v644, %v642
    %v1115 = vpack.c.b16 %v647, %v645
    %v1116 = vpack.c.b16 %v648, %v646
    %v1117 = vpack.c.b16 %v651, %v649
    %v1118 = vpack.c.b16 %v652, %v650
    %v1119 = vpack.c.b16 %v655, %v653
    %v1120 = vpack.c.b16 %v656, %v654
    %v1121 = vpack.c.b16 %v659, %v657
    %v1122 = vpack.c.b16 %v660, %v658
    %v1123 = vpack.c.b16 %v663, %v661
    %v1124 = vpack.c.b16 %v664, %v662
    %v1125 = vpack.c.b16 %v667, %v665
    %v1126 = vpack.c.b16 %v668, %v666
    %v1127 = vpack.c.b16 %v671, %v669
    %v1128 = vpack.c.b16 %v672, %v670
    %v1129 = vpack.c.b16 %v675, %v673
    %v1130 = vpack.c.b16 %v676, %v674
    %v1131 = vpack.c.b16 %v679, %v677
    %v1132 = vpack.c.b16 %v680, %v678
    %v1133 = vpack.c.b16 %v683, %v681
    %v1134 = vpack.c.b16 %v684, %v682
    %v1135 = vpack.c.b16 %v687, %v685
    %v1136 = vpack.c.b16 %v688, %v686
    %v1137 = vpack.c.b16 %v691, %v689
    %v1138 = vpack.c.b16 %v692, %v690
    %v1139 = vpack.c.b16 %v695, %v693
    %v1140 = vpack.c.b16 %v696, %v694
    %v1141 = vpack.c.b16 %v699, %v697
    %v1142 = vpack.c.b16 %v700, %v698
    %v1143 = vpack.c.b16 %v703, %v701
    %v1144 = vpack.c.b16 %v704, %v702
    %v1145 = vpack.c.b16 %v707, %v705
    %v1146 = vpack.c.b16 %v708, %v706
    %v1147 = vpack.c.b16 %v711, %v709
    %v1148 = vpack.c.b16 %v712, %v710
    %v1149 = vpack.c.b16 %v715, %v713
    %v1150 = vpack.c.b16 %v716, %v714
    %v1151 = vpack.c.b16 %v719, %v717
    %v1152 = vpack.c.b16 %v720, %v718
    %v1153 = vpack.c.b16 %v723, %v721
    %v1154 = vpack.c.b16 %v724, %v722
    %v1155 = vpack.c.b16 %v727, %v725
    %v1156 = vpack.c.b16 %v728, %v726
    %v1157 = vpack.c.b16 %v731, %v729
    %v1158 = vpack.c.b16 %v732, %v730
    %v1159 = vpack.c.b16 %v735, %v733
    %v1160 = vpack.c.b16 %v736, %v734
    %v1161 = vpack.c.b16 %v739, %v737
    %v1162 = vpack.c.b16 %v740, %v738
    %v1163 = vpack.c.b16 %v743, %v741
    %v1164 = vpack.c.b16 %v744, %v742
    %v1165 = vpack.c.b16 %v747, %v745
    %v1166 = vpack.c.b16 %v748, %v746
    %v1167 = vpack.c.b16 %v751, %v749
    %v1168 = vpack.c.b16 %v752, %v750
    %v1169 = vpack.c.b16 %v755, %v753
    %v1170 = vpack.c.b16 %v756, %v754
    %v1171 = vpack.c.b16 %v759, %v757
    %v1172 = vpack.c.b16 %v760, %v758
    %v1173 = vpack.c.b16 %v763, %v761
    %v1174 = vpack.c.b16 %v764, %v762
    %v1175 = vpack.c.b16 %v767, %v765
    %v1176 = vpack.c.b16 %v768, %v766
    %v1177 = vpack.c.b16 %v771, %v769
    %v1178 = vpack.c.b16 %v772, %v770
    %v1179 = vpack.c.b16 %v775, %v773
    %v1180 = vpack.c.b16 %v776, %v774
    %v1181 = vpack.c.b16 %v779, %v777
    %v1182 = vpack.c.b16 %v780, %v778
    %v1183 = vpack.c.b16 %v783, %v781
    %v1184 = vpack.c.b16 %v784, %v782
    %v1185 = vpack.c.b16 %v787, %v785
    %v1186 = vpack.c.b16 %v788, %v786
    %v1187 = vpack.c.b16 %v791, %v789
    %v1188 = vpack.c.b16 %v792, %v790
    %v1189 = vpack.c.b16 %v795, %v793
    %v1190 = vpack.c.b16 %v796, %v794
    %v1191 = vpack.c.b16 %v799, %v797
    %v1192 = vpack.c.b16 %v800, %v798
    %v1193 = vpack.c.b16 %v803, %v801
    %v1194 = vpack.c.b16 %v804, %v802
    %v1195 = vpack.c.b16 %v807, %v805
    %v1196 = vpack.c.b16 %v808, %v806
    %v1197 = vpack.c.b16 %v811, %v809
    %v1198 = vpack.c.b16 %v812, %v810
    %v1199 = vpack.c.b16 %v815, %v813
    %v1200 = vpack.c.b16 %v816, %v814
    %v1201 = vpack.c.b16 %v819, %v817
    %v1202 = vpack.c.b16 %v820, %v818
    %v1203 = vpack.c.b16 %v823, %v821
    %v1204 = vpack.c.b16 %v824, %v822
    %v1205 = vpack.c.b16 %v827, %v825
    %v1206 = vpack.c.b16 %v828, %v826
    %v1207 = vpack.c.b16 %v831, %v829
    %v1208 = vpack.c.b16 %v832, %v830
    %v1209 = vpack.c.b16 %v835, %v833
    %v1210 = vpack.c.b16 %v836, %v834
    %v1211 = vpack.c.b16 %v839, %v837
    %v1212 = vpack.c.b16 %v840, %v838
    %v1213 = vpack.c.b16 %v843, %v841
    %v1214 = vpack.c.b16 %v844, %v842
    %v1215 = vpack.c.b16 %v847, %v845
    %v1216 = vpack.c.b16 %v848, %v846
    %v1217 = vpack.c.b16 %v851, %v849
    %v1218 = vpack.c.b16 %v852, %v850
    %v1219 = vpack.c.b16 %v855, %v853
    %v1220 = vpack.c.b16 %v856, %v854
    %v1221 = vpack.c.b16 %v859, %v857
    %v1222 = vpack.c.b16 %v860, %v858
    %v1223 = vpack.c.b16 %v863, %v861
    %v1224 = vpack.c.b16 %v864, %v862
    %v1225 = vpack.c.b16 %v867, %v865
    %v1226 = vpack.c.b16 %v868, %v866
    %v1227 = vpack.c.b16 %v871, %v869
    %v1228 = vpack.c.b16 %v872, %v870
    %v1229 = vpack.c.b16 %v875, %v873
    %v1230 = vpack.c.b16 %v876, %v874
    %v1231 = vpack.c.b16 %v879, %v877
    %v1232 = vpack.c.b16 %v880, %v878
    %v1233 = vpack.c.b16 %v883, %v881
    %v1234 = vpack.c.b16 %v884, %v882
    %v1235 = vpack.c.b16 %v887, %v885
    %v1236 = vpack.c.b16 %v888, %v886
    %v1237 = vpack.c.b16 %v891, %v889
    %v1238 = vpack.c.b16 %v892, %v890
    %v1239 = vpack.c.b16 %v895, %v893
    %v1240 = vpack.c.b16 %v896, %v894
    %v1241 = vpack.c.b16 %v899, %v897
    %v1242 = vpack.c.b16 %v900, %v898
    %v1243 = vpack.c.b16 %v903, %v901
    %v1244 = vpack.c.b16 %v904, %v902
    %v1245 = vpack.c.b16 %v907, %v905
    %v1246 = vpack.c.b16 %v908, %v906
    %v1247 = vpack.c.b16 %v911, %v909
    %v1248 = vpack.c.b16 %v912, %v910
    %v1249 = vpack.c.b16 %v915, %v913
    %v1250 = vpack.c.b16 %v916, %v914
    %v1251 = vpack.c.b16 %v919, %v917
    %v1252 = vpack.c.b16 %v920, %v918
    %v1253 = vpack.c.b16 %v923, %v921
    %v1254 = vpack.c.b16 %v924, %v922
    %v1255 = vpack.c.b16 %v927, %v925
    %v1256 = vpack.c.b16 %v928, %v926
    %v1257 = vpack.c.b16 %v931, %v929
    %v1258 = vpack.c.b16 %v932, %v930
    %v1259 = vpack.c.b16 %v935, %v933
    %v1260 = vpack.c.b16 %v936, %v934
    %v1261 = vpack.c.b16 %v939, %v937
    %v1262 = vpack.c.b16 %v940, %v938
    %v1263 = vpack.c.b16 %v943, %v941
    %v1264 = vpack.c.b16 %v944, %v942
    %v1265 = vpack.c.b16 %v947, %v945
    %v1266 = vpack.c.b16 %v948, %v946
    %v1267 = vpack.c.b16 %v951, %v949
    %v1268 = vpack.c.b16 %v952, %v950
    %v1269 = vpack.c.b16 %v955, %v953
    %v1270 = vpack.c.b16 %v956, %v954
    %v1271 = vpack.c.b16 %v959, %v957
    %v1272 = vpack.c.b16 %v960, %v958
    %v1273 = vpack.c.b16 %v963, %v961
    %v1274 = vpack.c.b16 %v964, %v962
    %v1275 = vpack.c.b16 %v967, %v965
    %v1276 = vpack.c.b16 %v968, %v966
    %v1277 = vpack.c.b16 %v971, %v969
    %v1278 = vpack.c.b16 %v972, %v970
    %v1279 = vpack.c.b16 %v975, %v973
    %v1280 = vpack.c.b16 %v976, %v974
    %v1281 = vpack.c.b16 %v979, %v977
    %v1282 = vpack.c.b16 %v980, %v978
    %v1283 = vpack.c.b16 %v983, %v981
    %v1284 = vpack.c.b16 %v984, %v982
    %v1285 = vpack.c.b16 %v987, %v985
    %v1286 = vpack.c.b16 %v988, %v986
    %v1287 = vpack.c.b16 %v991, %v989
    %v1288 = vpack.c.b16 %v992, %v990
    %v1289 = vpack.c.b16 %v995, %v993
    %v1290 = vpack.c.b16 %v996, %v994
    %v1291 = vpack.c.b16 %v999, %v997
    %v1292 = vpack.c.b16 %v1000, %v998
    %v1293 = vpack.c.b16 %v1003, %v1001
    %v1294 = vpack.c.b16 %v1004, %v1002
    %v1295 = vpack.c.b16 %v1007, %v1005
    %v1296 = vpack.c.b16 %v1008, %v1006
    %v1297 = vpack.c.b16 %v1011, %v1009
    %v1298 = vpack.c.b16 %v1012, %v1010
    %v1299 = vpack.c.b16 %v1015, %v1013
    %v1300 = vpack.c.b16 %v1016, %v1014
    %v1301 = vpack.c.b16 %v1019, %v1017
    %v1302 = vpack.c.b16 %v1020, %v1018
    %v1303 = vpack.c.b16 %v1023, %v1021
    %v1304 = vpack.c.b16 %v1024, %v1022
    %v1305 = vpack.c.b16 %v1027, %v1025
    %v1306 = vpack.c.b16 %v1028, %v1026
    %v1307 = vpack.c.b16 %v1031, %v1029
    %v1308 = vpack.c.b16 %v1032, %v1030
    %v1309 = vpack.c.b16 %v1035, %v1033
    %v1310 = vpack.c.b16 %v1036, %v1034
    %v1311 = vpack.c.b16 %v1039, %v1037
    %v1312 = vpack.c.b16 %v1040, %v1038
    %v1313 = vpack.c.b16 %v1043, %v1041
    %v1314 = vpack.c.b16 %v1044, %v1042
    %v1315 = vpack.c.b16 %v1047, %v1045
    %v1316 = vpack.c.b16 %v1048, %v1046
    %v1317 = vpack.c.b16 %v1051, %v1049
    %v1318 = vpack.c.b16 %v1052, %v1050
    %v1319 = vpack.c.b16 %v1055, %v1053
    %v1320 = vpack.c.b16 %v1056, %v1054
    %v1321 = vpack.c.b16 %v1059, %v1057
    %v1322 = vpack.c.b16 %v1060, %v1058
    %v1323 = vpack.c.b16 %v1063, %v1061
    %v1324 = vpack.c.b16 %v1064, %v1062
    %v1325 = vpack.c.b16 %v1067, %v1065
    %v1326 = vpack.c.b16 %v1068, %v1066
    %v1327 = vpack.c.b16 %v1071, %v1069
    %v1328 = vpack.c.b16 %v1072, %v1070
    %v1477 = vunpack.c.l.b16 %v278
    %v1478 = vunpack.c.l.b16 %v279
    %v1479 = vunpack.c.l.b16 %v280
    %v1480 = vunpack.c.l.b16 %v281
    %v1481 = vunpack.c.l.b16 %v282
    %v1482 = vunpack.c.l.b16 %v283
    %v1483 = vunpack.c.l.b16 %v284
    %v1484 = vunpack.c.l.b16 %v285
    %v1485 = vunpack.c.l.b16 %v286
    %v1486 = vunpack.c.l.b16 %v287
    %v1487 = vunpack.c.l.b16 %v288
    %v1488 = vunpack.c.l.b16 %v289
    %v1489 = vunpack.c.l.b16 %v290
    %v1490 = vunpack.c.l.b16 %v291
    %v1491 = vunpack.c.l.b16 %v292
    %v1492 = vunpack.c.l.b16 %v293
    %v1493 = vunpack.c.l.b16 %v294
    %v1494 = vunpack.c.l.b16 %v295
    %v1495 = vunpack.c.l.b16 %v296
    %v1496 = vunpack.c.l.b16 %v297
    %v1497 = vpack.c.b16 %v1478, %v1477
    %v1498 = vpack.c.b16 %v1480, %v1479
    %v1499 = vpack.c.b16 %v1482, %v1481
    %v1500 = vpack.c.b16 %v1484, %v1483
    %v1501 = vpack.c.b16 %v1486, %v1485
    %v1502 = vpack.c.b16 %v1488, %v1487
    %v1503 = vpack.c.b16 %v1490, %v1489
    %v1504 = vpack.c.b16 %v1492, %v1491
    %v1505 = vpack.c.b16 %v1494, %v1493
    %v1506 = vpack.c.b16 %v1496, %v1495
    %vm1517 = vcmask 261120
    %v1519 = vsel %vm1517, %v1074, 0
    %v1522 = vsel %vm1517, %v1076, 0
    %v1525 = vsel %vm1517, %v1078, 0
    %v1528 = vsel %vm1517, %v1080, 0
    %v1531 = vsel %vm1517, %v1082, 0
    %v1534 = vsel %vm1517, %v1084, 0
    %v1537 = vsel %vm1517, %v1086, 0
    %v1540 = vsel %vm1517, %v1088, 0
    %v1543 = vsel %vm1517, %v1090, 0
    %v1546 = vsel %vm1517, %v1092, 0
    %v1549 = vsel %vm1517, %v1094, 0
    %v1552 = vsel %vm1517, %v1096, 0
    %v1555 = vsel %vm1517, %v1098, 0
    %v1558 = vsel %vm1517, %v1100, 0
    %v1561 = vsel %vm1517, %v1102, 0
    %v1564 = vsel %vm1517, %v1104, 0
    %v1567 = vsel %vm1517, %v1106, 0
    %v1570 = vsel %vm1517, %v1108, 0
    %v1573 = vsel %vm1517, %v1110, 0
    %v1576 = vsel %vm1517, %v1112, 0
    %v1579 = vsel %vm1517, %v1114, 0
    %v1582 = vsel %vm1517, %v1116, 0
    %v1585 = vsel %vm1517, %v1118, 0
    %v1588 = vsel %vm1517, %v1120, 0
    %v1591 = vsel %vm1517, %v1122, 0
    %v1594 = vsel %vm1517, %v1124, 0
    %v1597 = vsel %vm1517, %v1126, 0
    %v1600 = vsel %vm1517, %v1128, 0
    %v1603 = vsel %vm1517, %v1130, 0
    %v1606 = vsel %vm1517, %v1132, 0
    %v1609 = vsel %vm1517, %v1134, 0
    %v1612 = vsel %vm1517, %v1136, 0
    %v1615 = vsel %vm1517, %v1138, 0
    %v1618 = vsel %vm1517, %v1140, 0
    %v1621 = vsel %vm1517, %v1142, 0
    %v1624 = vsel %vm1517, %v1144, 0
    %v1627 = vsel %vm1517, %v1146, 0
    %v1630 = vsel %vm1517, %v1148, 0
    %v1633 = vsel %vm1517, %v1150, 0
    %v1636 = vsel %vm1517, %v1152, 0
    %v1639 = vsel %vm1517, %v1154, 0
    %v1642 = vsel %vm1517, %v1156, 0
    %v1645 = vsel %vm1517, %v1158, 0
    %v1648 = vsel %vm1517, %v1160, 0
    %v1651 = vsel %vm1517, %v1162, 0
    %v1654 = vsel %vm1517, %v1164, 0
    %v1657 = vsel %vm1517, %v1166, 0
    %v1660 = vsel %vm1517, %v1168, 0
    %v1663 = vsel %vm1517, %v1170, 0
    %v1666 = vsel %vm1517, %v1172, 0
    %v1669 = vsel %vm1517, %v1174, 0
    %v1672 = vsel %vm1517, %v1176, 0
    %v1675 = vsel %vm1517, %v1178, 0
    %v1678 = vsel %vm1517, %v1180, 0
    %v1681 = vsel %vm1517, %v1182, 0
    %v1684 = vsel %vm1517, %v1184, 0
    %v1687 = vsel %vm1517, %v1186, 0
    %v1690 = vsel %vm1517, %v1188, 0
    %v1693 = vsel %vm1517, %v1190, 0
    %v1696 = vsel %vm1517, %v1192, 0
    %v1699 = vsel %vm1517, %v1194, 0
    %v1702 = vsel %vm1517, %v1196, 0
    %v1705 = vsel %vm1517, %v1198, 0
    %v1708 = vsel %vm1517, %v1200, 0
    %v1711 = vsel %vm1517, %v1202, 0
    %v1714 = vsel %vm1517, %v1204, 0
    %v1717 = vsel %vm1517, %v1206, 0
    %v1720 = vsel %vm1517, %v1208, 0
    %v1723 = vsel %vm1517, %v1210, 0
    %v1726 = vsel %vm1517, %v1212, 0
    %v1729 = vsel %vm1517, %v1214, 0
    %v1732 = vsel %vm1517, %v1216, 0
    %v1735 = vsel %vm1517, %v1218, 0
    %v1738 = vsel %vm1517, %v1220, 0
    %v1741 = vsel %vm1517, %v1222, 0
    %v1744 = vsel %vm1517, %v1224, 0
    %v1747 = vsel %vm1517, %v1226, 0
    %v1750 = vsel %vm1517, %v1228, 0
    %v1753 = vsel %vm1517, %v1230, 0
    %v1756 = vsel %vm1517, %v1232, 0
    %v1759 = vsel %vm1517, %v1234, 0
    %v1762 = vsel %vm1517, %v1236, 0
    %v1765 = vsel %vm1517, %v1238, 0
    %v1768 = vsel %vm1517, %v1240, 0
    %v1771 = vsel %vm1517, %v1242, 0
    %v1774 = vsel %vm1517, %v1244, 0
    %v1777 = vsel %vm1517, %v1246, 0
    %v1780 = vsel %vm1517, %v1248, 0
    %v1783 = vsel %vm1517, %v1250, 0
    %v1786 = vsel %vm1517, %v1252, 0
    %v1789 = vsel %vm1517, %v1254, 0
    %v1792 = vsel %vm1517, %v1256, 0
    %v1795 = vsel %vm1517, %v1258, 0
    %v1798 = vsel %vm1517, %v1260, 0
    %v1801 = vsel %vm1517, %v1262, 0
    %v1804 = vsel %vm1517, %v1264, 0
    %v1807 = vsel %vm1517, %v1266, 0
    %v1810 = vsel %vm1517, %v1268, 0
    %v1813 = vsel %vm1517, %v1270, 0
    %v1816 = vsel %vm1517, %v1272, 0
    %v1819 = vsel %vm1517, %v1274, 0
    %v1822 = vsel %vm1517, %v1276, 0
    %v1825 = vsel %vm1517, %v1278, 0
    %v1828 = vsel %vm1517, %v1280, 0
    %v1831 = vsel %vm1517, %v1282, 0
    %v1834 = vsel %vm1517, %v1284, 0
    %v1837 = vsel %vm1517, %v1286, 0
    %v1840 = vsel %vm1517, %v1288, 0
    %v1843 = vsel %vm1517, %v1290, 0
    %v1846 = vsel %vm1517, %v1292, 0
    %v1849 = vsel %vm1517, %v1294, 0
    %v1852 = vsel %vm1517, %v1296, 0
    %v1855 = vsel %vm1517, %v1298, 0
    %v1858 = vsel %vm1517, %v1300, 0
    %v1861 = vsel %vm1517, %v1302, 0
    %v1864 = vsel %vm1517, %v1304, 0
    %v1867 = vsel %vm1517, %v1306, 0
    %v1870 = vsel %vm1517, %v1308, 0
    %v1873 = vsel %vm1517, %v1310, 0
    %v1876 = vsel %vm1517, %v1312, 0
    %v1879 = vsel %vm1517, %v1314, 0
    %v1882 = vsel %vm1517, %v1316, 0
    %v1885 = vsel %vm1517, %v1318, 0
    %v1888 = vsel %vm1517, %v1320, 0
    %v1891 = vsel %vm1517, %v1322, 0
    %v1894 = vsel %vm1517, %v1324, 0
    %v1897 = vsel %vm1517, %v1326, 0
    %v1900 = vsel %vm1517, %v1328, 0
    %1902 = vmatprep.subr.bf16.mxu0 0
    %1903 = vmatpush1.bf16.msra.mxu0 %v1497
    %1904 = vmatprep.subr.bf16.mxu0 0
    %1905 = vmatpush1.bf16.msra.mxu0 %v1498
    %1906 = vmatprep.subr.bf16.mxu0 0
    %1907 = vmatpush1.bf16.msra.mxu0 %v1499
    %1908 = vmatprep.subr.bf16.mxu0 0
    %1909 = vmatpush1.bf16.msra.mxu0 %v1500
    %1910 = vmatprep.subr.bf16.mxu0 0
    %1911 = vmatpush1.bf16.msra.mxu0 %v1501
    %1912 = vmatprep.subr.bf16.mxu0 0
    %1913 = vmatpush1.bf16.msra.mxu0 %v1502
    %1914 = vmatprep.subr.bf16.mxu0 0
    %1915 = vmatpush1.bf16.msra.mxu0 %v1503
    %1916 = vmatprep.subr.bf16.mxu0 0
    %1917 = vmatpush1.bf16.msra.mxu0 %v1504
    %1918 = vmatprep.subr.bf16.mxu0 0
    %1919 = vmatpush1.bf16.msra.mxu0 %v1505
    %1920 = vmatprep.subr.bf16.mxu0 0
    %1921 = vmatpush1.bf16.msra.mxu0 %v1506
    %1922 = vmatprep.subr.bf16.mxu0 0
    %1923 = vmatpush1.bf16.msra.mxu0 0
    %1924 = vmatprep.subr.bf16.mxu0 0
    %1925 = vmatpush1.bf16.msra.mxu0 0
    %1926 = vmatprep.subr.bf16.mxu0 0
    %1927 = vmatpush1.bf16.msra.mxu0 0
    %1928 = vmatprep.subr.bf16.mxu0 0
    %1929 = vmatpush1.bf16.msra.mxu0 0
    %1930 = vmatprep.subr.bf16.mxu0 0
    %1931 = vmatpush1.bf16.msra.mxu0 0
    %1932 = vmatprep.subr.bf16.mxu0 0
    %1933 = vmatpush1.bf16.msra.mxu0 0
    %1934 = vmatprep.mubr.bf16.mxu0 %v1519
    %1935 = vmatmul.mubr.bf16.gmra.mrb[0].mxu0 %v1073
    %v1936 = vpop.f32.mrb[0].mxu0
    %v1937 = vadd.f32 %v303, %v1936
    %v1938 = vpop.f32.mrb[0].mxu0
    %v1939 = vpop.f32.mrb[0].mxu0
    %v1940 = vadd.f32 %v303, %v1939
    %v1941 = vpop.f32.mrb[0].mxu0
    %1942 = vmatprep.mubr.bf16.mxu0 %v1522
    %1943 = vmatmul.mubr.bf16.gmra.mrb[0].mxu0 %v1075
    %v1944 = vpop.f32.mrb[0].mxu0
    %v1945 = vadd.f32 %v303, %v1944
    %v1946 = vpop.f32.mrb[0].mxu0
    %v1947 = vpop.f32.mrb[0].mxu0
    %v1948 = vadd.f32 %v303, %v1947
    %v1949 = vpop.f32.mrb[0].mxu0
    %1950 = vmatprep.mubr.bf16.mxu0 %v1525
    %1951 = vmatmul.mubr.bf16.gmra.mrb[0].mxu0 %v1077
    %v1952 = vpop.f32.mrb[0].mxu0
    %v1953 = vadd.f32 %v303, %v1952
    %v1954 = vpop.f32.mrb[0].mxu0
    %v1955 = vpop.f32.mrb[0].mxu0
    %v1956 = vadd.f32 %v303, %v1955
    %v1957 = vpop.f32.mrb[0].mxu0
    %1958 = vmatprep.mubr.bf16.mxu0 %v1528
    %1959 = vmatmul.mubr.bf16.gmra.mrb[0].mxu0 %v1079
    %v1960 = vpop.f32.mrb[0].mxu0
    %v1961 = vadd.f32 %v303, %v1960
    %v1962 = vpop.f32.mrb[0].mxu0
    %v1963 = vpop.f32.mrb[0].mxu0
    %v1964 = vadd.f32 %v303, %v1963
    %v1965 = vpop.f32.mrb[0].mxu0
    %1966 = vmatprep.mubr.bf16.mxu0 %v1531
    %1967 = vmatmul.mubr.bf16.gmra.mrb[0].mxu0 %v1081
    %v1968 = vpop.f32.mrb[0].mxu0
    %v1969 = vadd.f32 %v303, %v1968
    %v1970 = vpop.f32.mrb[0].mxu0
    %v1971 = vpop.f32.mrb[0].mxu0
    %v1972 = vadd.f32 %v303, %v1971
    %v1973 = vpop.f32.mrb[0].mxu0
    %1974 = vmatprep.mubr.bf16.mxu0 %v1534
    %1975 = vmatmul.mubr.bf16.gmra.mrb[0].mxu0 %v1083
    %v1976 = vpop.f32.mrb[0].mxu0
    %v1977 = vadd.f32 %v303, %v1976
    %v1978 = vpop.f32.mrb[0].mxu0
    %v1979 = vpop.f32.mrb[0].mxu0
    %v1980 = vadd.f32 %v303, %v1979
    %v1981 = vpop.f32.mrb[0].mxu0
    %1982 = vmatprep.mubr.bf16.mxu0 %v1537
    %1983 = vmatmul.mubr.bf16.gmra.mrb[0].mxu0 %v1085
    %v1984 = vpop.f32.mrb[0].mxu0
    %v1985 = vadd.f32 %v303, %v1984
    %v1986 = vpop.f32.mrb[0].mxu0
    %v1987 = vpop.f32.mrb[0].mxu0
    %v1988 = vadd.f32 %v303, %v1987
    %v1989 = vpop.f32.mrb[0].mxu0
    %1990 = vmatprep.mubr.bf16.mxu0 %v1540
    %1991 = vmatmul.mubr.bf16.gmra.mrb[0].mxu0 %v1087
    %v1992 = vpop.f32.mrb[0].mxu0
    %v1993 = vadd.f32 %v303, %v1992
    %v1994 = vpop.f32.mrb[0].mxu0
    %v1995 = vpop.f32.mrb[0].mxu0
    %v1996 = vadd.f32 %v303, %v1995
    %v1997 = vpop.f32.mrb[0].mxu0
    %1998 = vmatprep.mubr.bf16.mxu0 %v1543
    %1999 = vmatmul.mubr.bf16.gmra.mrb[0].mxu0 %v1089
    %v2000 = vpop.f32.mrb[0].mxu0
    %v2001 = vadd.f32 %v303, %v2000
    %v2002 = vpop.f32.mrb[0].mxu0
    %v2003 = vpop.f32.mrb[0].mxu0
    %v2004 = vadd.f32 %v303, %v2003
    %v2005 = vpop.f32.mrb[0].mxu0
    %2006 = vmatprep.mubr.bf16.mxu0 %v1546
    %2007 = vmatmul.mubr.bf16.gmra.mrb[0].mxu0 %v1091
    %v2008 = vpop.f32.mrb[0].mxu0
    %v2009 = vadd.f32 %v303, %v2008
    %v2010 = vpop.f32.mrb[0].mxu0
    %v2011 = vpop.f32.mrb[0].mxu0
    %v2012 = vadd.f32 %v303, %v2011
    %v2013 = vpop.f32.mrb[0].mxu0
    %2014 = vmatprep.mubr.bf16.mxu0 %v1549
    %2015 = vmatmul.mubr.bf16.gmra.mrb[0].mxu0 %v1093
    %v2016 = vpop.f32.mrb[0].mxu0
    %v2017 = vadd.f32 %v303, %v2016
    %v2018 = vpop.f32.mrb[0].mxu0
    %v2019 = vpop.f32.mrb[0].mxu0
    %v2020 = vadd.f32 %v303, %v2019
    %v2021 = vpop.f32.mrb[0].mxu0
    %2022 = vmatprep.mubr.bf16.mxu0 %v1552
    %2023 = vmatmul.mubr.bf16.gmra.mrb[0].mxu0 %v1095
    %v2024 = vpop.f32.mrb[0].mxu0
    %v2025 = vadd.f32 %v303, %v2024
    %v2026 = vpop.f32.mrb[0].mxu0
    %v2027 = vpop.f32.mrb[0].mxu0
    %v2028 = vadd.f32 %v303, %v2027
    %v2029 = vpop.f32.mrb[0].mxu0
    %2030 = vmatprep.mubr.bf16.mxu0 %v1555
    %2031 = vmatmul.mubr.bf16.gmra.mrb[0].mxu0 %v1097
    %v2032 = vpop.f32.mrb[0].mxu0
    %v2033 = vadd.f32 %v303, %v2032
    %v2034 = vpop.f32.mrb[0].mxu0
    %v2035 = vpop.f32.mrb[0].mxu0
    %v2036 = vadd.f32 %v303, %v2035
    %v2037 = vpop.f32.mrb[0].mxu0
    %2038 = vmatprep.mubr.bf16.mxu0 %v1558
    %2039 = vmatmul.mubr.bf16.gmra.mrb[0].mxu0 %v1099
    %v2040 = vpop.f32.mrb[0].mxu0
    %v2041 = vadd.f32 %v303, %v2040
    %v2042 = vpop.f32.mrb[0].mxu0
    %v2043 = vpop.f32.mrb[0].mxu0
    %v2044 = vadd.f32 %v303, %v2043
    %v2045 = vpop.f32.mrb[0].mxu0
    %2046 = vmatprep.mubr.bf16.mxu0 %v1561
    %2047 = vmatmul.mubr.bf16.gmra.mrb[0].mxu0 %v1101
    %v2048 = vpop.f32.mrb[0].mxu0
    %v2049 = vadd.f32 %v303, %v2048
    %v2050 = vpop.f32.mrb[0].mxu0
    %v2051 = vpop.f32.mrb[0].mxu0
    %v2052 = vadd.f32 %v303, %v2051
    %v2053 = vpop.f32.mrb[0].mxu0
    %2054 = vmatprep.mubr.bf16.mxu0 %v1564
    %2055 = vmatmul.mubr.bf16.gmra.mrb[0].mxu0 %v1103
    %v2056 = vpop.f32.mrb[0].mxu0
    %v2057 = vadd.f32 %v303, %v2056
    %v2058 = vpop.f32.mrb[0].mxu0
    %v2059 = vpop.f32.mrb[0].mxu0
    %v2060 = vadd.f32 %v303, %v2059
    %v2061 = vpop.f32.mrb[0].mxu0
    %2062 = vmatprep.mubr.bf16.mxu0 %v1567
    %2063 = vmatmul.mubr.bf16.gmra.mrb[0].mxu0 %v1105
    %v2064 = vpop.f32.mrb[0].mxu0
    %v2065 = vadd.f32 %v303, %v2064
    %v2066 = vpop.f32.mrb[0].mxu0
    %v2067 = vpop.f32.mrb[0].mxu0
    %v2068 = vadd.f32 %v303, %v2067
    %v2069 = vpop.f32.mrb[0].mxu0
    %2070 = vmatprep.mubr.bf16.mxu0 %v1570
    %2071 = vmatmul.mubr.bf16.gmra.mrb[0].mxu0 %v1107
    %v2072 = vpop.f32.mrb[0].mxu0
    %v2073 = vadd.f32 %v303, %v2072
    %v2074 = vpop.f32.mrb[0].mxu0
    %v2075 = vpop.f32.mrb[0].mxu0
    %v2076 = vadd.f32 %v303, %v2075
    %v2077 = vpop.f32.mrb[0].mxu0
    %2078 = vmatprep.mubr.bf16.mxu0 %v1573
    %2079 = vmatmul.mubr.bf16.gmra.mrb[0].mxu0 %v1109
    %v2080 = vpop.f32.mrb[0].mxu0
    %v2081 = vadd.f32 %v303, %v2080
    %v2082 = vpop.f32.mrb[0].mxu0
    %v2083 = vpop.f32.mrb[0].mxu0
    %v2084 = vadd.f32 %v303, %v2083
    %v2085 = vpop.f32.mrb[0].mxu0
    %2086 = vmatprep.mubr.bf16.mxu0 %v1576
    %2087 = vmatmul.mubr.bf16.gmra.mrb[0].mxu0 %v1111
    %v2088 = vpop.f32.mrb[0].mxu0
    %v2089 = vadd.f32 %v303, %v2088
    %v2090 = vpop.f32.mrb[0].mxu0
    %v2091 = vpop.f32.mrb[0].mxu0
    %v2092 = vadd.f32 %v303, %v2091
    %v2093 = vpop.f32.mrb[0].mxu0
    %2094 = vmatprep.mubr.bf16.mxu0 %v1579
    %2095 = vmatmul.mubr.bf16.gmra.mrb[0].mxu0 %v1113
    %v2096 = vpop.f32.mrb[0].mxu0
    %v2097 = vadd.f32 %v303, %v2096
    %v2098 = vpop.f32.mrb[0].mxu0
    %v2099 = vpop.f32.mrb[0].mxu0
    %v2100 = vadd.f32 %v303, %v2099
    %v2101 = vpop.f32.mrb[0].mxu0
    %2102 = vmatprep.mubr.bf16.mxu0 %v1582
    %2103 = vmatmul.mubr.bf16.gmra.mrb[0].mxu0 %v1115
    %v2104 = vpop.f32.mrb[0].mxu0
    %v2105 = vadd.f32 %v303, %v2104
    %v2106 = vpop.f32.mrb[0].mxu0
    %v2107 = vpop.f32.mrb[0].mxu0
    %v2108 = vadd.f32 %v303, %v2107
    %v2109 = vpop.f32.mrb[0].mxu0
    %2110 = vmatprep.mubr.bf16.mxu0 %v1585
    %2111 = vmatmul.mubr.bf16.gmra.mrb[0].mxu0 %v1117
    %v2112 = vpop.f32.mrb[0].mxu0
    %v2113 = vadd.f32 %v303, %v2112
    %v2114 = vpop.f32.mrb[0].mxu0
    %v2115 = vpop.f32.mrb[0].mxu0
    %v2116 = vadd.f32 %v303, %v2115
    %v2117 = vpop.f32.mrb[0].mxu0
    %2118 = vmatprep.mubr.bf16.mxu0 %v1588
    %2119 = vmatmul.mubr.bf16.gmra.mrb[0].mxu0 %v1119
    %v2120 = vpop.f32.mrb[0].mxu0
    %v2121 = vadd.f32 %v303, %v2120
    %v2122 = vpop.f32.mrb[0].mxu0
    %v2123 = vpop.f32.mrb[0].mxu0
    %v2124 = vadd.f32 %v303, %v2123
    %v2125 = vpop.f32.mrb[0].mxu0
    %2126 = vmatprep.mubr.bf16.mxu0 %v1591
    %2127 = vmatmul.mubr.bf16.gmra.mrb[0].mxu0 %v1121
    %v2128 = vpop.f32.mrb[0].mxu0
    %v2129 = vadd.f32 %v303, %v2128
    %v2130 = vpop.f32.mrb[0].mxu0
    %v2131 = vpop.f32.mrb[0].mxu0
    %v2132 = vadd.f32 %v303, %v2131
    %v2133 = vpop.f32.mrb[0].mxu0
    %2134 = vmatprep.mubr.bf16.mxu0 %v1594
    %2135 = vmatmul.mubr.bf16.gmra.mrb[0].mxu0 %v1123
    %v2136 = vpop.f32.mrb[0].mxu0
    %v2137 = vadd.f32 %v303, %v2136
    %v2138 = vpop.f32.mrb[0].mxu0
    %v2139 = vpop.f32.mrb[0].mxu0
    %v2140 = vadd.f32 %v303, %v2139
    %v2141 = vpop.f32.mrb[0].mxu0
    %2142 = vmatprep.mubr.bf16.mxu0 %v1597
    %2143 = vmatmul.mubr.bf16.gmra.mrb[0].mxu0 %v1125
    %v2144 = vpop.f32.mrb[0].mxu0
    %v2145 = vadd.f32 %v303, %v2144
    %v2146 = vpop.f32.mrb[0].mxu0
    %v2147 = vpop.f32.mrb[0].mxu0
    %v2148 = vadd.f32 %v303, %v2147
    %v2149 = vpop.f32.mrb[0].mxu0
    %2150 = vmatprep.mubr.bf16.mxu0 %v1600
    %2151 = vmatmul.mubr.bf16.gmra.mrb[0].mxu0 %v1127
    %v2152 = vpop.f32.mrb[0].mxu0
    %v2153 = vadd.f32 %v303, %v2152
    %v2154 = vpop.f32.mrb[0].mxu0
    %v2155 = vpop.f32.mrb[0].mxu0
    %v2156 = vadd.f32 %v303, %v2155
    %v2157 = vpop.f32.mrb[0].mxu0
    %2158 = vmatprep.mubr.bf16.mxu0 %v1603
    %2159 = vmatmul.mubr.bf16.gmra.mrb[0].mxu0 %v1129
    %v2160 = vpop.f32.mrb[0].mxu0
    %v2161 = vadd.f32 %v303, %v2160
    %v2162 = vpop.f32.mrb[0].mxu0
    %v2163 = vpop.f32.mrb[0].mxu0
    %v2164 = vadd.f32 %v303, %v2163
    %v2165 = vpop.f32.mrb[0].mxu0
    %2166 = vmatprep.mubr.bf16.mxu0 %v1606
    %2167 = vmatmul.mubr.bf16.gmra.mrb[0].mxu0 %v1131
    %v2168 = vpop.f32.mrb[0].mxu0
    %v2169 = vadd.f32 %v303, %v2168
    %v2170 = vpop.f32.mrb[0].mxu0
    %v2171 = vpop.f32.mrb[0].mxu0
    %v2172 = vadd.f32 %v303, %v2171
    %v2173 = vpop.f32.mrb[0].mxu0
    %2174 = vmatprep.mubr.bf16.mxu0 %v1609
    %2175 = vmatmul.mubr.bf16.gmra.mrb[0].mxu0 %v1133
    %v2176 = vpop.f32.mrb[0].mxu0
    %v2177 = vadd.f32 %v303, %v2176
    %v2178 = vpop.f32.mrb[0].mxu0
    %v2179 = vpop.f32.mrb[0].mxu0
    %v2180 = vadd.f32 %v303, %v2179
    %v2181 = vpop.f32.mrb[0].mxu0
    %2182 = vmatprep.mubr.bf16.mxu0 %v1612
    %2183 = vmatmul.mubr.bf16.gmra.mrb[0].mxu0 %v1135
    %v2184 = vpop.f32.mrb[0].mxu0
    %v2185 = vadd.f32 %v303, %v2184
    %v2186 = vpop.f32.mrb[0].mxu0
    %v2187 = vpop.f32.mrb[0].mxu0
    %v2188 = vadd.f32 %v303, %v2187
    %v2189 = vpop.f32.mrb[0].mxu0
    %2190 = vmatprep.mubr.bf16.mxu0 %v1615
    %2191 = vmatmul.mubr.bf16.gmra.mrb[0].mxu0 %v1137
    %v2192 = vpop.f32.mrb[0].mxu0
    %v2193 = vadd.f32 %v303, %v2192
    %v2194 = vpop.f32.mrb[0].mxu0
    %v2195 = vpop.f32.mrb[0].mxu0
    %v2196 = vadd.f32 %v303, %v2195
    %v2197 = vpop.f32.mrb[0].mxu0
    %2198 = vmatprep.mubr.bf16.mxu0 %v1618
    %2199 = vmatmul.mubr.bf16.gmra.mrb[0].mxu0 %v1139
    %v2200 = vpop.f32.mrb[0].mxu0
    %v2201 = vadd.f32 %v303, %v2200
    %v2202 = vpop.f32.mrb[0].mxu0
    %v2203 = vpop.f32.mrb[0].mxu0
    %v2204 = vadd.f32 %v303, %v2203
    %v2205 = vpop.f32.mrb[0].mxu0
    %2206 = vmatprep.mubr.bf16.mxu0 %v1621
    %2207 = vmatmul.mubr.bf16.gmra.mrb[0].mxu0 %v1141
    %v2208 = vpop.f32.mrb[0].mxu0
    %v2209 = vadd.f32 %v303, %v2208
    %v2210 = vpop.f32.mrb[0].mxu0
    %v2211 = vpop.f32.mrb[0].mxu0
    %v2212 = vadd.f32 %v303, %v2211
    %v2213 = vpop.f32.mrb[0].mxu0
    %2214 = vmatprep.mubr.bf16.mxu0 %v1624
    %2215 = vmatmul.mubr.bf16.gmra.mrb[0].mxu0 %v1143
    %v2216 = vpop.f32.mrb[0].mxu0
    %v2217 = vadd.f32 %v303, %v2216
    %v2218 = vpop.f32.mrb[0].mxu0
    %v2219 = vpop.f32.mrb[0].mxu0
    %v2220 = vadd.f32 %v303, %v2219
    %v2221 = vpop.f32.mrb[0].mxu0
    %2222 = vmatprep.mubr.bf16.mxu0 %v1627
    %2223 = vmatmul.mubr.bf16.gmra.mrb[0].mxu0 %v1145
    %v2224 = vpop.f32.mrb[0].mxu0
    %v2225 = vadd.f32 %v303, %v2224
    %v2226 = vpop.f32.mrb[0].mxu0
    %v2227 = vpop.f32.mrb[0].mxu0
    %v2228 = vadd.f32 %v303, %v2227
    %v2229 = vpop.f32.mrb[0].mxu0
    %2230 = vmatprep.mubr.bf16.mxu0 %v1630
    %2231 = vmatmul.mubr.bf16.gmra.mrb[0].mxu0 %v1147
    %v2232 = vpop.f32.mrb[0].mxu0
    %v2233 = vadd.f32 %v303, %v2232
    %v2234 = vpop.f32.mrb[0].mxu0
    %v2235 = vpop.f32.mrb[0].mxu0
    %v2236 = vadd.f32 %v303, %v2235
    %v2237 = vpop.f32.mrb[0].mxu0
    %2238 = vmatprep.mubr.bf16.mxu0 %v1633
    %2239 = vmatmul.mubr.bf16.gmra.mrb[0].mxu0 %v1149
    %v2240 = vpop.f32.mrb[0].mxu0
    %v2241 = vadd.f32 %v303, %v2240
    %v2242 = vpop.f32.mrb[0].mxu0
    %v2243 = vpop.f32.mrb[0].mxu0
    %v2244 = vadd.f32 %v303, %v2243
    %v2245 = vpop.f32.mrb[0].mxu0
    %2246 = vmatprep.mubr.bf16.mxu0 %v1636
    %2247 = vmatmul.mubr.bf16.gmra.mrb[0].mxu0 %v1151
    %v2248 = vpop.f32.mrb[0].mxu0
    %v2249 = vadd.f32 %v303, %v2248
    %v2250 = vpop.f32.mrb[0].mxu0
    %v2251 = vpop.f32.mrb[0].mxu0
    %v2252 = vadd.f32 %v303, %v2251
    %v2253 = vpop.f32.mrb[0].mxu0
    %2254 = vmatprep.mubr.bf16.mxu0 %v1639
    %2255 = vmatmul.mubr.bf16.gmra.mrb[0].mxu0 %v1153
    %v2256 = vpop.f32.mrb[0].mxu0
    %v2257 = vadd.f32 %v303, %v2256
    %v2258 = vpop.f32.mrb[0].mxu0
    %v2259 = vpop.f32.mrb[0].mxu0
    %v2260 = vadd.f32 %v303, %v2259
    %v2261 = vpop.f32.mrb[0].mxu0
    %2262 = vmatprep.mubr.bf16.mxu0 %v1642
    %2263 = vmatmul.mubr.bf16.gmra.mrb[0].mxu0 %v1155
    %v2264 = vpop.f32.mrb[0].mxu0
    %v2265 = vadd.f32 %v303, %v2264
    %v2266 = vpop.f32.mrb[0].mxu0
    %v2267 = vpop.f32.mrb[0].mxu0
    %v2268 = vadd.f32 %v303, %v2267
    %v2269 = vpop.f32.mrb[0].mxu0
    %2270 = vmatprep.mubr.bf16.mxu0 %v1645
    %2271 = vmatmul.mubr.bf16.gmra.mrb[0].mxu0 %v1157
    %v2272 = vpop.f32.mrb[0].mxu0
    %v2273 = vadd.f32 %v303, %v2272
    %v2274 = vpop.f32.mrb[0].mxu0
    %v2275 = vpop.f32.mrb[0].mxu0
    %v2276 = vadd.f32 %v303, %v2275
    %v2277 = vpop.f32.mrb[0].mxu0
    %2278 = vmatprep.mubr.bf16.mxu0 %v1648
    %2279 = vmatmul.mubr.bf16.gmra.mrb[0].mxu0 %v1159
    %v2280 = vpop.f32.mrb[0].mxu0
    %v2281 = vadd.f32 %v303, %v2280
    %v2282 = vpop.f32.mrb[0].mxu0
    %v2283 = vpop.f32.mrb[0].mxu0
    %v2284 = vadd.f32 %v303, %v2283
    %v2285 = vpop.f32.mrb[0].mxu0
    %2286 = vmatprep.mubr.bf16.mxu0 %v1651
    %2287 = vmatmul.mubr.bf16.gmra.mrb[0].mxu0 %v1161
    %v2288 = vpop.f32.mrb[0].mxu0
    %v2289 = vadd.f32 %v303, %v2288
    %v2290 = vpop.f32.mrb[0].mxu0
    %v2291 = vpop.f32.mrb[0].mxu0
    %v2292 = vadd.f32 %v303, %v2291
    %v2293 = vpop.f32.mrb[0].mxu0
    %2294 = vmatprep.mubr.bf16.mxu0 %v1654
    %2295 = vmatmul.mubr.bf16.gmra.mrb[0].mxu0 %v1163
    %v2296 = vpop.f32.mrb[0].mxu0
    %v2297 = vadd.f32 %v303, %v2296
    %v2298 = vpop.f32.mrb[0].mxu0
    %v2299 = vpop.f32.mrb[0].mxu0
    %v2300 = vadd.f32 %v303, %v2299
    %v2301 = vpop.f32.mrb[0].mxu0
    %2302 = vmatprep.mubr.bf16.mxu0 %v1657
    %2303 = vmatmul.mubr.bf16.gmra.mrb[0].mxu0 %v1165
    %v2304 = vpop.f32.mrb[0].mxu0
    %v2305 = vadd.f32 %v303, %v2304
    %v2306 = vpop.f32.mrb[0].mxu0
    %v2307 = vpop.f32.mrb[0].mxu0
    %v2308 = vadd.f32 %v303, %v2307
    %v2309 = vpop.f32.mrb[0].mxu0
    %2310 = vmatprep.mubr.bf16.mxu0 %v1660
    %2311 = vmatmul.mubr.bf16.gmra.mrb[0].mxu0 %v1167
    %v2312 = vpop.f32.mrb[0].mxu0
    %v2313 = vadd.f32 %v303, %v2312
    %v2314 = vpop.f32.mrb[0].mxu0
    %v2315 = vpop.f32.mrb[0].mxu0
    %v2316 = vadd.f32 %v303, %v2315
    %v2317 = vpop.f32.mrb[0].mxu0
    %2318 = vmatprep.mubr.bf16.mxu0 %v1663
    %2319 = vmatmul.mubr.bf16.gmra.mrb[0].mxu0 %v1169
    %v2320 = vpop.f32.mrb[0].mxu0
    %v2321 = vadd.f32 %v303, %v2320
    %v2322 = vpop.f32.mrb[0].mxu0
    %v2323 = vpop.f32.mrb[0].mxu0
    %v2324 = vadd.f32 %v303, %v2323
    %v2325 = vpop.f32.mrb[0].mxu0
    %2326 = vmatprep.mubr.bf16.mxu0 %v1666
    %2327 = vmatmul.mubr.bf16.gmra.mrb[0].mxu0 %v1171
    %v2328 = vpop.f32.mrb[0].mxu0
    %v2329 = vadd.f32 %v303, %v2328
    %v2330 = vpop.f32.mrb[0].mxu0
    %v2331 = vpop.f32.mrb[0].mxu0
    %v2332 = vadd.f32 %v303, %v2331
    %v2333 = vpop.f32.mrb[0].mxu0
    %2334 = vmatprep.mubr.bf16.mxu0 %v1669
    %2335 = vmatmul.mubr.bf16.gmra.mrb[0].mxu0 %v1173
    %v2336 = vpop.f32.mrb[0].mxu0
    %v2337 = vadd.f32 %v303, %v2336
    %v2338 = vpop.f32.mrb[0].mxu0
    %v2339 = vpop.f32.mrb[0].mxu0
    %v2340 = vadd.f32 %v303, %v2339
    %v2341 = vpop.f32.mrb[0].mxu0
    %2342 = vmatprep.mubr.bf16.mxu0 %v1672
    %2343 = vmatmul.mubr.bf16.gmra.mrb[0].mxu0 %v1175
    %v2344 = vpop.f32.mrb[0].mxu0
    %v2345 = vadd.f32 %v303, %v2344
    %v2346 = vpop.f32.mrb[0].mxu0
    %v2347 = vpop.f32.mrb[0].mxu0
    %v2348 = vadd.f32 %v303, %v2347
    %v2349 = vpop.f32.mrb[0].mxu0
    %2350 = vmatprep.mubr.bf16.mxu0 %v1675
    %2351 = vmatmul.mubr.bf16.gmra.mrb[0].mxu0 %v1177
    %v2352 = vpop.f32.mrb[0].mxu0
    %v2353 = vadd.f32 %v303, %v2352
    %v2354 = vpop.f32.mrb[0].mxu0
    %v2355 = vpop.f32.mrb[0].mxu0
    %v2356 = vadd.f32 %v303, %v2355
    %v2357 = vpop.f32.mrb[0].mxu0
    %2358 = vmatprep.mubr.bf16.mxu0 %v1678
    %2359 = vmatmul.mubr.bf16.gmra.mrb[0].mxu0 %v1179
    %v2360 = vpop.f32.mrb[0].mxu0
    %v2361 = vadd.f32 %v303, %v2360
    %v2362 = vpop.f32.mrb[0].mxu0
    %v2363 = vpop.f32.mrb[0].mxu0
    %v2364 = vadd.f32 %v303, %v2363
    %v2365 = vpop.f32.mrb[0].mxu0
    %2366 = vmatprep.mubr.bf16.mxu0 %v1681
    %2367 = vmatmul.mubr.bf16.gmra.mrb[0].mxu0 %v1181
    %v2368 = vpop.f32.mrb[0].mxu0
    %v2369 = vadd.f32 %v303, %v2368
    %v2370 = vpop.f32.mrb[0].mxu0
    %v2371 = vpop.f32.mrb[0].mxu0
    %v2372 = vadd.f32 %v303, %v2371
    %v2373 = vpop.f32.mrb[0].mxu0
    %2374 = vmatprep.mubr.bf16.mxu0 %v1684
    %2375 = vmatmul.mubr.bf16.gmra.mrb[0].mxu0 %v1183
    %v2376 = vpop.f32.mrb[0].mxu0
    %v2377 = vadd.f32 %v303, %v2376
    %v2378 = vpop.f32.mrb[0].mxu0
    %v2379 = vpop.f32.mrb[0].mxu0
    %v2380 = vadd.f32 %v303, %v2379
    %v2381 = vpop.f32.mrb[0].mxu0
    %2382 = vmatprep.mubr.bf16.mxu0 %v1687
    %2383 = vmatmul.mubr.bf16.gmra.mrb[0].mxu0 %v1185
    %v2384 = vpop.f32.mrb[0].mxu0
    %v2385 = vadd.f32 %v303, %v2384
    %v2386 = vpop.f32.mrb[0].mxu0
    %v2387 = vpop.f32.mrb[0].mxu0
    %v2388 = vadd.f32 %v303, %v2387
    %v2389 = vpop.f32.mrb[0].mxu0
    %2390 = vmatprep.mubr.bf16.mxu0 %v1690
    %2391 = vmatmul.mubr.bf16.gmra.mrb[0].mxu0 %v1187
    %v2392 = vpop.f32.mrb[0].mxu0
    %v2393 = vadd.f32 %v303, %v2392
    %v2394 = vpop.f32.mrb[0].mxu0
    %v2395 = vpop.f32.mrb[0].mxu0
    %v2396 = vadd.f32 %v303, %v2395
    %v2397 = vpop.f32.mrb[0].mxu0
    %2398 = vmatprep.mubr.bf16.mxu0 %v1693
    %2399 = vmatmul.mubr.bf16.gmra.mrb[0].mxu0 %v1189
    %v2400 = vpop.f32.mrb[0].mxu0
    %v2401 = vadd.f32 %v303, %v2400
    %v2402 = vpop.f32.mrb[0].mxu0
    %v2403 = vpop.f32.mrb[0].mxu0
    %v2404 = vadd.f32 %v303, %v2403
    %v2405 = vpop.f32.mrb[0].mxu0
    %2406 = vmatprep.mubr.bf16.mxu0 %v1696
    %2407 = vmatmul.mubr.bf16.gmra.mrb[0].mxu0 %v1191
    %v2408 = vpop.f32.mrb[0].mxu0
    %v2409 = vadd.f32 %v303, %v2408
    %v2410 = vpop.f32.mrb[0].mxu0
    %v2411 = vpop.f32.mrb[0].mxu0
    %v2412 = vadd.f32 %v303, %v2411
    %v2413 = vpop.f32.mrb[0].mxu0
    %2414 = vmatprep.mubr.bf16.mxu0 %v1699
    %2415 = vmatmul.mubr.bf16.gmra.mrb[0].mxu0 %v1193
    %v2416 = vpop.f32.mrb[0].mxu0
    %v2417 = vadd.f32 %v303, %v2416
    %v2418 = vpop.f32.mrb[0].mxu0
    %v2419 = vpop.f32.mrb[0].mxu0
    %v2420 = vadd.f32 %v303, %v2419
    %v2421 = vpop.f32.mrb[0].mxu0
    %2422 = vmatprep.mubr.bf16.mxu0 %v1702
    %2423 = vmatmul.mubr.bf16.gmra.mrb[0].mxu0 %v1195
    %v2424 = vpop.f32.mrb[0].mxu0
    %v2425 = vadd.f32 %v303, %v2424
    %v2426 = vpop.f32.mrb[0].mxu0
    %v2427 = vpop.f32.mrb[0].mxu0
    %v2428 = vadd.f32 %v303, %v2427
    %v2429 = vpop.f32.mrb[0].mxu0
    %2430 = vmatprep.mubr.bf16.mxu0 %v1705
    %2431 = vmatmul.mubr.bf16.gmra.mrb[0].mxu0 %v1197
    %v2432 = vpop.f32.mrb[0].mxu0
    %v2433 = vadd.f32 %v303, %v2432
    %v2434 = vpop.f32.mrb[0].mxu0
    %v2435 = vpop.f32.mrb[0].mxu0
    %v2436 = vadd.f32 %v303, %v2435
    %v2437 = vpop.f32.mrb[0].mxu0
    %2438 = vmatprep.mubr.bf16.mxu0 %v1708
    %2439 = vmatmul.mubr.bf16.gmra.mrb[0].mxu0 %v1199
    %v2440 = vpop.f32.mrb[0].mxu0
    %v2441 = vadd.f32 %v303, %v2440
    %v2442 = vpop.f32.mrb[0].mxu0
    %v2443 = vpop.f32.mrb[0].mxu0
    %v2444 = vadd.f32 %v303, %v2443
    %v2445 = vpop.f32.mrb[0].mxu0
    %2446 = vmatprep.mubr.bf16.mxu0 %v1711
    %2447 = vmatmul.mubr.bf16.gmra.mrb[0].mxu0 %v1201
    %v2448 = vpop.f32.mrb[0].mxu0
    %v2449 = vadd.f32 %v303, %v2448
    %v2450 = vpop.f32.mrb[0].mxu0
    %v2451 = vpop.f32.mrb[0].mxu0
    %v2452 = vadd.f32 %v303, %v2451
    %v2453 = vpop.f32.mrb[0].mxu0
    %2454 = vmatprep.mubr.bf16.mxu0 %v1714
    %2455 = vmatmul.mubr.bf16.gmra.mrb[0].mxu0 %v1203
    %v2456 = vpop.f32.mrb[0].mxu0
    %v2457 = vadd.f32 %v303, %v2456
    %v2458 = vpop.f32.mrb[0].mxu0
    %v2459 = vpop.f32.mrb[0].mxu0
    %v2460 = vadd.f32 %v303, %v2459
    %v2461 = vpop.f32.mrb[0].mxu0
    %2462 = vmatprep.mubr.bf16.mxu0 %v1717
    %2463 = vmatmul.mubr.bf16.gmra.mrb[0].mxu0 %v1205
    %v2464 = vpop.f32.mrb[0].mxu0
    %v2465 = vadd.f32 %v303, %v2464
    %v2466 = vpop.f32.mrb[0].mxu0
    %v2467 = vpop.f32.mrb[0].mxu0
    %v2468 = vadd.f32 %v303, %v2467
    %v2469 = vpop.f32.mrb[0].mxu0
    %2470 = vmatprep.mubr.bf16.mxu0 %v1720
    %2471 = vmatmul.mubr.bf16.gmra.mrb[0].mxu0 %v1207
    %v2472 = vpop.f32.mrb[0].mxu0
    %v2473 = vadd.f32 %v303, %v2472
    %v2474 = vpop.f32.mrb[0].mxu0
    %v2475 = vpop.f32.mrb[0].mxu0
    %v2476 = vadd.f32 %v303, %v2475
    %v2477 = vpop.f32.mrb[0].mxu0
    %2478 = vmatprep.mubr.bf16.mxu0 %v1723
    %2479 = vmatmul.mubr.bf16.gmra.mrb[0].mxu0 %v1209
    %v2480 = vpop.f32.mrb[0].mxu0
    %v2481 = vadd.f32 %v303, %v2480
    %v2482 = vpop.f32.mrb[0].mxu0
    %v2483 = vpop.f32.mrb[0].mxu0
    %v2484 = vadd.f32 %v303, %v2483
    %v2485 = vpop.f32.mrb[0].mxu0
    %2486 = vmatprep.mubr.bf16.mxu0 %v1726
    %2487 = vmatmul.mubr.bf16.gmra.mrb[0].mxu0 %v1211
    %v2488 = vpop.f32.mrb[0].mxu0
    %v2489 = vadd.f32 %v303, %v2488
    %v2490 = vpop.f32.mrb[0].mxu0
    %v2491 = vpop.f32.mrb[0].mxu0
    %v2492 = vadd.f32 %v303, %v2491
    %v2493 = vpop.f32.mrb[0].mxu0
    %2494 = vmatprep.mubr.bf16.mxu0 %v1729
    %2495 = vmatmul.mubr.bf16.gmra.mrb[0].mxu0 %v1213
    %v2496 = vpop.f32.mrb[0].mxu0
    %v2497 = vadd.f32 %v303, %v2496
    %v2498 = vpop.f32.mrb[0].mxu0
    %v2499 = vpop.f32.mrb[0].mxu0
    %v2500 = vadd.f32 %v303, %v2499
    %v2501 = vpop.f32.mrb[0].mxu0
    %2502 = vmatprep.mubr.bf16.mxu0 %v1732
    %2503 = vmatmul.mubr.bf16.gmra.mrb[0].mxu0 %v1215
    %v2504 = vpop.f32.mrb[0].mxu0
    %v2505 = vadd.f32 %v303, %v2504
    %v2506 = vpop.f32.mrb[0].mxu0
    %v2507 = vpop.f32.mrb[0].mxu0
    %v2508 = vadd.f32 %v303, %v2507
    %v2509 = vpop.f32.mrb[0].mxu0
    %2510 = vmatprep.mubr.bf16.mxu0 %v1735
    %2511 = vmatmul.mubr.bf16.gmra.mrb[0].mxu0 %v1217
    %v2512 = vpop.f32.mrb[0].mxu0
    %v2513 = vadd.f32 %v303, %v2512
    %v2514 = vpop.f32.mrb[0].mxu0
    %v2515 = vpop.f32.mrb[0].mxu0
    %v2516 = vadd.f32 %v303, %v2515
    %v2517 = vpop.f32.mrb[0].mxu0
    %2518 = vmatprep.mubr.bf16.mxu0 %v1738
    %2519 = vmatmul.mubr.bf16.gmra.mrb[0].mxu0 %v1219
    %v2520 = vpop.f32.mrb[0].mxu0
    %v2521 = vadd.f32 %v303, %v2520
    %v2522 = vpop.f32.mrb[0].mxu0
    %v2523 = vpop.f32.mrb[0].mxu0
    %v2524 = vadd.f32 %v303, %v2523
    %v2525 = vpop.f32.mrb[0].mxu0
    %2526 = vmatprep.mubr.bf16.mxu0 %v1741
    %2527 = vmatmul.mubr.bf16.gmra.mrb[0].mxu0 %v1221
    %v2528 = vpop.f32.mrb[0].mxu0
    %v2529 = vadd.f32 %v303, %v2528
    %v2530 = vpop.f32.mrb[0].mxu0
    %v2531 = vpop.f32.mrb[0].mxu0
    %v2532 = vadd.f32 %v303, %v2531
    %v2533 = vpop.f32.mrb[0].mxu0
    %2534 = vmatprep.mubr.bf16.mxu0 %v1744
    %2535 = vmatmul.mubr.bf16.gmra.mrb[0].mxu0 %v1223
    %v2536 = vpop.f32.mrb[0].mxu0
    %v2537 = vadd.f32 %v303, %v2536
    %v2538 = vpop.f32.mrb[0].mxu0
    %v2539 = vpop.f32.mrb[0].mxu0
    %v2540 = vadd.f32 %v303, %v2539
    %v2541 = vpop.f32.mrb[0].mxu0
    %2542 = vmatprep.mubr.bf16.mxu0 %v1747
    %2543 = vmatmul.mubr.bf16.gmra.mrb[0].mxu0 %v1225
    %v2544 = vpop.f32.mrb[0].mxu0
    %v2545 = vadd.f32 %v303, %v2544
    %v2546 = vpop.f32.mrb[0].mxu0
    %v2547 = vpop.f32.mrb[0].mxu0
    %v2548 = vadd.f32 %v303, %v2547
    %v2549 = vpop.f32.mrb[0].mxu0
    %2550 = vmatprep.mubr.bf16.mxu0 %v1750
    %2551 = vmatmul.mubr.bf16.gmra.mrb[0].mxu0 %v1227
    %v2552 = vpop.f32.mrb[0].mxu0
    %v2553 = vadd.f32 %v303, %v2552
    %v2554 = vpop.f32.mrb[0].mxu0
    %v2555 = vpop.f32.mrb[0].mxu0
    %v2556 = vadd.f32 %v303, %v2555
    %v2557 = vpop.f32.mrb[0].mxu0
    %2558 = vmatprep.mubr.bf16.mxu0 %v1753
    %2559 = vmatmul.mubr.bf16.gmra.mrb[0].mxu0 %v1229
    %v2560 = vpop.f32.mrb[0].mxu0
    %v2561 = vadd.f32 %v303, %v2560
    %v2562 = vpop.f32.mrb[0].mxu0
    %v2563 = vpop.f32.mrb[0].mxu0
    %v2564 = vadd.f32 %v303, %v2563
    %v2565 = vpop.f32.mrb[0].mxu0
    %2566 = vmatprep.mubr.bf16.mxu0 %v1756
    %2567 = vmatmul.mubr.bf16.gmra.mrb[0].mxu0 %v1231
    %v2568 = vpop.f32.mrb[0].mxu0
    %v2569 = vadd.f32 %v303, %v2568
    %v2570 = vpop.f32.mrb[0].mxu0
    %v2571 = vpop.f32.mrb[0].mxu0
    %v2572 = vadd.f32 %v303, %v2571
    %v2573 = vpop.f32.mrb[0].mxu0
    %2574 = vmatprep.mubr.bf16.mxu0 %v1759
    %2575 = vmatmul.mubr.bf16.gmra.mrb[0].mxu0 %v1233
    %v2576 = vpop.f32.mrb[0].mxu0
    %v2577 = vadd.f32 %v303, %v2576
    %v2578 = vpop.f32.mrb[0].mxu0
    %v2579 = vpop.f32.mrb[0].mxu0
    %v2580 = vadd.f32 %v303, %v2579
    %v2581 = vpop.f32.mrb[0].mxu0
    %2582 = vmatprep.mubr.bf16.mxu0 %v1762
    %2583 = vmatmul.mubr.bf16.gmra.mrb[0].mxu0 %v1235
    %v2584 = vpop.f32.mrb[0].mxu0
    %v2585 = vadd.f32 %v303, %v2584
    %v2586 = vpop.f32.mrb[0].mxu0
    %v2587 = vpop.f32.mrb[0].mxu0
    %v2588 = vadd.f32 %v303, %v2587
    %v2589 = vpop.f32.mrb[0].mxu0
    %2590 = vmatprep.mubr.bf16.mxu0 %v1765
    %2591 = vmatmul.mubr.bf16.gmra.mrb[0].mxu0 %v1237
    %v2592 = vpop.f32.mrb[0].mxu0
    %v2593 = vadd.f32 %v303, %v2592
    %v2594 = vpop.f32.mrb[0].mxu0
    %v2595 = vpop.f32.mrb[0].mxu0
    %v2596 = vadd.f32 %v303, %v2595
    %v2597 = vpop.f32.mrb[0].mxu0
    %2598 = vmatprep.mubr.bf16.mxu0 %v1768
    %2599 = vmatmul.mubr.bf16.gmra.mrb[0].mxu0 %v1239
    %v2600 = vpop.f32.mrb[0].mxu0
    %v2601 = vadd.f32 %v303, %v2600
    %v2602 = vpop.f32.mrb[0].mxu0
    %v2603 = vpop.f32.mrb[0].mxu0
    %v2604 = vadd.f32 %v303, %v2603
    %v2605 = vpop.f32.mrb[0].mxu0
    %2606 = vmatprep.mubr.bf16.mxu0 %v1771
    %2607 = vmatmul.mubr.bf16.gmra.mrb[0].mxu0 %v1241
    %v2608 = vpop.f32.mrb[0].mxu0
    %v2609 = vadd.f32 %v303, %v2608
    %v2610 = vpop.f32.mrb[0].mxu0
    %v2611 = vpop.f32.mrb[0].mxu0
    %v2612 = vadd.f32 %v303, %v2611
    %v2613 = vpop.f32.mrb[0].mxu0
    %2614 = vmatprep.mubr.bf16.mxu0 %v1774
    %2615 = vmatmul.mubr.bf16.gmra.mrb[0].mxu0 %v1243
    %v2616 = vpop.f32.mrb[0].mxu0
    %v2617 = vadd.f32 %v303, %v2616
    %v2618 = vpop.f32.mrb[0].mxu0
    %v2619 = vpop.f32.mrb[0].mxu0
    %v2620 = vadd.f32 %v303, %v2619
    %v2621 = vpop.f32.mrb[0].mxu0
    %2622 = vmatprep.mubr.bf16.mxu0 %v1777
    %2623 = vmatmul.mubr.bf16.gmra.mrb[0].mxu0 %v1245
    %v2624 = vpop.f32.mrb[0].mxu0
    %v2625 = vadd.f32 %v303, %v2624
    %v2626 = vpop.f32.mrb[0].mxu0
    %v2627 = vpop.f32.mrb[0].mxu0
    %v2628 = vadd.f32 %v303, %v2627
    %v2629 = vpop.f32.mrb[0].mxu0
    %2630 = vmatprep.mubr.bf16.mxu0 %v1780
    %2631 = vmatmul.mubr.bf16.gmra.mrb[0].mxu0 %v1247
    %v2632 = vpop.f32.mrb[0].mxu0
    %v2633 = vadd.f32 %v303, %v2632
    %v2634 = vpop.f32.mrb[0].mxu0
    %v2635 = vpop.f32.mrb[0].mxu0
    %v2636 = vadd.f32 %v303, %v2635
    %v2637 = vpop.f32.mrb[0].mxu0
    %2638 = vmatprep.mubr.bf16.mxu0 %v1783
    %2639 = vmatmul.mubr.bf16.gmra.mrb[0].mxu0 %v1249
    %v2640 = vpop.f32.mrb[0].mxu0
    %v2641 = vadd.f32 %v303, %v2640
    %v2642 = vpop.f32.mrb[0].mxu0
    %v2643 = vpop.f32.mrb[0].mxu0
    %v2644 = vadd.f32 %v303, %v2643
    %v2645 = vpop.f32.mrb[0].mxu0
    %2646 = vmatprep.mubr.bf16.mxu0 %v1786
    %2647 = vmatmul.mubr.bf16.gmra.mrb[0].mxu0 %v1251
    %v2648 = vpop.f32.mrb[0].mxu0
    %v2649 = vadd.f32 %v303, %v2648
    %v2650 = vpop.f32.mrb[0].mxu0
    %v2651 = vpop.f32.mrb[0].mxu0
    %v2652 = vadd.f32 %v303, %v2651
    %v2653 = vpop.f32.mrb[0].mxu0
    %2654 = vmatprep.mubr.bf16.mxu0 %v1789
    %2655 = vmatmul.mubr.bf16.gmra.mrb[0].mxu0 %v1253
    %v2656 = vpop.f32.mrb[0].mxu0
    %v2657 = vadd.f32 %v303, %v2656
    %v2658 = vpop.f32.mrb[0].mxu0
    %v2659 = vpop.f32.mrb[0].mxu0
    %v2660 = vadd.f32 %v303, %v2659
    %v2661 = vpop.f32.mrb[0].mxu0
    %2662 = vmatprep.mubr.bf16.mxu0 %v1792
    %2663 = vmatmul.mubr.bf16.gmra.mrb[0].mxu0 %v1255
    %v2664 = vpop.f32.mrb[0].mxu0
    %v2665 = vadd.f32 %v303, %v2664
    %v2666 = vpop.f32.mrb[0].mxu0
    %v2667 = vpop.f32.mrb[0].mxu0
    %v2668 = vadd.f32 %v303, %v2667
    %v2669 = vpop.f32.mrb[0].mxu0
    %2670 = vmatprep.mubr.bf16.mxu0 %v1795
    %2671 = vmatmul.mubr.bf16.gmra.mrb[0].mxu0 %v1257
    %v2672 = vpop.f32.mrb[0].mxu0
    %v2673 = vadd.f32 %v303, %v2672
    %v2674 = vpop.f32.mrb[0].mxu0
    %v2675 = vpop.f32.mrb[0].mxu0
    %v2676 = vadd.f32 %v303, %v2675
    %v2677 = vpop.f32.mrb[0].mxu0
    %2678 = vmatprep.mubr.bf16.mxu0 %v1798
    %2679 = vmatmul.mubr.bf16.gmra.mrb[0].mxu0 %v1259
    %v2680 = vpop.f32.mrb[0].mxu0
    %v2681 = vadd.f32 %v303, %v2680
    %v2682 = vpop.f32.mrb[0].mxu0
    %v2683 = vpop.f32.mrb[0].mxu0
    %v2684 = vadd.f32 %v303, %v2683
    %v2685 = vpop.f32.mrb[0].mxu0
    %2686 = vmatprep.mubr.bf16.mxu0 %v1801
    %2687 = vmatmul.mubr.bf16.gmra.mrb[0].mxu0 %v1261
    %v2688 = vpop.f32.mrb[0].mxu0
    %v2689 = vadd.f32 %v303, %v2688
    %v2690 = vpop.f32.mrb[0].mxu0
    %v2691 = vpop.f32.mrb[0].mxu0
    %v2692 = vadd.f32 %v303, %v2691
    %v2693 = vpop.f32.mrb[0].mxu0
    %2694 = vmatprep.mubr.bf16.mxu0 %v1804
    %2695 = vmatmul.mubr.bf16.gmra.mrb[0].mxu0 %v1263
    %v2696 = vpop.f32.mrb[0].mxu0
    %v2697 = vadd.f32 %v303, %v2696
    %v2698 = vpop.f32.mrb[0].mxu0
    %v2699 = vpop.f32.mrb[0].mxu0
    %v2700 = vadd.f32 %v303, %v2699
    %v2701 = vpop.f32.mrb[0].mxu0
    %2702 = vmatprep.mubr.bf16.mxu0 %v1807
    %2703 = vmatmul.mubr.bf16.gmra.mrb[0].mxu0 %v1265
    %v2704 = vpop.f32.mrb[0].mxu0
    %v2705 = vadd.f32 %v303, %v2704
    %v2706 = vpop.f32.mrb[0].mxu0
    %v2707 = vpop.f32.mrb[0].mxu0
    %v2708 = vadd.f32 %v303, %v2707
    %v2709 = vpop.f32.mrb[0].mxu0
    %2710 = vmatprep.mubr.bf16.mxu0 %v1810
    %2711 = vmatmul.mubr.bf16.gmra.mrb[0].mxu0 %v1267
    %v2712 = vpop.f32.mrb[0].mxu0
    %v2713 = vadd.f32 %v303, %v2712
    %v2714 = vpop.f32.mrb[0].mxu0
    %v2715 = vpop.f32.mrb[0].mxu0
    %v2716 = vadd.f32 %v303, %v2715
    %v2717 = vpop.f32.mrb[0].mxu0
    %2718 = vmatprep.mubr.bf16.mxu0 %v1813
    %2719 = vmatmul.mubr.bf16.gmra.mrb[0].mxu0 %v1269
    %v2720 = vpop.f32.mrb[0].mxu0
    %v2721 = vadd.f32 %v303, %v2720
    %v2722 = vpop.f32.mrb[0].mxu0
    %v2723 = vpop.f32.mrb[0].mxu0
    %v2724 = vadd.f32 %v303, %v2723
    %v2725 = vpop.f32.mrb[0].mxu0
    %2726 = vmatprep.mubr.bf16.mxu0 %v1816
    %2727 = vmatmul.mubr.bf16.gmra.mrb[0].mxu0 %v1271
    %v2728 = vpop.f32.mrb[0].mxu0
    %v2729 = vadd.f32 %v303, %v2728
    %v2730 = vpop.f32.mrb[0].mxu0
    %v2731 = vpop.f32.mrb[0].mxu0
    %v2732 = vadd.f32 %v303, %v2731
    %v2733 = vpop.f32.mrb[0].mxu0
    %2734 = vmatprep.mubr.bf16.mxu0 %v1819
    %2735 = vmatmul.mubr.bf16.gmra.mrb[0].mxu0 %v1273
    %v2736 = vpop.f32.mrb[0].mxu0
    %v2737 = vadd.f32 %v303, %v2736
    %v2738 = vpop.f32.mrb[0].mxu0
    %v2739 = vpop.f32.mrb[0].mxu0
    %v2740 = vadd.f32 %v303, %v2739
    %v2741 = vpop.f32.mrb[0].mxu0
    %2742 = vmatprep.mubr.bf16.mxu0 %v1822
    %2743 = vmatmul.mubr.bf16.gmra.mrb[0].mxu0 %v1275
    %v2744 = vpop.f32.mrb[0].mxu0
    %v2745 = vadd.f32 %v303, %v2744
    %v2746 = vpop.f32.mrb[0].mxu0
    %v2747 = vpop.f32.mrb[0].mxu0
    %v2748 = vadd.f32 %v303, %v2747
    %v2749 = vpop.f32.mrb[0].mxu0
    %2750 = vmatprep.mubr.bf16.mxu0 %v1825
    %2751 = vmatmul.mubr.bf16.gmra.mrb[0].mxu0 %v1277
    %v2752 = vpop.f32.mrb[0].mxu0
    %v2753 = vadd.f32 %v303, %v2752
    %v2754 = vpop.f32.mrb[0].mxu0
    %v2755 = vpop.f32.mrb[0].mxu0
    %v2756 = vadd.f32 %v303, %v2755
    %v2757 = vpop.f32.mrb[0].mxu0
    %2758 = vmatprep.mubr.bf16.mxu0 %v1828
    %2759 = vmatmul.mubr.bf16.gmra.mrb[0].mxu0 %v1279
    %v2760 = vpop.f32.mrb[0].mxu0
    %v2761 = vadd.f32 %v303, %v2760
    %v2762 = vpop.f32.mrb[0].mxu0
    %v2763 = vpop.f32.mrb[0].mxu0
    %v2764 = vadd.f32 %v303, %v2763
    %v2765 = vpop.f32.mrb[0].mxu0
    %2766 = vmatprep.mubr.bf16.mxu0 %v1831
    %2767 = vmatmul.mubr.bf16.gmra.mrb[0].mxu0 %v1281
    %v2768 = vpop.f32.mrb[0].mxu0
    %v2769 = vadd.f32 %v303, %v2768
    %v2770 = vpop.f32.mrb[0].mxu0
    %v2771 = vpop.f32.mrb[0].mxu0
    %v2772 = vadd.f32 %v303, %v2771
    %v2773 = vpop.f32.mrb[0].mxu0
    %2774 = vmatprep.mubr.bf16.mxu0 %v1834
    %2775 = vmatmul.mubr.bf16.gmra.mrb[0].mxu0 %v1283
    %v2776 = vpop.f32.mrb[0].mxu0
    %v2777 = vadd.f32 %v303, %v2776
    %v2778 = vpop.f32.mrb[0].mxu0
    %v2779 = vpop.f32.mrb[0].mxu0
    %v2780 = vadd.f32 %v303, %v2779
    %v2781 = vpop.f32.mrb[0].mxu0
    %2782 = vmatprep.mubr.bf16.mxu0 %v1837
    %2783 = vmatmul.mubr.bf16.gmra.mrb[0].mxu0 %v1285
    %v2784 = vpop.f32.mrb[0].mxu0
    %v2785 = vadd.f32 %v303, %v2784
    %v2786 = vpop.f32.mrb[0].mxu0
    %v2787 = vpop.f32.mrb[0].mxu0
    %v2788 = vadd.f32 %v303, %v2787
    %v2789 = vpop.f32.mrb[0].mxu0
    %2790 = vmatprep.mubr.bf16.mxu0 %v1840
    %2791 = vmatmul.mubr.bf16.gmra.mrb[0].mxu0 %v1287
    %v2792 = vpop.f32.mrb[0].mxu0
    %v2793 = vadd.f32 %v303, %v2792
    %v2794 = vpop.f32.mrb[0].mxu0
    %v2795 = vpop.f32.mrb[0].mxu0
    %v2796 = vadd.f32 %v303, %v2795
    %v2797 = vpop.f32.mrb[0].mxu0
    %2798 = vmatprep.mubr.bf16.mxu0 %v1843
    %2799 = vmatmul.mubr.bf16.gmra.mrb[0].mxu0 %v1289
    %v2800 = vpop.f32.mrb[0].mxu0
    %v2801 = vadd.f32 %v303, %v2800
    %v2802 = vpop.f32.mrb[0].mxu0
    %v2803 = vpop.f32.mrb[0].mxu0
    %v2804 = vadd.f32 %v303, %v2803
    %v2805 = vpop.f32.mrb[0].mxu0
    %2806 = vmatprep.mubr.bf16.mxu0 %v1846
    %2807 = vmatmul.mubr.bf16.gmra.mrb[0].mxu0 %v1291
    %v2808 = vpop.f32.mrb[0].mxu0
    %v2809 = vadd.f32 %v303, %v2808
    %v2810 = vpop.f32.mrb[0].mxu0
    %v2811 = vpop.f32.mrb[0].mxu0
    %v2812 = vadd.f32 %v303, %v2811
    %v2813 = vpop.f32.mrb[0].mxu0
    %2814 = vmatprep.mubr.bf16.mxu0 %v1849
    %2815 = vmatmul.mubr.bf16.gmra.mrb[0].mxu0 %v1293
    %v2816 = vpop.f32.mrb[0].mxu0
    %v2817 = vadd.f32 %v303, %v2816
    %v2818 = vpop.f32.mrb[0].mxu0
    %v2819 = vpop.f32.mrb[0].mxu0
    %v2820 = vadd.f32 %v303, %v2819
    %v2821 = vpop.f32.mrb[0].mxu0
    %2822 = vmatprep.mubr.bf16.mxu0 %v1852
    %2823 = vmatmul.mubr.bf16.gmra.mrb[0].mxu0 %v1295
    %v2824 = vpop.f32.mrb[0].mxu0
    %v2825 = vadd.f32 %v303, %v2824
    %v2826 = vpop.f32.mrb[0].mxu0
    %v2827 = vpop.f32.mrb[0].mxu0
    %v2828 = vadd.f32 %v303, %v2827
    %v2829 = vpop.f32.mrb[0].mxu0
    %2830 = vmatprep.mubr.bf16.mxu0 %v1855
    %2831 = vmatmul.mubr.bf16.gmra.mrb[0].mxu0 %v1297
    %v2832 = vpop.f32.mrb[0].mxu0
    %v2833 = vadd.f32 %v303, %v2832
    %v2834 = vpop.f32.mrb[0].mxu0
    %v2835 = vpop.f32.mrb[0].mxu0
    %v2836 = vadd.f32 %v303, %v2835
    %v2837 = vpop.f32.mrb[0].mxu0
    %2838 = vmatprep.mubr.bf16.mxu0 %v1858
    %2839 = vmatmul.mubr.bf16.gmra.mrb[0].mxu0 %v1299
    %v2840 = vpop.f32.mrb[0].mxu0
    %v2841 = vadd.f32 %v303, %v2840
    %v2842 = vpop.f32.mrb[0].mxu0
    %v2843 = vpop.f32.mrb[0].mxu0
    %v2844 = vadd.f32 %v303, %v2843
    %v2845 = vpop.f32.mrb[0].mxu0
    %2846 = vmatprep.mubr.bf16.mxu0 %v1861
    %2847 = vmatmul.mubr.bf16.gmra.mrb[0].mxu0 %v1301
    %v2848 = vpop.f32.mrb[0].mxu0
    %v2849 = vadd.f32 %v303, %v2848
    %v2850 = vpop.f32.mrb[0].mxu0
    %v2851 = vpop.f32.mrb[0].mxu0
    %v2852 = vadd.f32 %v303, %v2851
    %v2853 = vpop.f32.mrb[0].mxu0
    %2854 = vmatprep.mubr.bf16.mxu0 %v1864
    %2855 = vmatmul.mubr.bf16.gmra.mrb[0].mxu0 %v1303
    %v2856 = vpop.f32.mrb[0].mxu0
    %v2857 = vadd.f32 %v303, %v2856
    %v2858 = vpop.f32.mrb[0].mxu0
    %v2859 = vpop.f32.mrb[0].mxu0
    %v2860 = vadd.f32 %v303, %v2859
    %v2861 = vpop.f32.mrb[0].mxu0
    %2862 = vmatprep.mubr.bf16.mxu0 %v1867
    %2863 = vmatmul.mubr.bf16.gmra.mrb[0].mxu0 %v1305
    %v2864 = vpop.f32.mrb[0].mxu0
    %v2865 = vadd.f32 %v303, %v2864
    %v2866 = vpop.f32.mrb[0].mxu0
    %v2867 = vpop.f32.mrb[0].mxu0
    %v2868 = vadd.f32 %v303, %v2867
    %v2869 = vpop.f32.mrb[0].mxu0
    %2870 = vmatprep.mubr.bf16.mxu0 %v1870
    %2871 = vmatmul.mubr.bf16.gmra.mrb[0].mxu0 %v1307
    %v2872 = vpop.f32.mrb[0].mxu0
    %v2873 = vadd.f32 %v303, %v2872
    %v2874 = vpop.f32.mrb[0].mxu0
    %v2875 = vpop.f32.mrb[0].mxu0
    %v2876 = vadd.f32 %v303, %v2875
    %v2877 = vpop.f32.mrb[0].mxu0
    %2878 = vmatprep.mubr.bf16.mxu0 %v1873
    %2879 = vmatmul.mubr.bf16.gmra.mrb[0].mxu0 %v1309
    %v2880 = vpop.f32.mrb[0].mxu0
    %v2881 = vadd.f32 %v303, %v2880
    %v2882 = vpop.f32.mrb[0].mxu0
    %v2883 = vpop.f32.mrb[0].mxu0
    %v2884 = vadd.f32 %v303, %v2883
    %v2885 = vpop.f32.mrb[0].mxu0
    %2886 = vmatprep.mubr.bf16.mxu0 %v1876
    %2887 = vmatmul.mubr.bf16.gmra.mrb[0].mxu0 %v1311
    %v2888 = vpop.f32.mrb[0].mxu0
    %v2889 = vadd.f32 %v303, %v2888
    %v2890 = vpop.f32.mrb[0].mxu0
    %v2891 = vpop.f32.mrb[0].mxu0
    %v2892 = vadd.f32 %v303, %v2891
    %v2893 = vpop.f32.mrb[0].mxu0
    %2894 = vmatprep.mubr.bf16.mxu0 %v1879
    %2895 = vmatmul.mubr.bf16.gmra.mrb[0].mxu0 %v1313
    %v2896 = vpop.f32.mrb[0].mxu0
    %v2897 = vadd.f32 %v303, %v2896
    %v2898 = vpop.f32.mrb[0].mxu0
    %v2899 = vpop.f32.mrb[0].mxu0
    %v2900 = vadd.f32 %v303, %v2899
    %v2901 = vpop.f32.mrb[0].mxu0
    %2902 = vmatprep.mubr.bf16.mxu0 %v1882
    %2903 = vmatmul.mubr.bf16.gmra.mrb[0].mxu0 %v1315
    %v2904 = vpop.f32.mrb[0].mxu0
    %v2905 = vadd.f32 %v303, %v2904
    %v2906 = vpop.f32.mrb[0].mxu0
    %v2907 = vpop.f32.mrb[0].mxu0
    %v2908 = vadd.f32 %v303, %v2907
    %v2909 = vpop.f32.mrb[0].mxu0
    %2910 = vmatprep.mubr.bf16.mxu0 %v1885
    %2911 = vmatmul.mubr.bf16.gmra.mrb[0].mxu0 %v1317
    %v2912 = vpop.f32.mrb[0].mxu0
    %v2913 = vadd.f32 %v303, %v2912
    %v2914 = vpop.f32.mrb[0].mxu0
    %v2915 = vpop.f32.mrb[0].mxu0
    %v2916 = vadd.f32 %v303, %v2915
    %v2917 = vpop.f32.mrb[0].mxu0
    %2918 = vmatprep.mubr.bf16.mxu0 %v1888
    %2919 = vmatmul.mubr.bf16.gmra.mrb[0].mxu0 %v1319
    %v2920 = vpop.f32.mrb[0].mxu0
    %v2921 = vadd.f32 %v303, %v2920
    %v2922 = vpop.f32.mrb[0].mxu0
    %v2923 = vpop.f32.mrb[0].mxu0
    %v2924 = vadd.f32 %v303, %v2923
    %v2925 = vpop.f32.mrb[0].mxu0
    %2926 = vmatprep.mubr.bf16.mxu0 %v1891
    %2927 = vmatmul.mubr.bf16.gmra.mrb[0].mxu0 %v1321
    %v2928 = vpop.f32.mrb[0].mxu0
    %v2929 = vadd.f32 %v303, %v2928
    %v2930 = vpop.f32.mrb[0].mxu0
    %v2931 = vpop.f32.mrb[0].mxu0
    %v2932 = vadd.f32 %v303, %v2931
    %v2933 = vpop.f32.mrb[0].mxu0
    %2934 = vmatprep.mubr.bf16.mxu0 %v1894
    %2935 = vmatmul.mubr.bf16.gmra.mrb[0].mxu0 %v1323
    %v2936 = vpop.f32.mrb[0].mxu0
    %v2937 = vadd.f32 %v303, %v2936
    %v2938 = vpop.f32.mrb[0].mxu0
    %v2939 = vpop.f32.mrb[0].mxu0
    %v2940 = vadd.f32 %v303, %v2939
    %v2941 = vpop.f32.mrb[0].mxu0
    %2942 = vmatprep.mubr.bf16.mxu0 %v1897
    %2943 = vmatmul.mubr.bf16.gmra.mrb[0].mxu0 %v1325
    %v2944 = vpop.f32.mrb[0].mxu0
    %v2945 = vadd.f32 %v303, %v2944
    %v2946 = vpop.f32.mrb[0].mxu0
    %v2947 = vpop.f32.mrb[0].mxu0
    %v2948 = vadd.f32 %v303, %v2947
    %v2949 = vpop.f32.mrb[0].mxu0
    %2950 = vmatprep.mubr.bf16.mxu0 %v1900
    %2951 = vmatmul.mubr.bf16.gmra.mrb[0].mxu0 %v1327
    %v2952 = vpop.f32.mrb[0].mxu0
    %v2953 = vadd.f32 %v303, %v2952
    %v2954 = vpop.f32.mrb[0].mxu0
    %v2955 = vpop.f32.mrb[0].mxu0
    %v2956 = vadd.f32 %v303, %v2955
    %v2957 = vpop.f32.mrb[0].mxu0
    %2958 = vdwg.mxu0
    %v2959 = vld [vmem:[%s3] sm:$0x1]
    %v2960 = vld [vmem:[%s4] sm:$0x1]
    %vm2961 = vcmask 523264
    %v2962 = vsel %vm2961, %v1937, 0.0
    %v2963 = vsel %vm2961, %v1940, 0.0
    %v2964 = vadd.f32 %v2962, %v2963
    %v2965 = vsel %vm2961, %v1945, 0.0
    %v2966 = vadd.f32 %v2964, %v2965
    %v2967 = vsel %vm2961, %v1948, 0.0
    %v2968 = vadd.f32 %v2966, %v2967
    %v2969 = vsel %vm2961, %v1953, 0.0
    %v2970 = vadd.f32 %v2968, %v2969
    %v2971 = vsel %vm2961, %v1956, 0.0
    %v2972 = vadd.f32 %v2970, %v2971
    %v2973 = vsel %vm2961, %v1961, 0.0
    %v2974 = vadd.f32 %v2972, %v2973
    %v2975 = vsel %vm2961, %v1964, 0.0
    %v2976 = vadd.f32 %v2974, %v2975
    %v2977 = vsel %vm2961, %v1969, 0.0
    %v2978 = vadd.f32 %v2976, %v2977
    %v2979 = vsel %vm2961, %v1972, 0.0
    %v2980 = vadd.f32 %v2978, %v2979
    %v2981 = vsel %vm2961, %v1977, 0.0
    %v2982 = vadd.f32 %v2980, %v2981
    %v2983 = vsel %vm2961, %v1980, 0.0
    %v2984 = vadd.f32 %v2982, %v2983
    %v2985 = vsel %vm2961, %v1985, 0.0
    %v2986 = vadd.f32 %v2984, %v2985
    %v2987 = vsel %vm2961, %v1988, 0.0
    %v2988 = vadd.f32 %v2986, %v2987
    %v2989 = vsel %vm2961, %v1993, 0.0
    %v2990 = vadd.f32 %v2988, %v2989
    %v2991 = vsel %vm2961, %v1996, 0.0
    %v2992 = vadd.f32 %v2990, %v2991
    %v2993 = vsel %vm2961, %v2001, 0.0
    %v2994 = vadd.f32 %v2992, %v2993
    %v2995 = vsel %vm2961, %v2004, 0.0
    %v2996 = vadd.f32 %v2994, %v2995
    %v2997 = vsel %vm2961, %v2009, 0.0
    %v2998 = vadd.f32 %v2996, %v2997
    %v2999 = vsel %vm2961, %v2012, 0.0
    %v3000 = vadd.f32 %v2998, %v2999
    %v3001 = vsel %vm2961, %v2017, 0.0
    %v3002 = vadd.f32 %v3000, %v3001
    %v3003 = vsel %vm2961, %v2020, 0.0
    %v3004 = vadd.f32 %v3002, %v3003
    %v3005 = vsel %vm2961, %v2025, 0.0
    %v3006 = vadd.f32 %v3004, %v3005
    %v3007 = vsel %vm2961, %v2028, 0.0
    %v3008 = vadd.f32 %v3006, %v3007
    %v3009 = vsel %vm2961, %v2033, 0.0
    %v3010 = vadd.f32 %v3008, %v3009
    %v3011 = vsel %vm2961, %v2036, 0.0
    %v3012 = vadd.f32 %v3010, %v3011
    %v3013 = vsel %vm2961, %v2041, 0.0
    %v3014 = vadd.f32 %v3012, %v3013
    %v3015 = vsel %vm2961, %v2044, 0.0
    %v3016 = vadd.f32 %v3014, %v3015
    %v3017 = vsel %vm2961, %v2049, 0.0
    %v3018 = vadd.f32 %v3016, %v3017
    %v3019 = vsel %vm2961, %v2052, 0.0
    %v3020 = vadd.f32 %v3018, %v3019
    %v3021 = vsel %vm2961, %v2057, 0.0
    %v3022 = vadd.f32 %v3020, %v3021
    %v3023 = vsel %vm2961, %v2060, 0.0
    %v3024 = vadd.f32 %v3022, %v3023
    %v3025 = vsel %vm2961, %v2065, 0.0
    %v3026 = vadd.f32 %v3024, %v3025
    %v3027 = vsel %vm2961, %v2068, 0.0
    %v3028 = vadd.f32 %v3026, %v3027
    %v3029 = vsel %vm2961, %v2073, 0.0
    %v3030 = vadd.f32 %v3028, %v3029
    %v3031 = vsel %vm2961, %v2076, 0.0
    %v3032 = vadd.f32 %v3030, %v3031
    %v3033 = vsel %vm2961, %v2081, 0.0
    %v3034 = vadd.f32 %v3032, %v3033
    %v3035 = vsel %vm2961, %v2084, 0.0
    %v3036 = vadd.f32 %v3034, %v3035
    %v3037 = vsel %vm2961, %v2089, 0.0
    %v3038 = vadd.f32 %v3036, %v3037
    %v3039 = vsel %vm2961, %v2092, 0.0
    %v3040 = vadd.f32 %v3038, %v3039
    %v3041 = vsel %vm2961, %v2097, 0.0
    %v3042 = vadd.f32 %v3040, %v3041
    %v3043 = vsel %vm2961, %v2100, 0.0
    %v3044 = vadd.f32 %v3042, %v3043
    %v3045 = vsel %vm2961, %v2105, 0.0
    %v3046 = vadd.f32 %v3044, %v3045
    %v3047 = vsel %vm2961, %v2108, 0.0
    %v3048 = vadd.f32 %v3046, %v3047
    %v3049 = vsel %vm2961, %v2113, 0.0
    %v3050 = vadd.f32 %v3048, %v3049
    %v3051 = vsel %vm2961, %v2116, 0.0
    %v3052 = vadd.f32 %v3050, %v3051
    %v3053 = vsel %vm2961, %v2121, 0.0
    %v3054 = vadd.f32 %v3052, %v3053
    %v3055 = vsel %vm2961, %v2124, 0.0
    %v3056 = vadd.f32 %v3054, %v3055
    %v3057 = vsel %vm2961, %v2129, 0.0
    %v3058 = vadd.f32 %v3056, %v3057
    %v3059 = vsel %vm2961, %v2132, 0.0
    %v3060 = vadd.f32 %v3058, %v3059
    %v3061 = vsel %vm2961, %v2137, 0.0
    %v3062 = vadd.f32 %v3060, %v3061
    %v3063 = vsel %vm2961, %v2140, 0.0
    %v3064 = vadd.f32 %v3062, %v3063
    %v3065 = vsel %vm2961, %v2145, 0.0
    %v3066 = vadd.f32 %v3064, %v3065
    %v3067 = vsel %vm2961, %v2148, 0.0
    %v3068 = vadd.f32 %v3066, %v3067
    %v3069 = vsel %vm2961, %v2153, 0.0
    %v3070 = vadd.f32 %v3068, %v3069
    %v3071 = vsel %vm2961, %v2156, 0.0
    %v3072 = vadd.f32 %v3070, %v3071
    %v3073 = vsel %vm2961, %v2161, 0.0
    %v3074 = vadd.f32 %v3072, %v3073
    %v3075 = vsel %vm2961, %v2164, 0.0
    %v3076 = vadd.f32 %v3074, %v3075
    %v3077 = vsel %vm2961, %v2169, 0.0
    %v3078 = vadd.f32 %v3076, %v3077
    %v3079 = vsel %vm2961, %v2172, 0.0
    %v3080 = vadd.f32 %v3078, %v3079
    %v3081 = vsel %vm2961, %v2177, 0.0
    %v3082 = vadd.f32 %v3080, %v3081
    %v3083 = vsel %vm2961, %v2180, 0.0
    %v3084 = vadd.f32 %v3082, %v3083
    %v3085 = vsel %vm2961, %v2185, 0.0
    %v3086 = vadd.f32 %v3084, %v3085
    %v3087 = vsel %vm2961, %v2188, 0.0
    %v3088 = vadd.f32 %v3086, %v3087
    %v3089 = vsel %vm2961, %v2193, 0.0
    %v3090 = vadd.f32 %v3088, %v3089
    %v3091 = vsel %vm2961, %v2196, 0.0
    %v3092 = vadd.f32 %v3090, %v3091
    %v3093 = vsel %vm2961, %v2201, 0.0
    %v3094 = vadd.f32 %v3092, %v3093
    %v3095 = vsel %vm2961, %v2204, 0.0
    %v3096 = vadd.f32 %v3094, %v3095
    %v3097 = vsel %vm2961, %v2209, 0.0
    %v3098 = vadd.f32 %v3096, %v3097
    %v3099 = vsel %vm2961, %v2212, 0.0
    %v3100 = vadd.f32 %v3098, %v3099
    %v3101 = vsel %vm2961, %v2217, 0.0
    %v3102 = vadd.f32 %v3100, %v3101
    %v3103 = vsel %vm2961, %v2220, 0.0
    %v3104 = vadd.f32 %v3102, %v3103
    %v3105 = vsel %vm2961, %v2225, 0.0
    %v3106 = vadd.f32 %v3104, %v3105
    %v3107 = vsel %vm2961, %v2228, 0.0
    %v3108 = vadd.f32 %v3106, %v3107
    %v3109 = vsel %vm2961, %v2233, 0.0
    %v3110 = vadd.f32 %v3108, %v3109
    %v3111 = vsel %vm2961, %v2236, 0.0
    %v3112 = vadd.f32 %v3110, %v3111
    %v3113 = vsel %vm2961, %v2241, 0.0
    %v3114 = vadd.f32 %v3112, %v3113
    %v3115 = vsel %vm2961, %v2244, 0.0
    %v3116 = vadd.f32 %v3114, %v3115
    %v3117 = vsel %vm2961, %v2249, 0.0
    %v3118 = vadd.f32 %v3116, %v3117
    %v3119 = vsel %vm2961, %v2252, 0.0
    %v3120 = vadd.f32 %v3118, %v3119
    %v3121 = vsel %vm2961, %v2257, 0.0
    %v3122 = vadd.f32 %v3120, %v3121
    %v3123 = vsel %vm2961, %v2260, 0.0
    %v3124 = vadd.f32 %v3122, %v3123
    %v3125 = vsel %vm2961, %v2265, 0.0
    %v3126 = vadd.f32 %v3124, %v3125
    %v3127 = vsel %vm2961, %v2268, 0.0
    %v3128 = vadd.f32 %v3126, %v3127
    %v3129 = vsel %vm2961, %v2273, 0.0
    %v3130 = vadd.f32 %v3128, %v3129
    %v3131 = vsel %vm2961, %v2276, 0.0
    %v3132 = vadd.f32 %v3130, %v3131
    %v3133 = vsel %vm2961, %v2281, 0.0
    %v3134 = vadd.f32 %v3132, %v3133
    %v3135 = vsel %vm2961, %v2284, 0.0
    %v3136 = vadd.f32 %v3134, %v3135
    %v3137 = vsel %vm2961, %v2289, 0.0
    %v3138 = vadd.f32 %v3136, %v3137
    %v3139 = vsel %vm2961, %v2292, 0.0
    %v3140 = vadd.f32 %v3138, %v3139
    %v3141 = vsel %vm2961, %v2297, 0.0
    %v3142 = vadd.f32 %v3140, %v3141
    %v3143 = vsel %vm2961, %v2300, 0.0
    %v3144 = vadd.f32 %v3142, %v3143
    %v3145 = vsel %vm2961, %v2305, 0.0
    %v3146 = vadd.f32 %v3144, %v3145
    %v3147 = vsel %vm2961, %v2308, 0.0
    %v3148 = vadd.f32 %v3146, %v3147
    %v3149 = vsel %vm2961, %v2313, 0.0
    %v3150 = vadd.f32 %v3148, %v3149
    %v3151 = vsel %vm2961, %v2316, 0.0
    %v3152 = vadd.f32 %v3150, %v3151
    %v3153 = vsel %vm2961, %v2321, 0.0
    %v3154 = vadd.f32 %v3152, %v3153
    %v3155 = vsel %vm2961, %v2324, 0.0
    %v3156 = vadd.f32 %v3154, %v3155
    %v3157 = vsel %vm2961, %v2329, 0.0
    %v3158 = vadd.f32 %v3156, %v3157
    %v3159 = vsel %vm2961, %v2332, 0.0
    %v3160 = vadd.f32 %v3158, %v3159
    %v3161 = vsel %vm2961, %v2337, 0.0
    %v3162 = vadd.f32 %v3160, %v3161
    %v3163 = vsel %vm2961, %v2340, 0.0
    %v3164 = vadd.f32 %v3162, %v3163
    %v3165 = vsel %vm2961, %v2345, 0.0
    %v3166 = vadd.f32 %v3164, %v3165
    %v3167 = vsel %vm2961, %v2348, 0.0
    %v3168 = vadd.f32 %v3166, %v3167
    %v3169 = vsel %vm2961, %v2353, 0.0
    %v3170 = vadd.f32 %v3168, %v3169
    %v3171 = vsel %vm2961, %v2356, 0.0
    %v3172 = vadd.f32 %v3170, %v3171
    %v3173 = vsel %vm2961, %v2361, 0.0
    %v3174 = vadd.f32 %v3172, %v3173
    %v3175 = vsel %vm2961, %v2364, 0.0
    %v3176 = vadd.f32 %v3174, %v3175
    %v3177 = vsel %vm2961, %v2369, 0.0
    %v3178 = vadd.f32 %v3176, %v3177
    %v3179 = vsel %vm2961, %v2372, 0.0
    %v3180 = vadd.f32 %v3178, %v3179
    %v3181 = vsel %vm2961, %v2377, 0.0
    %v3182 = vadd.f32 %v3180, %v3181
    %v3183 = vsel %vm2961, %v2380, 0.0
    %v3184 = vadd.f32 %v3182, %v3183
    %v3185 = vsel %vm2961, %v2385, 0.0
    %v3186 = vadd.f32 %v3184, %v3185
    %v3187 = vsel %vm2961, %v2388, 0.0
    %v3188 = vadd.f32 %v3186, %v3187
    %v3189 = vsel %vm2961, %v2393, 0.0
    %v3190 = vadd.f32 %v3188, %v3189
    %v3191 = vsel %vm2961, %v2396, 0.0
    %v3192 = vadd.f32 %v3190, %v3191
    %v3193 = vsel %vm2961, %v2401, 0.0
    %v3194 = vadd.f32 %v3192, %v3193
    %v3195 = vsel %vm2961, %v2404, 0.0
    %v3196 = vadd.f32 %v3194, %v3195
    %v3197 = vsel %vm2961, %v2409, 0.0
    %v3198 = vadd.f32 %v3196, %v3197
    %v3199 = vsel %vm2961, %v2412, 0.0
    %v3200 = vadd.f32 %v3198, %v3199
    %v3201 = vsel %vm2961, %v2417, 0.0
    %v3202 = vadd.f32 %v3200, %v3201
    %v3203 = vsel %vm2961, %v2420, 0.0
    %v3204 = vadd.f32 %v3202, %v3203
    %v3205 = vsel %vm2961, %v2425, 0.0
    %v3206 = vadd.f32 %v3204, %v3205
    %v3207 = vsel %vm2961, %v2428, 0.0
    %v3208 = vadd.f32 %v3206, %v3207
    %v3209 = vsel %vm2961, %v2433, 0.0
    %v3210 = vadd.f32 %v3208, %v3209
    %v3211 = vsel %vm2961, %v2436, 0.0
    %v3212 = vadd.f32 %v3210, %v3211
    %v3213 = vsel %vm2961, %v2441, 0.0
    %v3214 = vadd.f32 %v3212, %v3213
    %v3215 = vsel %vm2961, %v2444, 0.0
    %v3216 = vadd.f32 %v3214, %v3215
    %v3217 = vsel %vm2961, %v2449, 0.0
    %v3218 = vadd.f32 %v3216, %v3217
    %v3219 = vsel %vm2961, %v2452, 0.0
    %v3220 = vadd.f32 %v3218, %v3219
    %v3221 = vsel %vm2961, %v2457, 0.0
    %v3222 = vadd.f32 %v3220, %v3221
    %v3223 = vsel %vm2961, %v2460, 0.0
    %v3224 = vadd.f32 %v3222, %v3223
    %v3225 = vsel %vm2961, %v2465, 0.0
    %v3226 = vadd.f32 %v3224, %v3225
    %v3227 = vsel %vm2961, %v2468, 0.0
    %v3228 = vadd.f32 %v3226, %v3227
    %v3229 = vsel %vm2961, %v2473, 0.0
    %v3230 = vadd.f32 %v3228, %v3229
    %v3231 = vsel %vm2961, %v2476, 0.0
    %v3232 = vadd.f32 %v3230, %v3231
    %v3233 = vsel %vm2961, %v2481, 0.0
    %v3234 = vadd.f32 %v3232, %v3233
    %v3235 = vsel %vm2961, %v2484, 0.0
    %v3236 = vadd.f32 %v3234, %v3235
    %v3237 = vsel %vm2961, %v2489, 0.0
    %v3238 = vadd.f32 %v3236, %v3237
    %v3239 = vsel %vm2961, %v2492, 0.0
    %v3240 = vadd.f32 %v3238, %v3239
    %v3241 = vsel %vm2961, %v2497, 0.0
    %v3242 = vadd.f32 %v3240, %v3241
    %v3243 = vsel %vm2961, %v2500, 0.0
    %v3244 = vadd.f32 %v3242, %v3243
    %v3245 = vsel %vm2961, %v2505, 0.0
    %v3246 = vadd.f32 %v3244, %v3245
    %v3247 = vsel %vm2961, %v2508, 0.0
    %v3248 = vadd.f32 %v3246, %v3247
    %v3249 = vsel %vm2961, %v2513, 0.0
    %v3250 = vadd.f32 %v3248, %v3249
    %v3251 = vsel %vm2961, %v2516, 0.0
    %v3252 = vadd.f32 %v3250, %v3251
    %v3253 = vsel %vm2961, %v2521, 0.0
    %v3254 = vadd.f32 %v3252, %v3253
    %v3255 = vsel %vm2961, %v2524, 0.0
    %v3256 = vadd.f32 %v3254, %v3255
    %v3257 = vsel %vm2961, %v2529, 0.0
    %v3258 = vadd.f32 %v3256, %v3257
    %v3259 = vsel %vm2961, %v2532, 0.0
    %v3260 = vadd.f32 %v3258, %v3259
    %v3261 = vsel %vm2961, %v2537, 0.0
    %v3262 = vadd.f32 %v3260, %v3261
    %v3263 = vsel %vm2961, %v2540, 0.0
    %v3264 = vadd.f32 %v3262, %v3263
    %v3265 = vsel %vm2961, %v2545, 0.0
    %v3266 = vadd.f32 %v3264, %v3265
    %v3267 = vsel %vm2961, %v2548, 0.0
    %v3268 = vadd.f32 %v3266, %v3267
    %v3269 = vsel %vm2961, %v2553, 0.0
    %v3270 = vadd.f32 %v3268, %v3269
    %v3271 = vsel %vm2961, %v2556, 0.0
    %v3272 = vadd.f32 %v3270, %v3271
    %v3273 = vsel %vm2961, %v2561, 0.0
    %v3274 = vadd.f32 %v3272, %v3273
    %v3275 = vsel %vm2961, %v2564, 0.0
    %v3276 = vadd.f32 %v3274, %v3275
    %v3277 = vsel %vm2961, %v2569, 0.0
    %v3278 = vadd.f32 %v3276, %v3277
    %v3279 = vsel %vm2961, %v2572, 0.0
    %v3280 = vadd.f32 %v3278, %v3279
    %v3281 = vsel %vm2961, %v2577, 0.0
    %v3282 = vadd.f32 %v3280, %v3281
    %v3283 = vsel %vm2961, %v2580, 0.0
    %v3284 = vadd.f32 %v3282, %v3283
    %v3285 = vsel %vm2961, %v2585, 0.0
    %v3286 = vadd.f32 %v3284, %v3285
    %v3287 = vsel %vm2961, %v2588, 0.0
    %v3288 = vadd.f32 %v3286, %v3287
    %v3289 = vsel %vm2961, %v2593, 0.0
    %v3290 = vadd.f32 %v3288, %v3289
    %v3291 = vsel %vm2961, %v2596, 0.0
    %v3292 = vadd.f32 %v3290, %v3291
    %v3293 = vsel %vm2961, %v2601, 0.0
    %v3294 = vadd.f32 %v3292, %v3293
    %v3295 = vsel %vm2961, %v2604, 0.0
    %v3296 = vadd.f32 %v3294, %v3295
    %v3297 = vsel %vm2961, %v2609, 0.0
    %v3298 = vadd.f32 %v3296, %v3297
    %v3299 = vsel %vm2961, %v2612, 0.0
    %v3300 = vadd.f32 %v3298, %v3299
    %v3301 = vsel %vm2961, %v2617, 0.0
    %v3302 = vadd.f32 %v3300, %v3301
    %v3303 = vsel %vm2961, %v2620, 0.0
    %v3304 = vadd.f32 %v3302, %v3303
    %v3305 = vsel %vm2961, %v2625, 0.0
    %v3306 = vadd.f32 %v3304, %v3305
    %v3307 = vsel %vm2961, %v2628, 0.0
    %v3308 = vadd.f32 %v3306, %v3307
    %v3309 = vsel %vm2961, %v2633, 0.0
    %v3310 = vadd.f32 %v3308, %v3309
    %v3311 = vsel %vm2961, %v2636, 0.0
    %v3312 = vadd.f32 %v3310, %v3311
    %v3313 = vsel %vm2961, %v2641, 0.0
    %v3314 = vadd.f32 %v3312, %v3313
    %v3315 = vsel %vm2961, %v2644, 0.0
    %v3316 = vadd.f32 %v3314, %v3315
    %v3317 = vsel %vm2961, %v2649, 0.0
    %v3318 = vadd.f32 %v3316, %v3317
    %v3319 = vsel %vm2961, %v2652, 0.0
    %v3320 = vadd.f32 %v3318, %v3319
    %v3321 = vsel %vm2961, %v2657, 0.0
    %v3322 = vadd.f32 %v3320, %v3321
    %v3323 = vsel %vm2961, %v2660, 0.0
    %v3324 = vadd.f32 %v3322, %v3323
    %v3325 = vsel %vm2961, %v2665, 0.0
    %v3326 = vadd.f32 %v3324, %v3325
    %v3327 = vsel %vm2961, %v2668, 0.0
    %v3328 = vadd.f32 %v3326, %v3327
    %v3329 = vsel %vm2961, %v2673, 0.0
    %v3330 = vadd.f32 %v3328, %v3329
    %v3331 = vsel %vm2961, %v2676, 0.0
    %v3332 = vadd.f32 %v3330, %v3331
    %v3333 = vsel %vm2961, %v2681, 0.0
    %v3334 = vadd.f32 %v3332, %v3333
    %v3335 = vsel %vm2961, %v2684, 0.0
    %v3336 = vadd.f32 %v3334, %v3335
    %v3337 = vsel %vm2961, %v2689, 0.0
    %v3338 = vadd.f32 %v3336, %v3337
    %v3339 = vsel %vm2961, %v2692, 0.0
    %v3340 = vadd.f32 %v3338, %v3339
    %v3341 = vsel %vm2961, %v2697, 0.0
    %v3342 = vadd.f32 %v3340, %v3341
    %v3343 = vsel %vm2961, %v2700, 0.0
    %v3344 = vadd.f32 %v3342, %v3343
    %v3345 = vsel %vm2961, %v2705, 0.0
    %v3346 = vadd.f32 %v3344, %v3345
    %v3347 = vsel %vm2961, %v2708, 0.0
    %v3348 = vadd.f32 %v3346, %v3347
    %v3349 = vsel %vm2961, %v2713, 0.0
    %v3350 = vadd.f32 %v3348, %v3349
    %v3351 = vsel %vm2961, %v2716, 0.0
    %v3352 = vadd.f32 %v3350, %v3351
    %v3353 = vsel %vm2961, %v2721, 0.0
    %v3354 = vadd.f32 %v3352, %v3353
    %v3355 = vsel %vm2961, %v2724, 0.0
    %v3356 = vadd.f32 %v3354, %v3355
    %v3357 = vsel %vm2961, %v2729, 0.0
    %v3358 = vadd.f32 %v3356, %v3357
    %v3359 = vsel %vm2961, %v2732, 0.0
    %v3360 = vadd.f32 %v3358, %v3359
    %v3361 = vsel %vm2961, %v2737, 0.0
    %v3362 = vadd.f32 %v3360, %v3361
    %v3363 = vsel %vm2961, %v2740, 0.0
    %v3364 = vadd.f32 %v3362, %v3363
    %v3365 = vsel %vm2961, %v2745, 0.0
    %v3366 = vadd.f32 %v3364, %v3365
    %v3367 = vsel %vm2961, %v2748, 0.0
    %v3368 = vadd.f32 %v3366, %v3367
    %v3369 = vsel %vm2961, %v2753, 0.0
    %v3370 = vadd.f32 %v3368, %v3369
    %v3371 = vsel %vm2961, %v2756, 0.0
    %v3372 = vadd.f32 %v3370, %v3371
    %v3373 = vsel %vm2961, %v2761, 0.0
    %v3374 = vadd.f32 %v3372, %v3373
    %v3375 = vsel %vm2961, %v2764, 0.0
    %v3376 = vadd.f32 %v3374, %v3375
    %v3377 = vsel %vm2961, %v2769, 0.0
    %v3378 = vadd.f32 %v3376, %v3377
    %v3379 = vsel %vm2961, %v2772, 0.0
    %v3380 = vadd.f32 %v3378, %v3379
    %v3381 = vsel %vm2961, %v2777, 0.0
    %v3382 = vadd.f32 %v3380, %v3381
    %v3383 = vsel %vm2961, %v2780, 0.0
    %v3384 = vadd.f32 %v3382, %v3383
    %v3385 = vsel %vm2961, %v2785, 0.0
    %v3386 = vadd.f32 %v3384, %v3385
    %v3387 = vsel %vm2961, %v2788, 0.0
    %v3388 = vadd.f32 %v3386, %v3387
    %v3389 = vsel %vm2961, %v2793, 0.0
    %v3390 = vadd.f32 %v3388, %v3389
    %v3391 = vsel %vm2961, %v2796, 0.0
    %v3392 = vadd.f32 %v3390, %v3391
    %v3393 = vsel %vm2961, %v2801, 0.0
    %v3394 = vadd.f32 %v3392, %v3393
    %v3395 = vsel %vm2961, %v2804, 0.0
    %v3396 = vadd.f32 %v3394, %v3395
    %v3397 = vsel %vm2961, %v2809, 0.0
    %v3398 = vadd.f32 %v3396, %v3397
    %v3399 = vsel %vm2961, %v2812, 0.0
    %v3400 = vadd.f32 %v3398, %v3399
    %v3401 = vsel %vm2961, %v2817, 0.0
    %v3402 = vadd.f32 %v3400, %v3401
    %v3403 = vsel %vm2961, %v2820, 0.0
    %v3404 = vadd.f32 %v3402, %v3403
    %v3405 = vsel %vm2961, %v2825, 0.0
    %v3406 = vadd.f32 %v3404, %v3405
    %v3407 = vsel %vm2961, %v2828, 0.0
    %v3408 = vadd.f32 %v3406, %v3407
    %v3409 = vsel %vm2961, %v2833, 0.0
    %v3410 = vadd.f32 %v3408, %v3409
    %v3411 = vsel %vm2961, %v2836, 0.0
    %v3412 = vadd.f32 %v3410, %v3411
    %v3413 = vsel %vm2961, %v2841, 0.0
    %v3414 = vadd.f32 %v3412, %v3413
    %v3415 = vsel %vm2961, %v2844, 0.0
    %v3416 = vadd.f32 %v3414, %v3415
    %v3417 = vsel %vm2961, %v2849, 0.0
    %v3418 = vadd.f32 %v3416, %v3417
    %v3419 = vsel %vm2961, %v2852, 0.0
    %v3420 = vadd.f32 %v3418, %v3419
    %v3421 = vsel %vm2961, %v2857, 0.0
    %v3422 = vadd.f32 %v3420, %v3421
    %v3423 = vsel %vm2961, %v2860, 0.0
    %v3424 = vadd.f32 %v3422, %v3423
    %v3425 = vsel %vm2961, %v2865, 0.0
    %v3426 = vadd.f32 %v3424, %v3425
    %v3427 = vsel %vm2961, %v2868, 0.0
    %v3428 = vadd.f32 %v3426, %v3427
    %v3429 = vsel %vm2961, %v2873, 0.0
    %v3430 = vadd.f32 %v3428, %v3429
    %v3431 = vsel %vm2961, %v2876, 0.0
    %v3432 = vadd.f32 %v3430, %v3431
    %v3433 = vsel %vm2961, %v2881, 0.0
    %v3434 = vadd.f32 %v3432, %v3433
    %v3435 = vsel %vm2961, %v2884, 0.0
    %v3436 = vadd.f32 %v3434, %v3435
    %v3437 = vsel %vm2961, %v2889, 0.0
    %v3438 = vadd.f32 %v3436, %v3437
    %v3439 = vsel %vm2961, %v2892, 0.0
    %v3440 = vadd.f32 %v3438, %v3439
    %v3441 = vsel %vm2961, %v2897, 0.0
    %v3442 = vadd.f32 %v3440, %v3441
    %v3443 = vsel %vm2961, %v2900, 0.0
    %v3444 = vadd.f32 %v3442, %v3443
    %v3445 = vsel %vm2961, %v2905, 0.0
    %v3446 = vadd.f32 %v3444, %v3445
    %v3447 = vsel %vm2961, %v2908, 0.0
    %v3448 = vadd.f32 %v3446, %v3447
    %v3449 = vsel %vm2961, %v2913, 0.0
    %v3450 = vadd.f32 %v3448, %v3449
    %v3451 = vsel %vm2961, %v2916, 0.0
    %v3452 = vadd.f32 %v3450, %v3451
    %v3453 = vsel %vm2961, %v2921, 0.0
    %v3454 = vadd.f32 %v3452, %v3453
    %v3455 = vsel %vm2961, %v2924, 0.0
    %v3456 = vadd.f32 %v3454, %v3455
    %v3457 = vsel %vm2961, %v2929, 0.0
    %v3458 = vadd.f32 %v3456, %v3457
    %v3459 = vsel %vm2961, %v2932, 0.0
    %v3460 = vadd.f32 %v3458, %v3459
    %v3461 = vsel %vm2961, %v2937, 0.0
    %v3462 = vadd.f32 %v3460, %v3461
    %v3463 = vsel %vm2961, %v2940, 0.0
    %v3464 = vadd.f32 %v3462, %v3463
    %v3465 = vsel %vm2961, %v2945, 0.0
    %v3466 = vadd.f32 %v3464, %v3465
    %v3467 = vsel %vm2961, %v2948, 0.0
    %v3468 = vadd.f32 %v3466, %v3467
    %v3469 = vsel %vm2961, %v2953, 0.0
    %v3470 = vadd.f32 %v3468, %v3469
    %v3471 = vsel %vm2961, %v2956, 0.0
    %v3472 = vadd.f32 %v3470, %v3471
    %v3473 = vrot.slane %v3472, 4
    %v3474 = vadd.f32 %v3472, %v3473
    %v3475 = vrot.slane %v3474, 2
    %v3476 = vadd.f32 %v3474, %v3475
    %v3477 = vrot.slane %v3476, 1
    %v3478 = vadd.f32 %v3476, %v3477
    %v3479 = vmul.f32 %v3478, 0.00048828125
    %v3480 = vsub.f32 %v1937, %v3479
    %v3481 = vsub.f32 %v1940, %v3479
    %v3482 = vsub.f32 %v1945, %v3479
    %v3483 = vsub.f32 %v1948, %v3479
    %v3484 = vsub.f32 %v1953, %v3479
    %v3485 = vsub.f32 %v1956, %v3479
    %v3486 = vsub.f32 %v1961, %v3479
    %v3487 = vsub.f32 %v1964, %v3479
    %v3488 = vsub.f32 %v1969, %v3479
    %v3489 = vsub.f32 %v1972, %v3479
    %v3490 = vsub.f32 %v1977, %v3479
    %v3491 = vsub.f32 %v1980, %v3479
    %v3492 = vsub.f32 %v1985, %v3479
    %v3493 = vsub.f32 %v1988, %v3479
    %v3494 = vsub.f32 %v1993, %v3479
    %v3495 = vsub.f32 %v1996, %v3479
    %v3496 = vsub.f32 %v2001, %v3479
    %v3497 = vsub.f32 %v2004, %v3479
    %v3498 = vsub.f32 %v2009, %v3479
    %v3499 = vsub.f32 %v2012, %v3479
    %v3500 = vsub.f32 %v2017, %v3479
    %v3501 = vsub.f32 %v2020, %v3479
    %v3502 = vsub.f32 %v2025, %v3479
    %v3503 = vsub.f32 %v2028, %v3479
    %v3504 = vsub.f32 %v2033, %v3479
    %v3505 = vsub.f32 %v2036, %v3479
    %v3506 = vsub.f32 %v2041, %v3479
    %v3507 = vsub.f32 %v2044, %v3479
    %v3508 = vsub.f32 %v2049, %v3479
    %v3509 = vsub.f32 %v2052, %v3479
    %v3510 = vsub.f32 %v2057, %v3479
    %v3511 = vsub.f32 %v2060, %v3479
    %v3512 = vsub.f32 %v2065, %v3479
    %v3513 = vsub.f32 %v2068, %v3479
    %v3514 = vsub.f32 %v2073, %v3479
    %v3515 = vsub.f32 %v2076, %v3479
    %v3516 = vsub.f32 %v2081, %v3479
    %v3517 = vsub.f32 %v2084, %v3479
    %v3518 = vsub.f32 %v2089, %v3479
    %v3519 = vsub.f32 %v2092, %v3479
    %v3520 = vsub.f32 %v2097, %v3479
    %v3521 = vsub.f32 %v2100, %v3479
    %v3522 = vsub.f32 %v2105, %v3479
    %v3523 = vsub.f32 %v2108, %v3479
    %v3524 = vsub.f32 %v2113, %v3479
    %v3525 = vsub.f32 %v2116, %v3479
    %v3526 = vsub.f32 %v2121, %v3479
    %v3527 = vsub.f32 %v2124, %v3479
    %v3528 = vsub.f32 %v2129, %v3479
    %v3529 = vsub.f32 %v2132, %v3479
    %v3530 = vsub.f32 %v2137, %v3479
    %v3531 = vsub.f32 %v2140, %v3479
    %v3532 = vsub.f32 %v2145, %v3479
    %v3533 = vsub.f32 %v2148, %v3479
    %v3534 = vsub.f32 %v2153, %v3479
    %v3535 = vsub.f32 %v2156, %v3479
    %v3536 = vsub.f32 %v2161, %v3479
    %v3537 = vsub.f32 %v2164, %v3479
    %v3538 = vsub.f32 %v2169, %v3479
    %v3539 = vsub.f32 %v2172, %v3479
    %v3540 = vsub.f32 %v2177, %v3479
    %v3541 = vsub.f32 %v2180, %v3479
    %v3542 = vsub.f32 %v2185, %v3479
    %v3543 = vsub.f32 %v2188, %v3479
    %v3544 = vsub.f32 %v2193, %v3479
    %v3545 = vsub.f32 %v2196, %v3479
    %v3546 = vsub.f32 %v2201, %v3479
    %v3547 = vsub.f32 %v2204, %v3479
    %v3548 = vsub.f32 %v2209, %v3479
    %v3549 = vsub.f32 %v2212, %v3479
    %v3550 = vsub.f32 %v2217, %v3479
    %v3551 = vsub.f32 %v2220, %v3479
    %v3552 = vsub.f32 %v2225, %v3479
    %v3553 = vsub.f32 %v2228, %v3479
    %v3554 = vsub.f32 %v2233, %v3479
    %v3555 = vsub.f32 %v2236, %v3479
    %v3556 = vsub.f32 %v2241, %v3479
    %v3557 = vsub.f32 %v2244, %v3479
    %v3558 = vsub.f32 %v2249, %v3479
    %v3559 = vsub.f32 %v2252, %v3479
    %v3560 = vsub.f32 %v2257, %v3479
    %v3561 = vsub.f32 %v2260, %v3479
    %v3562 = vsub.f32 %v2265, %v3479
    %v3563 = vsub.f32 %v2268, %v3479
    %v3564 = vsub.f32 %v2273, %v3479
    %v3565 = vsub.f32 %v2276, %v3479
    %v3566 = vsub.f32 %v2281, %v3479
    %v3567 = vsub.f32 %v2284, %v3479
    %v3568 = vsub.f32 %v2289, %v3479
    %v3569 = vsub.f32 %v2292, %v3479
    %v3570 = vsub.f32 %v2297, %v3479
    %v3571 = vsub.f32 %v2300, %v3479
    %v3572 = vsub.f32 %v2305, %v3479
    %v3573 = vsub.f32 %v2308, %v3479
    %v3574 = vsub.f32 %v2313, %v3479
    %v3575 = vsub.f32 %v2316, %v3479
    %v3576 = vsub.f32 %v2321, %v3479
    %v3577 = vsub.f32 %v2324, %v3479
    %v3578 = vsub.f32 %v2329, %v3479
    %v3579 = vsub.f32 %v2332, %v3479
    %v3580 = vsub.f32 %v2337, %v3479
    %v3581 = vsub.f32 %v2340, %v3479
    %v3582 = vsub.f32 %v2345, %v3479
    %v3583 = vsub.f32 %v2348, %v3479
    %v3584 = vsub.f32 %v2353, %v3479
    %v3585 = vsub.f32 %v2356, %v3479
    %v3586 = vsub.f32 %v2361, %v3479
    %v3587 = vsub.f32 %v2364, %v3479
    %v3588 = vsub.f32 %v2369, %v3479
    %v3589 = vsub.f32 %v2372, %v3479
    %v3590 = vsub.f32 %v2377, %v3479
    %v3591 = vsub.f32 %v2380, %v3479
    %v3592 = vsub.f32 %v2385, %v3479
    %v3593 = vsub.f32 %v2388, %v3479
    %v3594 = vsub.f32 %v2393, %v3479
    %v3595 = vsub.f32 %v2396, %v3479
    %v3596 = vsub.f32 %v2401, %v3479
    %v3597 = vsub.f32 %v2404, %v3479
    %v3598 = vsub.f32 %v2409, %v3479
    %v3599 = vsub.f32 %v2412, %v3479
    %v3600 = vsub.f32 %v2417, %v3479
    %v3601 = vsub.f32 %v2420, %v3479
    %v3602 = vsub.f32 %v2425, %v3479
    %v3603 = vsub.f32 %v2428, %v3479
    %v3604 = vsub.f32 %v2433, %v3479
    %v3605 = vsub.f32 %v2436, %v3479
    %v3606 = vsub.f32 %v2441, %v3479
    %v3607 = vsub.f32 %v2444, %v3479
    %v3608 = vsub.f32 %v2449, %v3479
    %v3609 = vsub.f32 %v2452, %v3479
    %v3610 = vsub.f32 %v2457, %v3479
    %v3611 = vsub.f32 %v2460, %v3479
    %v3612 = vsub.f32 %v2465, %v3479
    %v3613 = vsub.f32 %v2468, %v3479
    %v3614 = vsub.f32 %v2473, %v3479
    %v3615 = vsub.f32 %v2476, %v3479
    %v3616 = vsub.f32 %v2481, %v3479
    %v3617 = vsub.f32 %v2484, %v3479
    %v3618 = vsub.f32 %v2489, %v3479
    %v3619 = vsub.f32 %v2492, %v3479
    %v3620 = vsub.f32 %v2497, %v3479
    %v3621 = vsub.f32 %v2500, %v3479
    %v3622 = vsub.f32 %v2505, %v3479
    %v3623 = vsub.f32 %v2508, %v3479
    %v3624 = vsub.f32 %v2513, %v3479
    %v3625 = vsub.f32 %v2516, %v3479
    %v3626 = vsub.f32 %v2521, %v3479
    %v3627 = vsub.f32 %v2524, %v3479
    %v3628 = vsub.f32 %v2529, %v3479
    %v3629 = vsub.f32 %v2532, %v3479
    %v3630 = vsub.f32 %v2537, %v3479
    %v3631 = vsub.f32 %v2540, %v3479
    %v3632 = vsub.f32 %v2545, %v3479
    %v3633 = vsub.f32 %v2548, %v3479
    %v3634 = vsub.f32 %v2553, %v3479
    %v3635 = vsub.f32 %v2556, %v3479
    %v3636 = vsub.f32 %v2561, %v3479
    %v3637 = vsub.f32 %v2564, %v3479
    %v3638 = vsub.f32 %v2569, %v3479
    %v3639 = vsub.f32 %v2572, %v3479
    %v3640 = vsub.f32 %v2577, %v3479
    %v3641 = vsub.f32 %v2580, %v3479
    %v3642 = vsub.f32 %v2585, %v3479
    %v3643 = vsub.f32 %v2588, %v3479
    %v3644 = vsub.f32 %v2593, %v3479
    %v3645 = vsub.f32 %v2596, %v3479
    %v3646 = vsub.f32 %v2601, %v3479
    %v3647 = vsub.f32 %v2604, %v3479
    %v3648 = vsub.f32 %v2609, %v3479
    %v3649 = vsub.f32 %v2612, %v3479
    %v3650 = vsub.f32 %v2617, %v3479
    %v3651 = vsub.f32 %v2620, %v3479
    %v3652 = vsub.f32 %v2625, %v3479
    %v3653 = vsub.f32 %v2628, %v3479
    %v3654 = vsub.f32 %v2633, %v3479
    %v3655 = vsub.f32 %v2636, %v3479
    %v3656 = vsub.f32 %v2641, %v3479
    %v3657 = vsub.f32 %v2644, %v3479
    %v3658 = vsub.f32 %v2649, %v3479
    %v3659 = vsub.f32 %v2652, %v3479
    %v3660 = vsub.f32 %v2657, %v3479
    %v3661 = vsub.f32 %v2660, %v3479
    %v3662 = vsub.f32 %v2665, %v3479
    %v3663 = vsub.f32 %v2668, %v3479
    %v3664 = vsub.f32 %v2673, %v3479
    %v3665 = vsub.f32 %v2676, %v3479
    %v3666 = vsub.f32 %v2681, %v3479
    %v3667 = vsub.f32 %v2684, %v3479
    %v3668 = vsub.f32 %v2689, %v3479
    %v3669 = vsub.f32 %v2692, %v3479
    %v3670 = vsub.f32 %v2697, %v3479
    %v3671 = vsub.f32 %v2700, %v3479
    %v3672 = vsub.f32 %v2705, %v3479
    %v3673 = vsub.f32 %v2708, %v3479
    %v3674 = vsub.f32 %v2713, %v3479
    %v3675 = vsub.f32 %v2716, %v3479
    %v3676 = vsub.f32 %v2721, %v3479
    %v3677 = vsub.f32 %v2724, %v3479
    %v3678 = vsub.f32 %v2729, %v3479
    %v3679 = vsub.f32 %v2732, %v3479
    %v3680 = vsub.f32 %v2737, %v3479
    %v3681 = vsub.f32 %v2740, %v3479
    %v3682 = vsub.f32 %v2745, %v3479
    %v3683 = vsub.f32 %v2748, %v3479
    %v3684 = vsub.f32 %v2753, %v3479
    %v3685 = vsub.f32 %v2756, %v3479
    %v3686 = vsub.f32 %v2761, %v3479
    %v3687 = vsub.f32 %v2764, %v3479
    %v3688 = vsub.f32 %v2769, %v3479
    %v3689 = vsub.f32 %v2772, %v3479
    %v3690 = vsub.f32 %v2777, %v3479
    %v3691 = vsub.f32 %v2780, %v3479
    %v3692 = vsub.f32 %v2785, %v3479
    %v3693 = vsub.f32 %v2788, %v3479
    %v3694 = vsub.f32 %v2793, %v3479
    %v3695 = vsub.f32 %v2796, %v3479
    %v3696 = vsub.f32 %v2801, %v3479
    %v3697 = vsub.f32 %v2804, %v3479
    %v3698 = vsub.f32 %v2809, %v3479
    %v3699 = vsub.f32 %v2812, %v3479
    %v3700 = vsub.f32 %v2817, %v3479
    %v3701 = vsub.f32 %v2820, %v3479
    %v3702 = vsub.f32 %v2825, %v3479
    %v3703 = vsub.f32 %v2828, %v3479
    %v3704 = vsub.f32 %v2833, %v3479
    %v3705 = vsub.f32 %v2836, %v3479
    %v3706 = vsub.f32 %v2841, %v3479
    %v3707 = vsub.f32 %v2844, %v3479
    %v3708 = vsub.f32 %v2849, %v3479
    %v3709 = vsub.f32 %v2852, %v3479
    %v3710 = vsub.f32 %v2857, %v3479
    %v3711 = vsub.f32 %v2860, %v3479
    %v3712 = vsub.f32 %v2865, %v3479
    %v3713 = vsub.f32 %v2868, %v3479
    %v3714 = vsub.f32 %v2873, %v3479
    %v3715 = vsub.f32 %v2876, %v3479
    %v3716 = vsub.f32 %v2881, %v3479
    %v3717 = vsub.f32 %v2884, %v3479
    %v3718 = vsub.f32 %v2889, %v3479
    %v3719 = vsub.f32 %v2892, %v3479
    %v3720 = vsub.f32 %v2897, %v3479
    %v3721 = vsub.f32 %v2900, %v3479
    %v3722 = vsub.f32 %v2905, %v3479
    %v3723 = vsub.f32 %v2908, %v3479
    %v3724 = vsub.f32 %v2913, %v3479
    %v3725 = vsub.f32 %v2916, %v3479
    %v3726 = vsub.f32 %v2921, %v3479
    %v3727 = vsub.f32 %v2924, %v3479
    %v3728 = vsub.f32 %v2929, %v3479
    %v3729 = vsub.f32 %v2932, %v3479
    %v3730 = vsub.f32 %v2937, %v3479
    %v3731 = vsub.f32 %v2940, %v3479
    %v3732 = vsub.f32 %v2945, %v3479
    %v3733 = vsub.f32 %v2948, %v3479
    %v3734 = vsub.f32 %v2953, %v3479
    %v3735 = vsub.f32 %v2956, %v3479
    %v3736 = vmul.f32 %v3480, %v3480
    %v3737 = vmul.f32 %v3481, %v3481
    %v3738 = vmul.f32 %v3482, %v3482
    %v3739 = vmul.f32 %v3483, %v3483
    %v3740 = vmul.f32 %v3484, %v3484
    %v3741 = vmul.f32 %v3485, %v3485
    %v3742 = vmul.f32 %v3486, %v3486
    %v3743 = vmul.f32 %v3487, %v3487
    %v3744 = vmul.f32 %v3488, %v3488
    %v3745 = vmul.f32 %v3489, %v3489
    %v3746 = vmul.f32 %v3490, %v3490
    %v3747 = vmul.f32 %v3491, %v3491
    %v3748 = vmul.f32 %v3492, %v3492
    %v3749 = vmul.f32 %v3493, %v3493
    %v3750 = vmul.f32 %v3494, %v3494
    %v3751 = vmul.f32 %v3495, %v3495
    %v3752 = vmul.f32 %v3496, %v3496
    %v3753 = vmul.f32 %v3497, %v3497
    %v3754 = vmul.f32 %v3498, %v3498
    %v3755 = vmul.f32 %v3499, %v3499
    %v3756 = vmul.f32 %v3500, %v3500
    %v3757 = vmul.f32 %v3501, %v3501
    %v3758 = vmul.f32 %v3502, %v3502
    %v3759 = vmul.f32 %v3503, %v3503
    %v3760 = vmul.f32 %v3504, %v3504
    %v3761 = vmul.f32 %v3505, %v3505
    %v3762 = vmul.f32 %v3506, %v3506
    %v3763 = vmul.f32 %v3507, %v3507
    %v3764 = vmul.f32 %v3508, %v3508
    %v3765 = vmul.f32 %v3509, %v3509
    %v3766 = vmul.f32 %v3510, %v3510
    %v3767 = vmul.f32 %v3511, %v3511
    %v3768 = vmul.f32 %v3512, %v3512
    %v3769 = vmul.f32 %v3513, %v3513
    %v3770 = vmul.f32 %v3514, %v3514
    %v3771 = vmul.f32 %v3515, %v3515
    %v3772 = vmul.f32 %v3516, %v3516
    %v3773 = vmul.f32 %v3517, %v3517
    %v3774 = vmul.f32 %v3518, %v3518
    %v3775 = vmul.f32 %v3519, %v3519
    %v3776 = vmul.f32 %v3520, %v3520
    %v3777 = vmul.f32 %v3521, %v3521
    %v3778 = vmul.f32 %v3522, %v3522
    %v3779 = vmul.f32 %v3523, %v3523
    %v3780 = vmul.f32 %v3524, %v3524
    %v3781 = vmul.f32 %v3525, %v3525
    %v3782 = vmul.f32 %v3526, %v3526
    %v3783 = vmul.f32 %v3527, %v3527
    %v3784 = vmul.f32 %v3528, %v3528
    %v3785 = vmul.f32 %v3529, %v3529
    %v3786 = vmul.f32 %v3530, %v3530
    %v3787 = vmul.f32 %v3531, %v3531
    %v3788 = vmul.f32 %v3532, %v3532
    %v3789 = vmul.f32 %v3533, %v3533
    %v3790 = vmul.f32 %v3534, %v3534
    %v3791 = vmul.f32 %v3535, %v3535
    %v3792 = vmul.f32 %v3536, %v3536
    %v3793 = vmul.f32 %v3537, %v3537
    %v3794 = vmul.f32 %v3538, %v3538
    %v3795 = vmul.f32 %v3539, %v3539
    %v3796 = vmul.f32 %v3540, %v3540
    %v3797 = vmul.f32 %v3541, %v3541
    %v3798 = vmul.f32 %v3542, %v3542
    %v3799 = vmul.f32 %v3543, %v3543
    %v3800 = vmul.f32 %v3544, %v3544
    %v3801 = vmul.f32 %v3545, %v3545
    %v3802 = vmul.f32 %v3546, %v3546
    %v3803 = vmul.f32 %v3547, %v3547
    %v3804 = vmul.f32 %v3548, %v3548
    %v3805 = vmul.f32 %v3549, %v3549
    %v3806 = vmul.f32 %v3550, %v3550
    %v3807 = vmul.f32 %v3551, %v3551
    %v3808 = vmul.f32 %v3552, %v3552
    %v3809 = vmul.f32 %v3553, %v3553
    %v3810 = vmul.f32 %v3554, %v3554
    %v3811 = vmul.f32 %v3555, %v3555
    %v3812 = vmul.f32 %v3556, %v3556
    %v3813 = vmul.f32 %v3557, %v3557
    %v3814 = vmul.f32 %v3558, %v3558
    %v3815 = vmul.f32 %v3559, %v3559
    %v3816 = vmul.f32 %v3560, %v3560
    %v3817 = vmul.f32 %v3561, %v3561
    %v3818 = vmul.f32 %v3562, %v3562
    %v3819 = vmul.f32 %v3563, %v3563
    %v3820 = vmul.f32 %v3564, %v3564
    %v3821 = vmul.f32 %v3565, %v3565
    %v3822 = vmul.f32 %v3566, %v3566
    %v3823 = vmul.f32 %v3567, %v3567
    %v3824 = vmul.f32 %v3568, %v3568
    %v3825 = vmul.f32 %v3569, %v3569
    %v3826 = vmul.f32 %v3570, %v3570
    %v3827 = vmul.f32 %v3571, %v3571
    %v3828 = vmul.f32 %v3572, %v3572
    %v3829 = vmul.f32 %v3573, %v3573
    %v3830 = vmul.f32 %v3574, %v3574
    %v3831 = vmul.f32 %v3575, %v3575
    %v3832 = vmul.f32 %v3576, %v3576
    %v3833 = vmul.f32 %v3577, %v3577
    %v3834 = vmul.f32 %v3578, %v3578
    %v3835 = vmul.f32 %v3579, %v3579
    %v3836 = vmul.f32 %v3580, %v3580
    %v3837 = vmul.f32 %v3581, %v3581
    %v3838 = vmul.f32 %v3582, %v3582
    %v3839 = vmul.f32 %v3583, %v3583
    %v3840 = vmul.f32 %v3584, %v3584
    %v3841 = vmul.f32 %v3585, %v3585
    %v3842 = vmul.f32 %v3586, %v3586
    %v3843 = vmul.f32 %v3587, %v3587
    %v3844 = vmul.f32 %v3588, %v3588
    %v3845 = vmul.f32 %v3589, %v3589
    %v3846 = vmul.f32 %v3590, %v3590
    %v3847 = vmul.f32 %v3591, %v3591
    %v3848 = vmul.f32 %v3592, %v3592
    %v3849 = vmul.f32 %v3593, %v3593
    %v3850 = vmul.f32 %v3594, %v3594
    %v3851 = vmul.f32 %v3595, %v3595
    %v3852 = vmul.f32 %v3596, %v3596
    %v3853 = vmul.f32 %v3597, %v3597
    %v3854 = vmul.f32 %v3598, %v3598
    %v3855 = vmul.f32 %v3599, %v3599
    %v3856 = vmul.f32 %v3600, %v3600
    %v3857 = vmul.f32 %v3601, %v3601
    %v3858 = vmul.f32 %v3602, %v3602
    %v3859 = vmul.f32 %v3603, %v3603
    %v3860 = vmul.f32 %v3604, %v3604
    %v3861 = vmul.f32 %v3605, %v3605
    %v3862 = vmul.f32 %v3606, %v3606
    %v3863 = vmul.f32 %v3607, %v3607
    %v3864 = vmul.f32 %v3608, %v3608
    %v3865 = vmul.f32 %v3609, %v3609
    %v3866 = vmul.f32 %v3610, %v3610
    %v3867 = vmul.f32 %v3611, %v3611
    %v3868 = vmul.f32 %v3612, %v3612
    %v3869 = vmul.f32 %v3613, %v3613
    %v3870 = vmul.f32 %v3614, %v3614
    %v3871 = vmul.f32 %v3615, %v3615
    %v3872 = vmul.f32 %v3616, %v3616
    %v3873 = vmul.f32 %v3617, %v3617
    %v3874 = vmul.f32 %v3618, %v3618
    %v3875 = vmul.f32 %v3619, %v3619
    %v3876 = vmul.f32 %v3620, %v3620
    %v3877 = vmul.f32 %v3621, %v3621
    %v3878 = vmul.f32 %v3622, %v3622
    %v3879 = vmul.f32 %v3623, %v3623
    %v3880 = vmul.f32 %v3624, %v3624
    %v3881 = vmul.f32 %v3625, %v3625
    %v3882 = vmul.f32 %v3626, %v3626
    %v3883 = vmul.f32 %v3627, %v3627
    %v3884 = vmul.f32 %v3628, %v3628
    %v3885 = vmul.f32 %v3629, %v3629
    %v3886 = vmul.f32 %v3630, %v3630
    %v3887 = vmul.f32 %v3631, %v3631
    %v3888 = vmul.f32 %v3632, %v3632
    %v3889 = vmul.f32 %v3633, %v3633
    %v3890 = vmul.f32 %v3634, %v3634
    %v3891 = vmul.f32 %v3635, %v3635
    %v3892 = vmul.f32 %v3636, %v3636
    %v3893 = vmul.f32 %v3637, %v3637
    %v3894 = vmul.f32 %v3638, %v3638
    %v3895 = vmul.f32 %v3639, %v3639
    %v3896 = vmul.f32 %v3640, %v3640
    %v3897 = vmul.f32 %v3641, %v3641
    %v3898 = vmul.f32 %v3642, %v3642
    %v3899 = vmul.f32 %v3643, %v3643
    %v3900 = vmul.f32 %v3644, %v3644
    %v3901 = vmul.f32 %v3645, %v3645
    %v3902 = vmul.f32 %v3646, %v3646
    %v3903 = vmul.f32 %v3647, %v3647
    %v3904 = vmul.f32 %v3648, %v3648
    %v3905 = vmul.f32 %v3649, %v3649
    %v3906 = vmul.f32 %v3650, %v3650
    %v3907 = vmul.f32 %v3651, %v3651
    %v3908 = vmul.f32 %v3652, %v3652
    %v3909 = vmul.f32 %v3653, %v3653
    %v3910 = vmul.f32 %v3654, %v3654
    %v3911 = vmul.f32 %v3655, %v3655
    %v3912 = vmul.f32 %v3656, %v3656
    %v3913 = vmul.f32 %v3657, %v3657
    %v3914 = vmul.f32 %v3658, %v3658
    %v3915 = vmul.f32 %v3659, %v3659
    %v3916 = vmul.f32 %v3660, %v3660
    %v3917 = vmul.f32 %v3661, %v3661
    %v3918 = vmul.f32 %v3662, %v3662
    %v3919 = vmul.f32 %v3663, %v3663
    %v3920 = vmul.f32 %v3664, %v3664
    %v3921 = vmul.f32 %v3665, %v3665
    %v3922 = vmul.f32 %v3666, %v3666
    %v3923 = vmul.f32 %v3667, %v3667
    %v3924 = vmul.f32 %v3668, %v3668
    %v3925 = vmul.f32 %v3669, %v3669
    %v3926 = vmul.f32 %v3670, %v3670
    %v3927 = vmul.f32 %v3671, %v3671
    %v3928 = vmul.f32 %v3672, %v3672
    %v3929 = vmul.f32 %v3673, %v3673
    %v3930 = vmul.f32 %v3674, %v3674
    %v3931 = vmul.f32 %v3675, %v3675
    %v3932 = vmul.f32 %v3676, %v3676
    %v3933 = vmul.f32 %v3677, %v3677
    %v3934 = vmul.f32 %v3678, %v3678
    %v3935 = vmul.f32 %v3679, %v3679
    %v3936 = vmul.f32 %v3680, %v3680
    %v3937 = vmul.f32 %v3681, %v3681
    %v3938 = vmul.f32 %v3682, %v3682
    %v3939 = vmul.f32 %v3683, %v3683
    %v3940 = vmul.f32 %v3684, %v3684
    %v3941 = vmul.f32 %v3685, %v3685
    %v3942 = vmul.f32 %v3686, %v3686
    %v3943 = vmul.f32 %v3687, %v3687
    %v3944 = vmul.f32 %v3688, %v3688
    %v3945 = vmul.f32 %v3689, %v3689
    %v3946 = vmul.f32 %v3690, %v3690
    %v3947 = vmul.f32 %v3691, %v3691
    %v3948 = vmul.f32 %v3692, %v3692
    %v3949 = vmul.f32 %v3693, %v3693
    %v3950 = vmul.f32 %v3694, %v3694
    %v3951 = vmul.f32 %v3695, %v3695
    %v3952 = vmul.f32 %v3696, %v3696
    %v3953 = vmul.f32 %v3697, %v3697
    %v3954 = vmul.f32 %v3698, %v3698
    %v3955 = vmul.f32 %v3699, %v3699
    %v3956 = vmul.f32 %v3700, %v3700
    %v3957 = vmul.f32 %v3701, %v3701
    %v3958 = vmul.f32 %v3702, %v3702
    %v3959 = vmul.f32 %v3703, %v3703
    %v3960 = vmul.f32 %v3704, %v3704
    %v3961 = vmul.f32 %v3705, %v3705
    %v3962 = vmul.f32 %v3706, %v3706
    %v3963 = vmul.f32 %v3707, %v3707
    %v3964 = vmul.f32 %v3708, %v3708
    %v3965 = vmul.f32 %v3709, %v3709
    %v3966 = vmul.f32 %v3710, %v3710
    %v3967 = vmul.f32 %v3711, %v3711
    %v3968 = vmul.f32 %v3712, %v3712
    %v3969 = vmul.f32 %v3713, %v3713
    %v3970 = vmul.f32 %v3714, %v3714
    %v3971 = vmul.f32 %v3715, %v3715
    %v3972 = vmul.f32 %v3716, %v3716
    %v3973 = vmul.f32 %v3717, %v3717
    %v3974 = vmul.f32 %v3718, %v3718
    %v3975 = vmul.f32 %v3719, %v3719
    %v3976 = vmul.f32 %v3720, %v3720
    %v3977 = vmul.f32 %v3721, %v3721
    %v3978 = vmul.f32 %v3722, %v3722
    %v3979 = vmul.f32 %v3723, %v3723
    %v3980 = vmul.f32 %v3724, %v3724
    %v3981 = vmul.f32 %v3725, %v3725
    %v3982 = vmul.f32 %v3726, %v3726
    %v3983 = vmul.f32 %v3727, %v3727
    %v3984 = vmul.f32 %v3728, %v3728
    %v3985 = vmul.f32 %v3729, %v3729
    %v3986 = vmul.f32 %v3730, %v3730
    %v3987 = vmul.f32 %v3731, %v3731
    %v3988 = vmul.f32 %v3732, %v3732
    %v3989 = vmul.f32 %v3733, %v3733
    %v3990 = vmul.f32 %v3734, %v3734
    %v3991 = vmul.f32 %v3735, %v3735
    %v3992 = vsel %vm2961, %v3736, 0.0
    %v3993 = vsel %vm2961, %v3737, 0.0
    %v3994 = vadd.f32 %v3992, %v3993
    %v3995 = vsel %vm2961, %v3738, 0.0
    %v3996 = vadd.f32 %v3994, %v3995
    %v3997 = vsel %vm2961, %v3739, 0.0
    %v3998 = vadd.f32 %v3996, %v3997
    %v3999 = vsel %vm2961, %v3740, 0.0
    %v4000 = vadd.f32 %v3998, %v3999
    %v4001 = vsel %vm2961, %v3741, 0.0
    %v4002 = vadd.f32 %v4000, %v4001
    %v4003 = vsel %vm2961, %v3742, 0.0
    %v4004 = vadd.f32 %v4002, %v4003
    %v4005 = vsel %vm2961, %v3743, 0.0
    %v4006 = vadd.f32 %v4004, %v4005
    %v4007 = vsel %vm2961, %v3744, 0.0
    %v4008 = vadd.f32 %v4006, %v4007
    %v4009 = vsel %vm2961, %v3745, 0.0
    %v4010 = vadd.f32 %v4008, %v4009
    %v4011 = vsel %vm2961, %v3746, 0.0
    %v4012 = vadd.f32 %v4010, %v4011
    %v4013 = vsel %vm2961, %v3747, 0.0
    %v4014 = vadd.f32 %v4012, %v4013
    %v4015 = vsel %vm2961, %v3748, 0.0
    %v4016 = vadd.f32 %v4014, %v4015
    %v4017 = vsel %vm2961, %v3749, 0.0
    %v4018 = vadd.f32 %v4016, %v4017
    %v4019 = vsel %vm2961, %v3750, 0.0
    %v4020 = vadd.f32 %v4018, %v4019
    %v4021 = vsel %vm2961, %v3751, 0.0
    %v4022 = vadd.f32 %v4020, %v4021
    %v4023 = vsel %vm2961, %v3752, 0.0
    %v4024 = vadd.f32 %v4022, %v4023
    %v4025 = vsel %vm2961, %v3753, 0.0
    %v4026 = vadd.f32 %v4024, %v4025
    %v4027 = vsel %vm2961, %v3754, 0.0
    %v4028 = vadd.f32 %v4026, %v4027
    %v4029 = vsel %vm2961, %v3755, 0.0
    %v4030 = vadd.f32 %v4028, %v4029
    %v4031 = vsel %vm2961, %v3756, 0.0
    %v4032 = vadd.f32 %v4030, %v4031
    %v4033 = vsel %vm2961, %v3757, 0.0
    %v4034 = vadd.f32 %v4032, %v4033
    %v4035 = vsel %vm2961, %v3758, 0.0
    %v4036 = vadd.f32 %v4034, %v4035
    %v4037 = vsel %vm2961, %v3759, 0.0
    %v4038 = vadd.f32 %v4036, %v4037
    %v4039 = vsel %vm2961, %v3760, 0.0
    %v4040 = vadd.f32 %v4038, %v4039
    %v4041 = vsel %vm2961, %v3761, 0.0
    %v4042 = vadd.f32 %v4040, %v4041
    %v4043 = vsel %vm2961, %v3762, 0.0
    %v4044 = vadd.f32 %v4042, %v4043
    %v4045 = vsel %vm2961, %v3763, 0.0
    %v4046 = vadd.f32 %v4044, %v4045
    %v4047 = vsel %vm2961, %v3764, 0.0
    %v4048 = vadd.f32 %v4046, %v4047
    %v4049 = vsel %vm2961, %v3765, 0.0
    %v4050 = vadd.f32 %v4048, %v4049
    %v4051 = vsel %vm2961, %v3766, 0.0
    %v4052 = vadd.f32 %v4050, %v4051
    %v4053 = vsel %vm2961, %v3767, 0.0
    %v4054 = vadd.f32 %v4052, %v4053
    %v4055 = vsel %vm2961, %v3768, 0.0
    %v4056 = vadd.f32 %v4054, %v4055
    %v4057 = vsel %vm2961, %v3769, 0.0
    %v4058 = vadd.f32 %v4056, %v4057
    %v4059 = vsel %vm2961, %v3770, 0.0
    %v4060 = vadd.f32 %v4058, %v4059
    %v4061 = vsel %vm2961, %v3771, 0.0
    %v4062 = vadd.f32 %v4060, %v4061
    %v4063 = vsel %vm2961, %v3772, 0.0
    %v4064 = vadd.f32 %v4062, %v4063
    %v4065 = vsel %vm2961, %v3773, 0.0
    %v4066 = vadd.f32 %v4064, %v4065
    %v4067 = vsel %vm2961, %v3774, 0.0
    %v4068 = vadd.f32 %v4066, %v4067
    %v4069 = vsel %vm2961, %v3775, 0.0
    %v4070 = vadd.f32 %v4068, %v4069
    %v4071 = vsel %vm2961, %v3776, 0.0
    %v4072 = vadd.f32 %v4070, %v4071
    %v4073 = vsel %vm2961, %v3777, 0.0
    %v4074 = vadd.f32 %v4072, %v4073
    %v4075 = vsel %vm2961, %v3778, 0.0
    %v4076 = vadd.f32 %v4074, %v4075
    %v4077 = vsel %vm2961, %v3779, 0.0
    %v4078 = vadd.f32 %v4076, %v4077
    %v4079 = vsel %vm2961, %v3780, 0.0
    %v4080 = vadd.f32 %v4078, %v4079
    %v4081 = vsel %vm2961, %v3781, 0.0
    %v4082 = vadd.f32 %v4080, %v4081
    %v4083 = vsel %vm2961, %v3782, 0.0
    %v4084 = vadd.f32 %v4082, %v4083
    %v4085 = vsel %vm2961, %v3783, 0.0
    %v4086 = vadd.f32 %v4084, %v4085
    %v4087 = vsel %vm2961, %v3784, 0.0
    %v4088 = vadd.f32 %v4086, %v4087
    %v4089 = vsel %vm2961, %v3785, 0.0
    %v4090 = vadd.f32 %v4088, %v4089
    %v4091 = vsel %vm2961, %v3786, 0.0
    %v4092 = vadd.f32 %v4090, %v4091
    %v4093 = vsel %vm2961, %v3787, 0.0
    %v4094 = vadd.f32 %v4092, %v4093
    %v4095 = vsel %vm2961, %v3788, 0.0
    %v4096 = vadd.f32 %v4094, %v4095
    %v4097 = vsel %vm2961, %v3789, 0.0
    %v4098 = vadd.f32 %v4096, %v4097
    %v4099 = vsel %vm2961, %v3790, 0.0
    %v4100 = vadd.f32 %v4098, %v4099
    %v4101 = vsel %vm2961, %v3791, 0.0
    %v4102 = vadd.f32 %v4100, %v4101
    %v4103 = vsel %vm2961, %v3792, 0.0
    %v4104 = vadd.f32 %v4102, %v4103
    %v4105 = vsel %vm2961, %v3793, 0.0
    %v4106 = vadd.f32 %v4104, %v4105
    %v4107 = vsel %vm2961, %v3794, 0.0
    %v4108 = vadd.f32 %v4106, %v4107
    %v4109 = vsel %vm2961, %v3795, 0.0
    %v4110 = vadd.f32 %v4108, %v4109
    %v4111 = vsel %vm2961, %v3796, 0.0
    %v4112 = vadd.f32 %v4110, %v4111
    %v4113 = vsel %vm2961, %v3797, 0.0
    %v4114 = vadd.f32 %v4112, %v4113
    %v4115 = vsel %vm2961, %v3798, 0.0
    %v4116 = vadd.f32 %v4114, %v4115
    %v4117 = vsel %vm2961, %v3799, 0.0
    %v4118 = vadd.f32 %v4116, %v4117
    %v4119 = vsel %vm2961, %v3800, 0.0
    %v4120 = vadd.f32 %v4118, %v4119
    %v4121 = vsel %vm2961, %v3801, 0.0
    %v4122 = vadd.f32 %v4120, %v4121
    %v4123 = vsel %vm2961, %v3802, 0.0
    %v4124 = vadd.f32 %v4122, %v4123
    %v4125 = vsel %vm2961, %v3803, 0.0
    %v4126 = vadd.f32 %v4124, %v4125
    %v4127 = vsel %vm2961, %v3804, 0.0
    %v4128 = vadd.f32 %v4126, %v4127
    %v4129 = vsel %vm2961, %v3805, 0.0
    %v4130 = vadd.f32 %v4128, %v4129
    %v4131 = vsel %vm2961, %v3806, 0.0
    %v4132 = vadd.f32 %v4130, %v4131
    %v4133 = vsel %vm2961, %v3807, 0.0
    %v4134 = vadd.f32 %v4132, %v4133
    %v4135 = vsel %vm2961, %v3808, 0.0
    %v4136 = vadd.f32 %v4134, %v4135
    %v4137 = vsel %vm2961, %v3809, 0.0
    %v4138 = vadd.f32 %v4136, %v4137
    %v4139 = vsel %vm2961, %v3810, 0.0
    %v4140 = vadd.f32 %v4138, %v4139
    %v4141 = vsel %vm2961, %v3811, 0.0
    %v4142 = vadd.f32 %v4140, %v4141
    %v4143 = vsel %vm2961, %v3812, 0.0
    %v4144 = vadd.f32 %v4142, %v4143
    %v4145 = vsel %vm2961, %v3813, 0.0
    %v4146 = vadd.f32 %v4144, %v4145
    %v4147 = vsel %vm2961, %v3814, 0.0
    %v4148 = vadd.f32 %v4146, %v4147
    %v4149 = vsel %vm2961, %v3815, 0.0
    %v4150 = vadd.f32 %v4148, %v4149
    %v4151 = vsel %vm2961, %v3816, 0.0
    %v4152 = vadd.f32 %v4150, %v4151
    %v4153 = vsel %vm2961, %v3817, 0.0
    %v4154 = vadd.f32 %v4152, %v4153
    %v4155 = vsel %vm2961, %v3818, 0.0
    %v4156 = vadd.f32 %v4154, %v4155
    %v4157 = vsel %vm2961, %v3819, 0.0
    %v4158 = vadd.f32 %v4156, %v4157
    %v4159 = vsel %vm2961, %v3820, 0.0
    %v4160 = vadd.f32 %v4158, %v4159
    %v4161 = vsel %vm2961, %v3821, 0.0
    %v4162 = vadd.f32 %v4160, %v4161
    %v4163 = vsel %vm2961, %v3822, 0.0
    %v4164 = vadd.f32 %v4162, %v4163
    %v4165 = vsel %vm2961, %v3823, 0.0
    %v4166 = vadd.f32 %v4164, %v4165
    %v4167 = vsel %vm2961, %v3824, 0.0
    %v4168 = vadd.f32 %v4166, %v4167
    %v4169 = vsel %vm2961, %v3825, 0.0
    %v4170 = vadd.f32 %v4168, %v4169
    %v4171 = vsel %vm2961, %v3826, 0.0
    %v4172 = vadd.f32 %v4170, %v4171
    %v4173 = vsel %vm2961, %v3827, 0.0
    %v4174 = vadd.f32 %v4172, %v4173
    %v4175 = vsel %vm2961, %v3828, 0.0
    %v4176 = vadd.f32 %v4174, %v4175
    %v4177 = vsel %vm2961, %v3829, 0.0
    %v4178 = vadd.f32 %v4176, %v4177
    %v4179 = vsel %vm2961, %v3830, 0.0
    %v4180 = vadd.f32 %v4178, %v4179
    %v4181 = vsel %vm2961, %v3831, 0.0
    %v4182 = vadd.f32 %v4180, %v4181
    %v4183 = vsel %vm2961, %v3832, 0.0
    %v4184 = vadd.f32 %v4182, %v4183
    %v4185 = vsel %vm2961, %v3833, 0.0
    %v4186 = vadd.f32 %v4184, %v4185
    %v4187 = vsel %vm2961, %v3834, 0.0
    %v4188 = vadd.f32 %v4186, %v4187
    %v4189 = vsel %vm2961, %v3835, 0.0
    %v4190 = vadd.f32 %v4188, %v4189
    %v4191 = vsel %vm2961, %v3836, 0.0
    %v4192 = vadd.f32 %v4190, %v4191
    %v4193 = vsel %vm2961, %v3837, 0.0
    %v4194 = vadd.f32 %v4192, %v4193
    %v4195 = vsel %vm2961, %v3838, 0.0
    %v4196 = vadd.f32 %v4194, %v4195
    %v4197 = vsel %vm2961, %v3839, 0.0
    %v4198 = vadd.f32 %v4196, %v4197
    %v4199 = vsel %vm2961, %v3840, 0.0
    %v4200 = vadd.f32 %v4198, %v4199
    %v4201 = vsel %vm2961, %v3841, 0.0
    %v4202 = vadd.f32 %v4200, %v4201
    %v4203 = vsel %vm2961, %v3842, 0.0
    %v4204 = vadd.f32 %v4202, %v4203
    %v4205 = vsel %vm2961, %v3843, 0.0
    %v4206 = vadd.f32 %v4204, %v4205
    %v4207 = vsel %vm2961, %v3844, 0.0
    %v4208 = vadd.f32 %v4206, %v4207
    %v4209 = vsel %vm2961, %v3845, 0.0
    %v4210 = vadd.f32 %v4208, %v4209
    %v4211 = vsel %vm2961, %v3846, 0.0
    %v4212 = vadd.f32 %v4210, %v4211
    %v4213 = vsel %vm2961, %v3847, 0.0
    %v4214 = vadd.f32 %v4212, %v4213
    %v4215 = vsel %vm2961, %v3848, 0.0
    %v4216 = vadd.f32 %v4214, %v4215
    %v4217 = vsel %vm2961, %v3849, 0.0
    %v4218 = vadd.f32 %v4216, %v4217
    %v4219 = vsel %vm2961, %v3850, 0.0
    %v4220 = vadd.f32 %v4218, %v4219
    %v4221 = vsel %vm2961, %v3851, 0.0
    %v4222 = vadd.f32 %v4220, %v4221
    %v4223 = vsel %vm2961, %v3852, 0.0
    %v4224 = vadd.f32 %v4222, %v4223
    %v4225 = vsel %vm2961, %v3853, 0.0
    %v4226 = vadd.f32 %v4224, %v4225
    %v4227 = vsel %vm2961, %v3854, 0.0
    %v4228 = vadd.f32 %v4226, %v4227
    %v4229 = vsel %vm2961, %v3855, 0.0
    %v4230 = vadd.f32 %v4228, %v4229
    %v4231 = vsel %vm2961, %v3856, 0.0
    %v4232 = vadd.f32 %v4230, %v4231
    %v4233 = vsel %vm2961, %v3857, 0.0
    %v4234 = vadd.f32 %v4232, %v4233
    %v4235 = vsel %vm2961, %v3858, 0.0
    %v4236 = vadd.f32 %v4234, %v4235
    %v4237 = vsel %vm2961, %v3859, 0.0
    %v4238 = vadd.f32 %v4236, %v4237
    %v4239 = vsel %vm2961, %v3860, 0.0
    %v4240 = vadd.f32 %v4238, %v4239
    %v4241 = vsel %vm2961, %v3861, 0.0
    %v4242 = vadd.f32 %v4240, %v4241
    %v4243 = vsel %vm2961, %v3862, 0.0
    %v4244 = vadd.f32 %v4242, %v4243
    %v4245 = vsel %vm2961, %v3863, 0.0
    %v4246 = vadd.f32 %v4244, %v4245
    %v4247 = vsel %vm2961, %v3864, 0.0
    %v4248 = vadd.f32 %v4246, %v4247
    %v4249 = vsel %vm2961, %v3865, 0.0
    %v4250 = vadd.f32 %v4248, %v4249
    %v4251 = vsel %vm2961, %v3866, 0.0
    %v4252 = vadd.f32 %v4250, %v4251
    %v4253 = vsel %vm2961, %v3867, 0.0
    %v4254 = vadd.f32 %v4252, %v4253
    %v4255 = vsel %vm2961, %v3868, 0.0
    %v4256 = vadd.f32 %v4254, %v4255
    %v4257 = vsel %vm2961, %v3869, 0.0
    %v4258 = vadd.f32 %v4256, %v4257
    %v4259 = vsel %vm2961, %v3870, 0.0
    %v4260 = vadd.f32 %v4258, %v4259
    %v4261 = vsel %vm2961, %v3871, 0.0
    %v4262 = vadd.f32 %v4260, %v4261
    %v4263 = vsel %vm2961, %v3872, 0.0
    %v4264 = vadd.f32 %v4262, %v4263
    %v4265 = vsel %vm2961, %v3873, 0.0
    %v4266 = vadd.f32 %v4264, %v4265
    %v4267 = vsel %vm2961, %v3874, 0.0
    %v4268 = vadd.f32 %v4266, %v4267
    %v4269 = vsel %vm2961, %v3875, 0.0
    %v4270 = vadd.f32 %v4268, %v4269
    %v4271 = vsel %vm2961, %v3876, 0.0
    %v4272 = vadd.f32 %v4270, %v4271
    %v4273 = vsel %vm2961, %v3877, 0.0
    %v4274 = vadd.f32 %v4272, %v4273
    %v4275 = vsel %vm2961, %v3878, 0.0
    %v4276 = vadd.f32 %v4274, %v4275
    %v4277 = vsel %vm2961, %v3879, 0.0
    %v4278 = vadd.f32 %v4276, %v4277
    %v4279 = vsel %vm2961, %v3880, 0.0
    %v4280 = vadd.f32 %v4278, %v4279
    %v4281 = vsel %vm2961, %v3881, 0.0
    %v4282 = vadd.f32 %v4280, %v4281
    %v4283 = vsel %vm2961, %v3882, 0.0
    %v4284 = vadd.f32 %v4282, %v4283
    %v4285 = vsel %vm2961, %v3883, 0.0
    %v4286 = vadd.f32 %v4284, %v4285
    %v4287 = vsel %vm2961, %v3884, 0.0
    %v4288 = vadd.f32 %v4286, %v4287
    %v4289 = vsel %vm2961, %v3885, 0.0
    %v4290 = vadd.f32 %v4288, %v4289
    %v4291 = vsel %vm2961, %v3886, 0.0
    %v4292 = vadd.f32 %v4290, %v4291
    %v4293 = vsel %vm2961, %v3887, 0.0
    %v4294 = vadd.f32 %v4292, %v4293
    %v4295 = vsel %vm2961, %v3888, 0.0
    %v4296 = vadd.f32 %v4294, %v4295
    %v4297 = vsel %vm2961, %v3889, 0.0
    %v4298 = vadd.f32 %v4296, %v4297
    %v4299 = vsel %vm2961, %v3890, 0.0
    %v4300 = vadd.f32 %v4298, %v4299
    %v4301 = vsel %vm2961, %v3891, 0.0
    %v4302 = vadd.f32 %v4300, %v4301
    %v4303 = vsel %vm2961, %v3892, 0.0
    %v4304 = vadd.f32 %v4302, %v4303
    %v4305 = vsel %vm2961, %v3893, 0.0
    %v4306 = vadd.f32 %v4304, %v4305
    %v4307 = vsel %vm2961, %v3894, 0.0
    %v4308 = vadd.f32 %v4306, %v4307
    %v4309 = vsel %vm2961, %v3895, 0.0
    %v4310 = vadd.f32 %v4308, %v4309
    %v4311 = vsel %vm2961, %v3896, 0.0
    %v4312 = vadd.f32 %v4310, %v4311
    %v4313 = vsel %vm2961, %v3897, 0.0
    %v4314 = vadd.f32 %v4312, %v4313
    %v4315 = vsel %vm2961, %v3898, 0.0
    %v4316 = vadd.f32 %v4314, %v4315
    %v4317 = vsel %vm2961, %v3899, 0.0
    %v4318 = vadd.f32 %v4316, %v4317
    %v4319 = vsel %vm2961, %v3900, 0.0
    %v4320 = vadd.f32 %v4318, %v4319
    %v4321 = vsel %vm2961, %v3901, 0.0
    %v4322 = vadd.f32 %v4320, %v4321
    %v4323 = vsel %vm2961, %v3902, 0.0
    %v4324 = vadd.f32 %v4322, %v4323
    %v4325 = vsel %vm2961, %v3903, 0.0
    %v4326 = vadd.f32 %v4324, %v4325
    %v4327 = vsel %vm2961, %v3904, 0.0
    %v4328 = vadd.f32 %v4326, %v4327
    %v4329 = vsel %vm2961, %v3905, 0.0
    %v4330 = vadd.f32 %v4328, %v4329
    %v4331 = vsel %vm2961, %v3906, 0.0
    %v4332 = vadd.f32 %v4330, %v4331
    %v4333 = vsel %vm2961, %v3907, 0.0
    %v4334 = vadd.f32 %v4332, %v4333
    %v4335 = vsel %vm2961, %v3908, 0.0
    %v4336 = vadd.f32 %v4334, %v4335
    %v4337 = vsel %vm2961, %v3909, 0.0
    %v4338 = vadd.f32 %v4336, %v4337
    %v4339 = vsel %vm2961, %v3910, 0.0
    %v4340 = vadd.f32 %v4338, %v4339
    %v4341 = vsel %vm2961, %v3911, 0.0
    %v4342 = vadd.f32 %v4340, %v4341
    %v4343 = vsel %vm2961, %v3912, 0.0
    %v4344 = vadd.f32 %v4342, %v4343
    %v4345 = vsel %vm2961, %v3913, 0.0
    %v4346 = vadd.f32 %v4344, %v4345
    %v4347 = vsel %vm2961, %v3914, 0.0
    %v4348 = vadd.f32 %v4346, %v4347
    %v4349 = vsel %vm2961, %v3915, 0.0
    %v4350 = vadd.f32 %v4348, %v4349
    %v4351 = vsel %vm2961, %v3916, 0.0
    %v4352 = vadd.f32 %v4350, %v4351
    %v4353 = vsel %vm2961, %v3917, 0.0
    %v4354 = vadd.f32 %v4352, %v4353
    %v4355 = vsel %vm2961, %v3918, 0.0
    %v4356 = vadd.f32 %v4354, %v4355
    %v4357 = vsel %vm2961, %v3919, 0.0
    %v4358 = vadd.f32 %v4356, %v4357
    %v4359 = vsel %vm2961, %v3920, 0.0
    %v4360 = vadd.f32 %v4358, %v4359
    %v4361 = vsel %vm2961, %v3921, 0.0
    %v4362 = vadd.f32 %v4360, %v4361
    %v4363 = vsel %vm2961, %v3922, 0.0
    %v4364 = vadd.f32 %v4362, %v4363
    %v4365 = vsel %vm2961, %v3923, 0.0
    %v4366 = vadd.f32 %v4364, %v4365
    %v4367 = vsel %vm2961, %v3924, 0.0
    %v4368 = vadd.f32 %v4366, %v4367
    %v4369 = vsel %vm2961, %v3925, 0.0
    %v4370 = vadd.f32 %v4368, %v4369
    %v4371 = vsel %vm2961, %v3926, 0.0
    %v4372 = vadd.f32 %v4370, %v4371
    %v4373 = vsel %vm2961, %v3927, 0.0
    %v4374 = vadd.f32 %v4372, %v4373
    %v4375 = vsel %vm2961, %v3928, 0.0
    %v4376 = vadd.f32 %v4374, %v4375
    %v4377 = vsel %vm2961, %v3929, 0.0
    %v4378 = vadd.f32 %v4376, %v4377
    %v4379 = vsel %vm2961, %v3930, 0.0
    %v4380 = vadd.f32 %v4378, %v4379
    %v4381 = vsel %vm2961, %v3931, 0.0
    %v4382 = vadd.f32 %v4380, %v4381
    %v4383 = vsel %vm2961, %v3932, 0.0
    %v4384 = vadd.f32 %v4382, %v4383
    %v4385 = vsel %vm2961, %v3933, 0.0
    %v4386 = vadd.f32 %v4384, %v4385
    %v4387 = vsel %vm2961, %v3934, 0.0
    %v4388 = vadd.f32 %v4386, %v4387
    %v4389 = vsel %vm2961, %v3935, 0.0
    %v4390 = vadd.f32 %v4388, %v4389
    %v4391 = vsel %vm2961, %v3936, 0.0
    %v4392 = vadd.f32 %v4390, %v4391
    %v4393 = vsel %vm2961, %v3937, 0.0
    %v4394 = vadd.f32 %v4392, %v4393
    %v4395 = vsel %vm2961, %v3938, 0.0
    %v4396 = vadd.f32 %v4394, %v4395
    %v4397 = vsel %vm2961, %v3939, 0.0
    %v4398 = vadd.f32 %v4396, %v4397
    %v4399 = vsel %vm2961, %v3940, 0.0
    %v4400 = vadd.f32 %v4398, %v4399
    %v4401 = vsel %vm2961, %v3941, 0.0
    %v4402 = vadd.f32 %v4400, %v4401
    %v4403 = vsel %vm2961, %v3942, 0.0
    %v4404 = vadd.f32 %v4402, %v4403
    %v4405 = vsel %vm2961, %v3943, 0.0
    %v4406 = vadd.f32 %v4404, %v4405
    %v4407 = vsel %vm2961, %v3944, 0.0
    %v4408 = vadd.f32 %v4406, %v4407
    %v4409 = vsel %vm2961, %v3945, 0.0
    %v4410 = vadd.f32 %v4408, %v4409
    %v4411 = vsel %vm2961, %v3946, 0.0
    %v4412 = vadd.f32 %v4410, %v4411
    %v4413 = vsel %vm2961, %v3947, 0.0
    %v4414 = vadd.f32 %v4412, %v4413
    %v4415 = vsel %vm2961, %v3948, 0.0
    %v4416 = vadd.f32 %v4414, %v4415
    %v4417 = vsel %vm2961, %v3949, 0.0
    %v4418 = vadd.f32 %v4416, %v4417
    %v4419 = vsel %vm2961, %v3950, 0.0
    %v4420 = vadd.f32 %v4418, %v4419
    %v4421 = vsel %vm2961, %v3951, 0.0
    %v4422 = vadd.f32 %v4420, %v4421
    %v4423 = vsel %vm2961, %v3952, 0.0
    %v4424 = vadd.f32 %v4422, %v4423
    %v4425 = vsel %vm2961, %v3953, 0.0
    %v4426 = vadd.f32 %v4424, %v4425
    %v4427 = vsel %vm2961, %v3954, 0.0
    %v4428 = vadd.f32 %v4426, %v4427
    %v4429 = vsel %vm2961, %v3955, 0.0
    %v4430 = vadd.f32 %v4428, %v4429
    %v4431 = vsel %vm2961, %v3956, 0.0
    %v4432 = vadd.f32 %v4430, %v4431
    %v4433 = vsel %vm2961, %v3957, 0.0
    %v4434 = vadd.f32 %v4432, %v4433
    %v4435 = vsel %vm2961, %v3958, 0.0
    %v4436 = vadd.f32 %v4434, %v4435
    %v4437 = vsel %vm2961, %v3959, 0.0
    %v4438 = vadd.f32 %v4436, %v4437
    %v4439 = vsel %vm2961, %v3960, 0.0
    %v4440 = vadd.f32 %v4438, %v4439
    %v4441 = vsel %vm2961, %v3961, 0.0
    %v4442 = vadd.f32 %v4440, %v4441
    %v4443 = vsel %vm2961, %v3962, 0.0
    %v4444 = vadd.f32 %v4442, %v4443
    %v4445 = vsel %vm2961, %v3963, 0.0
    %v4446 = vadd.f32 %v4444, %v4445
    %v4447 = vsel %vm2961, %v3964, 0.0
    %v4448 = vadd.f32 %v4446, %v4447
    %v4449 = vsel %vm2961, %v3965, 0.0
    %v4450 = vadd.f32 %v4448, %v4449
    %v4451 = vsel %vm2961, %v3966, 0.0
    %v4452 = vadd.f32 %v4450, %v4451
    %v4453 = vsel %vm2961, %v3967, 0.0
    %v4454 = vadd.f32 %v4452, %v4453
    %v4455 = vsel %vm2961, %v3968, 0.0
    %v4456 = vadd.f32 %v4454, %v4455
    %v4457 = vsel %vm2961, %v3969, 0.0
    %v4458 = vadd.f32 %v4456, %v4457
    %v4459 = vsel %vm2961, %v3970, 0.0
    %v4460 = vadd.f32 %v4458, %v4459
    %v4461 = vsel %vm2961, %v3971, 0.0
    %v4462 = vadd.f32 %v4460, %v4461
    %v4463 = vsel %vm2961, %v3972, 0.0
    %v4464 = vadd.f32 %v4462, %v4463
    %v4465 = vsel %vm2961, %v3973, 0.0
    %v4466 = vadd.f32 %v4464, %v4465
    %v4467 = vsel %vm2961, %v3974, 0.0
    %v4468 = vadd.f32 %v4466, %v4467
    %v4469 = vsel %vm2961, %v3975, 0.0
    %v4470 = vadd.f32 %v4468, %v4469
    %v4471 = vsel %vm2961, %v3976, 0.0
    %v4472 = vadd.f32 %v4470, %v4471
    %v4473 = vsel %vm2961, %v3977, 0.0
    %v4474 = vadd.f32 %v4472, %v4473
    %v4475 = vsel %vm2961, %v3978, 0.0
    %v4476 = vadd.f32 %v4474, %v4475
    %v4477 = vsel %vm2961, %v3979, 0.0
    %v4478 = vadd.f32 %v4476, %v4477
    %v4479 = vsel %vm2961, %v3980, 0.0
    %v4480 = vadd.f32 %v4478, %v4479
    %v4481 = vsel %vm2961, %v3981, 0.0
    %v4482 = vadd.f32 %v4480, %v4481
    %v4483 = vsel %vm2961, %v3982, 0.0
    %v4484 = vadd.f32 %v4482, %v4483
    %v4485 = vsel %vm2961, %v3983, 0.0
    %v4486 = vadd.f32 %v4484, %v4485
    %v4487 = vsel %vm2961, %v3984, 0.0
    %v4488 = vadd.f32 %v4486, %v4487
    %v4489 = vsel %vm2961, %v3985, 0.0
    %v4490 = vadd.f32 %v4488, %v4489
    %v4491 = vsel %vm2961, %v3986, 0.0
    %v4492 = vadd.f32 %v4490, %v4491
    %v4493 = vsel %vm2961, %v3987, 0.0
    %v4494 = vadd.f32 %v4492, %v4493
    %v4495 = vsel %vm2961, %v3988, 0.0
    %v4496 = vadd.f32 %v4494, %v4495
    %v4497 = vsel %vm2961, %v3989, 0.0
    %v4498 = vadd.f32 %v4496, %v4497
    %v4499 = vsel %vm2961, %v3990, 0.0
    %v4500 = vadd.f32 %v4498, %v4499
    %v4501 = vsel %vm2961, %v3991, 0.0
    %v4502 = vadd.f32 %v4500, %v4501
    %v4503 = vrot.slane %v4502, 4
    %v4504 = vadd.f32 %v4502, %v4503
    %v4505 = vrot.slane %v4504, 2
    %v4506 = vadd.f32 %v4504, %v4505
    %v4507 = vrot.slane %v4506, 1
    %v4508 = vadd.f32 %v4506, %v4507
    %v4509 = vmul.f32 %v4508, 0.00048828125
    %v4510 = vadd.f32 %v4509, 1e-05
    %v4511 = vrsqrt.pop %v4510
    %v4512 = vmul.f32 %v2959, %v4511
    %v4514 = vlaneseq
    %v4515 = vshrl.u32 %v4514, 7
    %v4516 = vsub.s32 0, %v4515
    %v4517 = vrot.slane %v4512, %v4516
    %v4519 = vmul.f32 %v3480, %v4517
    %v4520 = vmul.f32 %v3481, %v4517
    %v4521 = vmul.f32 %v3482, %v4517
    %v4522 = vmul.f32 %v3483, %v4517
    %v4523 = vmul.f32 %v3484, %v4517
    %v4524 = vmul.f32 %v3485, %v4517
    %v4525 = vmul.f32 %v3486, %v4517
    %v4526 = vmul.f32 %v3487, %v4517
    %v4527 = vmul.f32 %v3488, %v4517
    %v4528 = vmul.f32 %v3489, %v4517
    %v4529 = vmul.f32 %v3490, %v4517
    %v4530 = vmul.f32 %v3491, %v4517
    %v4531 = vmul.f32 %v3492, %v4517
    %v4532 = vmul.f32 %v3493, %v4517
    %v4533 = vmul.f32 %v3494, %v4517
    %v4534 = vmul.f32 %v3495, %v4517
    %v4535 = vmul.f32 %v3496, %v4517
    %v4536 = vmul.f32 %v3497, %v4517
    %v4537 = vmul.f32 %v3498, %v4517
    %v4538 = vmul.f32 %v3499, %v4517
    %v4539 = vmul.f32 %v3500, %v4517
    %v4540 = vmul.f32 %v3501, %v4517
    %v4541 = vmul.f32 %v3502, %v4517
    %v4542 = vmul.f32 %v3503, %v4517
    %v4543 = vmul.f32 %v3504, %v4517
    %v4544 = vmul.f32 %v3505, %v4517
    %v4545 = vmul.f32 %v3506, %v4517
    %v4546 = vmul.f32 %v3507, %v4517
    %v4547 = vmul.f32 %v3508, %v4517
    %v4548 = vmul.f32 %v3509, %v4517
    %v4549 = vmul.f32 %v3510, %v4517
    %v4550 = vmul.f32 %v3511, %v4517
    %v4551 = vmul.f32 %v3512, %v4517
    %v4552 = vmul.f32 %v3513, %v4517
    %v4553 = vmul.f32 %v3514, %v4517
    %v4554 = vmul.f32 %v3515, %v4517
    %v4555 = vmul.f32 %v3516, %v4517
    %v4556 = vmul.f32 %v3517, %v4517
    %v4557 = vmul.f32 %v3518, %v4517
    %v4558 = vmul.f32 %v3519, %v4517
    %v4559 = vmul.f32 %v3520, %v4517
    %v4560 = vmul.f32 %v3521, %v4517
    %v4561 = vmul.f32 %v3522, %v4517
    %v4562 = vmul.f32 %v3523, %v4517
    %v4563 = vmul.f32 %v3524, %v4517
    %v4564 = vmul.f32 %v3525, %v4517
    %v4565 = vmul.f32 %v3526, %v4517
    %v4566 = vmul.f32 %v3527, %v4517
    %v4567 = vmul.f32 %v3528, %v4517
    %v4568 = vmul.f32 %v3529, %v4517
    %v4569 = vmul.f32 %v3530, %v4517
    %v4570 = vmul.f32 %v3531, %v4517
    %v4571 = vmul.f32 %v3532, %v4517
    %v4572 = vmul.f32 %v3533, %v4517
    %v4573 = vmul.f32 %v3534, %v4517
    %v4574 = vmul.f32 %v3535, %v4517
    %v4575 = vmul.f32 %v3536, %v4517
    %v4576 = vmul.f32 %v3537, %v4517
    %v4577 = vmul.f32 %v3538, %v4517
    %v4578 = vmul.f32 %v3539, %v4517
    %v4579 = vmul.f32 %v3540, %v4517
    %v4580 = vmul.f32 %v3541, %v4517
    %v4581 = vmul.f32 %v3542, %v4517
    %v4582 = vmul.f32 %v3543, %v4517
    %v4583 = vmul.f32 %v3544, %v4517
    %v4584 = vmul.f32 %v3545, %v4517
    %v4585 = vmul.f32 %v3546, %v4517
    %v4586 = vmul.f32 %v3547, %v4517
    %v4587 = vmul.f32 %v3548, %v4517
    %v4588 = vmul.f32 %v3549, %v4517
    %v4589 = vmul.f32 %v3550, %v4517
    %v4590 = vmul.f32 %v3551, %v4517
    %v4591 = vmul.f32 %v3552, %v4517
    %v4592 = vmul.f32 %v3553, %v4517
    %v4593 = vmul.f32 %v3554, %v4517
    %v4594 = vmul.f32 %v3555, %v4517
    %v4595 = vmul.f32 %v3556, %v4517
    %v4596 = vmul.f32 %v3557, %v4517
    %v4597 = vmul.f32 %v3558, %v4517
    %v4598 = vmul.f32 %v3559, %v4517
    %v4599 = vmul.f32 %v3560, %v4517
    %v4600 = vmul.f32 %v3561, %v4517
    %v4601 = vmul.f32 %v3562, %v4517
    %v4602 = vmul.f32 %v3563, %v4517
    %v4603 = vmul.f32 %v3564, %v4517
    %v4604 = vmul.f32 %v3565, %v4517
    %v4605 = vmul.f32 %v3566, %v4517
    %v4606 = vmul.f32 %v3567, %v4517
    %v4607 = vmul.f32 %v3568, %v4517
    %v4608 = vmul.f32 %v3569, %v4517
    %v4609 = vmul.f32 %v3570, %v4517
    %v4610 = vmul.f32 %v3571, %v4517
    %v4611 = vmul.f32 %v3572, %v4517
    %v4612 = vmul.f32 %v3573, %v4517
    %v4613 = vmul.f32 %v3574, %v4517
    %v4614 = vmul.f32 %v3575, %v4517
    %v4615 = vmul.f32 %v3576, %v4517
    %v4616 = vmul.f32 %v3577, %v4517
    %v4617 = vmul.f32 %v3578, %v4517
    %v4618 = vmul.f32 %v3579, %v4517
    %v4619 = vmul.f32 %v3580, %v4517
    %v4620 = vmul.f32 %v3581, %v4517
    %v4621 = vmul.f32 %v3582, %v4517
    %v4622 = vmul.f32 %v3583, %v4517
    %v4623 = vmul.f32 %v3584, %v4517
    %v4624 = vmul.f32 %v3585, %v4517
    %v4625 = vmul.f32 %v3586, %v4517
    %v4626 = vmul.f32 %v3587, %v4517
    %v4627 = vmul.f32 %v3588, %v4517
    %v4628 = vmul.f32 %v3589, %v4517
    %v4629 = vmul.f32 %v3590, %v4517
    %v4630 = vmul.f32 %v3591, %v4517
    %v4631 = vmul.f32 %v3592, %v4517
    %v4632 = vmul.f32 %v3593, %v4517
    %v4633 = vmul.f32 %v3594, %v4517
    %v4634 = vmul.f32 %v3595, %v4517
    %v4635 = vmul.f32 %v3596, %v4517
    %v4636 = vmul.f32 %v3597, %v4517
    %v4637 = vmul.f32 %v3598, %v4517
    %v4638 = vmul.f32 %v3599, %v4517
    %v4639 = vmul.f32 %v3600, %v4517
    %v4640 = vmul.f32 %v3601, %v4517
    %v4641 = vmul.f32 %v3602, %v4517
    %v4642 = vmul.f32 %v3603, %v4517
    %v4643 = vmul.f32 %v3604, %v4517
    %v4644 = vmul.f32 %v3605, %v4517
    %v4645 = vmul.f32 %v3606, %v4517
    %v4646 = vmul.f32 %v3607, %v4517
    %v4647 = vmul.f32 %v3608, %v4517
    %v4648 = vmul.f32 %v3609, %v4517
    %v4649 = vmul.f32 %v3610, %v4517
    %v4650 = vmul.f32 %v3611, %v4517
    %v4651 = vmul.f32 %v3612, %v4517
    %v4652 = vmul.f32 %v3613, %v4517
    %v4653 = vmul.f32 %v3614, %v4517
    %v4654 = vmul.f32 %v3615, %v4517
    %v4655 = vmul.f32 %v3616, %v4517
    %v4656 = vmul.f32 %v3617, %v4517
    %v4657 = vmul.f32 %v3618, %v4517
    %v4658 = vmul.f32 %v3619, %v4517
    %v4659 = vmul.f32 %v3620, %v4517
    %v4660 = vmul.f32 %v3621, %v4517
    %v4661 = vmul.f32 %v3622, %v4517
    %v4662 = vmul.f32 %v3623, %v4517
    %v4663 = vmul.f32 %v3624, %v4517
    %v4664 = vmul.f32 %v3625, %v4517
    %v4665 = vmul.f32 %v3626, %v4517
    %v4666 = vmul.f32 %v3627, %v4517
    %v4667 = vmul.f32 %v3628, %v4517
    %v4668 = vmul.f32 %v3629, %v4517
    %v4669 = vmul.f32 %v3630, %v4517
    %v4670 = vmul.f32 %v3631, %v4517
    %v4671 = vmul.f32 %v3632, %v4517
    %v4672 = vmul.f32 %v3633, %v4517
    %v4673 = vmul.f32 %v3634, %v4517
    %v4674 = vmul.f32 %v3635, %v4517
    %v4675 = vmul.f32 %v3636, %v4517
    %v4676 = vmul.f32 %v3637, %v4517
    %v4677 = vmul.f32 %v3638, %v4517
    %v4678 = vmul.f32 %v3639, %v4517
    %v4679 = vmul.f32 %v3640, %v4517
    %v4680 = vmul.f32 %v3641, %v4517
    %v4681 = vmul.f32 %v3642, %v4517
    %v4682 = vmul.f32 %v3643, %v4517
    %v4683 = vmul.f32 %v3644, %v4517
    %v4684 = vmul.f32 %v3645, %v4517
    %v4685 = vmul.f32 %v3646, %v4517
    %v4686 = vmul.f32 %v3647, %v4517
    %v4687 = vmul.f32 %v3648, %v4517
    %v4688 = vmul.f32 %v3649, %v4517
    %v4689 = vmul.f32 %v3650, %v4517
    %v4690 = vmul.f32 %v3651, %v4517
    %v4691 = vmul.f32 %v3652, %v4517
    %v4692 = vmul.f32 %v3653, %v4517
    %v4693 = vmul.f32 %v3654, %v4517
    %v4694 = vmul.f32 %v3655, %v4517
    %v4695 = vmul.f32 %v3656, %v4517
    %v4696 = vmul.f32 %v3657, %v4517
    %v4697 = vmul.f32 %v3658, %v4517
    %v4698 = vmul.f32 %v3659, %v4517
    %v4699 = vmul.f32 %v3660, %v4517
    %v4700 = vmul.f32 %v3661, %v4517
    %v4701 = vmul.f32 %v3662, %v4517
    %v4702 = vmul.f32 %v3663, %v4517
    %v4703 = vmul.f32 %v3664, %v4517
    %v4704 = vmul.f32 %v3665, %v4517
    %v4705 = vmul.f32 %v3666, %v4517
    %v4706 = vmul.f32 %v3667, %v4517
    %v4707 = vmul.f32 %v3668, %v4517
    %v4708 = vmul.f32 %v3669, %v4517
    %v4709 = vmul.f32 %v3670, %v4517
    %v4710 = vmul.f32 %v3671, %v4517
    %v4711 = vmul.f32 %v3672, %v4517
    %v4712 = vmul.f32 %v3673, %v4517
    %v4713 = vmul.f32 %v3674, %v4517
    %v4714 = vmul.f32 %v3675, %v4517
    %v4715 = vmul.f32 %v3676, %v4517
    %v4716 = vmul.f32 %v3677, %v4517
    %v4717 = vmul.f32 %v3678, %v4517
    %v4718 = vmul.f32 %v3679, %v4517
    %v4719 = vmul.f32 %v3680, %v4517
    %v4720 = vmul.f32 %v3681, %v4517
    %v4721 = vmul.f32 %v3682, %v4517
    %v4722 = vmul.f32 %v3683, %v4517
    %v4723 = vmul.f32 %v3684, %v4517
    %v4724 = vmul.f32 %v3685, %v4517
    %v4725 = vmul.f32 %v3686, %v4517
    %v4726 = vmul.f32 %v3687, %v4517
    %v4727 = vmul.f32 %v3688, %v4517
    %v4728 = vmul.f32 %v3689, %v4517
    %v4729 = vmul.f32 %v3690, %v4517
    %v4730 = vmul.f32 %v3691, %v4517
    %v4731 = vmul.f32 %v3692, %v4517
    %v4732 = vmul.f32 %v3693, %v4517
    %v4733 = vmul.f32 %v3694, %v4517
    %v4734 = vmul.f32 %v3695, %v4517
    %v4735 = vmul.f32 %v3696, %v4517
    %v4736 = vmul.f32 %v3697, %v4517
    %v4737 = vmul.f32 %v3698, %v4517
    %v4738 = vmul.f32 %v3699, %v4517
    %v4739 = vmul.f32 %v3700, %v4517
    %v4740 = vmul.f32 %v3701, %v4517
    %v4741 = vmul.f32 %v3702, %v4517
    %v4742 = vmul.f32 %v3703, %v4517
    %v4743 = vmul.f32 %v3704, %v4517
    %v4744 = vmul.f32 %v3705, %v4517
    %v4745 = vmul.f32 %v3706, %v4517
    %v4746 = vmul.f32 %v3707, %v4517
    %v4747 = vmul.f32 %v3708, %v4517
    %v4748 = vmul.f32 %v3709, %v4517
    %v4749 = vmul.f32 %v3710, %v4517
    %v4750 = vmul.f32 %v3711, %v4517
    %v4751 = vmul.f32 %v3712, %v4517
    %v4752 = vmul.f32 %v3713, %v4517
    %v4753 = vmul.f32 %v3714, %v4517
    %v4754 = vmul.f32 %v3715, %v4517
    %v4755 = vmul.f32 %v3716, %v4517
    %v4756 = vmul.f32 %v3717, %v4517
    %v4757 = vmul.f32 %v3718, %v4517
    %v4758 = vmul.f32 %v3719, %v4517
    %v4759 = vmul.f32 %v3720, %v4517
    %v4760 = vmul.f32 %v3721, %v4517
    %v4761 = vmul.f32 %v3722, %v4517
    %v4762 = vmul.f32 %v3723, %v4517
    %v4763 = vmul.f32 %v3724, %v4517
    %v4764 = vmul.f32 %v3725, %v4517
    %v4765 = vmul.f32 %v3726, %v4517
    %v4766 = vmul.f32 %v3727, %v4517
    %v4767 = vmul.f32 %v3728, %v4517
    %v4768 = vmul.f32 %v3729, %v4517
    %v4769 = vmul.f32 %v3730, %v4517
    %v4770 = vmul.f32 %v3731, %v4517
    %v4771 = vmul.f32 %v3732, %v4517
    %v4772 = vmul.f32 %v3733, %v4517
    %v4773 = vmul.f32 %v3734, %v4517
    %v4774 = vmul.f32 %v3735, %v4517
    %v4776 = vlaneseq
    %v4777 = vshrl.u32 %v4776, 7
    %v4778 = vsub.s32 0, %v4777
    %v4779 = vrot.slane %v2960, %v4778
    %v4781 = vadd.f32 %v4519, %v4779
    %v4782 = vadd.f32 %v4520, %v4779
    %v4783 = vadd.f32 %v4521, %v4779
    %v4784 = vadd.f32 %v4522, %v4779
    %v4785 = vadd.f32 %v4523, %v4779
    %v4786 = vadd.f32 %v4524, %v4779
    %v4787 = vadd.f32 %v4525, %v4779
    %v4788 = vadd.f32 %v4526, %v4779
    %v4789 = vadd.f32 %v4527, %v4779
    %v4790 = vadd.f32 %v4528, %v4779
    %v4791 = vadd.f32 %v4529, %v4779
    %v4792 = vadd.f32 %v4530, %v4779
    %v4793 = vadd.f32 %v4531, %v4779
    %v4794 = vadd.f32 %v4532, %v4779
    %v4795 = vadd.f32 %v4533, %v4779
    %v4796 = vadd.f32 %v4534, %v4779
    %v4797 = vadd.f32 %v4535, %v4779
    %v4798 = vadd.f32 %v4536, %v4779
    %v4799 = vadd.f32 %v4537, %v4779
    %v4800 = vadd.f32 %v4538, %v4779
    %v4801 = vadd.f32 %v4539, %v4779
    %v4802 = vadd.f32 %v4540, %v4779
    %v4803 = vadd.f32 %v4541, %v4779
    %v4804 = vadd.f32 %v4542, %v4779
    %v4805 = vadd.f32 %v4543, %v4779
    %v4806 = vadd.f32 %v4544, %v4779
    %v4807 = vadd.f32 %v4545, %v4779
    %v4808 = vadd.f32 %v4546, %v4779
    %v4809 = vadd.f32 %v4547, %v4779
    %v4810 = vadd.f32 %v4548, %v4779
    %v4811 = vadd.f32 %v4549, %v4779
    %v4812 = vadd.f32 %v4550, %v4779
    %v4813 = vadd.f32 %v4551, %v4779
    %v4814 = vadd.f32 %v4552, %v4779
    %v4815 = vadd.f32 %v4553, %v4779
    %v4816 = vadd.f32 %v4554, %v4779
    %v4817 = vadd.f32 %v4555, %v4779
    %v4818 = vadd.f32 %v4556, %v4779
    %v4819 = vadd.f32 %v4557, %v4779
    %v4820 = vadd.f32 %v4558, %v4779
    %v4821 = vadd.f32 %v4559, %v4779
    %v4822 = vadd.f32 %v4560, %v4779
    %v4823 = vadd.f32 %v4561, %v4779
    %v4824 = vadd.f32 %v4562, %v4779
    %v4825 = vadd.f32 %v4563, %v4779
    %v4826 = vadd.f32 %v4564, %v4779
    %v4827 = vadd.f32 %v4565, %v4779
    %v4828 = vadd.f32 %v4566, %v4779
    %v4829 = vadd.f32 %v4567, %v4779
    %v4830 = vadd.f32 %v4568, %v4779
    %v4831 = vadd.f32 %v4569, %v4779
    %v4832 = vadd.f32 %v4570, %v4779
    %v4833 = vadd.f32 %v4571, %v4779
    %v4834 = vadd.f32 %v4572, %v4779
    %v4835 = vadd.f32 %v4573, %v4779
    %v4836 = vadd.f32 %v4574, %v4779
    %v4837 = vadd.f32 %v4575, %v4779
    %v4838 = vadd.f32 %v4576, %v4779
    %v4839 = vadd.f32 %v4577, %v4779
    %v4840 = vadd.f32 %v4578, %v4779
    %v4841 = vadd.f32 %v4579, %v4779
    %v4842 = vadd.f32 %v4580, %v4779
    %v4843 = vadd.f32 %v4581, %v4779
    %v4844 = vadd.f32 %v4582, %v4779
    %v4845 = vadd.f32 %v4583, %v4779
    %v4846 = vadd.f32 %v4584, %v4779
    %v4847 = vadd.f32 %v4585, %v4779
    %v4848 = vadd.f32 %v4586, %v4779
    %v4849 = vadd.f32 %v4587, %v4779
    %v4850 = vadd.f32 %v4588, %v4779
    %v4851 = vadd.f32 %v4589, %v4779
    %v4852 = vadd.f32 %v4590, %v4779
    %v4853 = vadd.f32 %v4591, %v4779
    %v4854 = vadd.f32 %v4592, %v4779
    %v4855 = vadd.f32 %v4593, %v4779
    %v4856 = vadd.f32 %v4594, %v4779
    %v4857 = vadd.f32 %v4595, %v4779
    %v4858 = vadd.f32 %v4596, %v4779
    %v4859 = vadd.f32 %v4597, %v4779
    %v4860 = vadd.f32 %v4598, %v4779
    %v4861 = vadd.f32 %v4599, %v4779
    %v4862 = vadd.f32 %v4600, %v4779
    %v4863 = vadd.f32 %v4601, %v4779
    %v4864 = vadd.f32 %v4602, %v4779
    %v4865 = vadd.f32 %v4603, %v4779
    %v4866 = vadd.f32 %v4604, %v4779
    %v4867 = vadd.f32 %v4605, %v4779
    %v4868 = vadd.f32 %v4606, %v4779
    %v4869 = vadd.f32 %v4607, %v4779
    %v4870 = vadd.f32 %v4608, %v4779
    %v4871 = vadd.f32 %v4609, %v4779
    %v4872 = vadd.f32 %v4610, %v4779
    %v4873 = vadd.f32 %v4611, %v4779
    %v4874 = vadd.f32 %v4612, %v4779
    %v4875 = vadd.f32 %v4613, %v4779
    %v4876 = vadd.f32 %v4614, %v4779
    %v4877 = vadd.f32 %v4615, %v4779
    %v4878 = vadd.f32 %v4616, %v4779
    %v4879 = vadd.f32 %v4617, %v4779
    %v4880 = vadd.f32 %v4618, %v4779
    %v4881 = vadd.f32 %v4619, %v4779
    %v4882 = vadd.f32 %v4620, %v4779
    %v4883 = vadd.f32 %v4621, %v4779
    %v4884 = vadd.f32 %v4622, %v4779
    %v4885 = vadd.f32 %v4623, %v4779
    %v4886 = vadd.f32 %v4624, %v4779
    %v4887 = vadd.f32 %v4625, %v4779
    %v4888 = vadd.f32 %v4626, %v4779
    %v4889 = vadd.f32 %v4627, %v4779
    %v4890 = vadd.f32 %v4628, %v4779
    %v4891 = vadd.f32 %v4629, %v4779
    %v4892 = vadd.f32 %v4630, %v4779
    %v4893 = vadd.f32 %v4631, %v4779
    %v4894 = vadd.f32 %v4632, %v4779
    %v4895 = vadd.f32 %v4633, %v4779
    %v4896 = vadd.f32 %v4634, %v4779
    %v4897 = vadd.f32 %v4635, %v4779
    %v4898 = vadd.f32 %v4636, %v4779
    %v4899 = vadd.f32 %v4637, %v4779
    %v4900 = vadd.f32 %v4638, %v4779
    %v4901 = vadd.f32 %v4639, %v4779
    %v4902 = vadd.f32 %v4640, %v4779
    %v4903 = vadd.f32 %v4641, %v4779
    %v4904 = vadd.f32 %v4642, %v4779
    %v4905 = vadd.f32 %v4643, %v4779
    %v4906 = vadd.f32 %v4644, %v4779
    %v4907 = vadd.f32 %v4645, %v4779
    %v4908 = vadd.f32 %v4646, %v4779
    %v4909 = vadd.f32 %v4647, %v4779
    %v4910 = vadd.f32 %v4648, %v4779
    %v4911 = vadd.f32 %v4649, %v4779
    %v4912 = vadd.f32 %v4650, %v4779
    %v4913 = vadd.f32 %v4651, %v4779
    %v4914 = vadd.f32 %v4652, %v4779
    %v4915 = vadd.f32 %v4653, %v4779
    %v4916 = vadd.f32 %v4654, %v4779
    %v4917 = vadd.f32 %v4655, %v4779
    %v4918 = vadd.f32 %v4656, %v4779
    %v4919 = vadd.f32 %v4657, %v4779
    %v4920 = vadd.f32 %v4658, %v4779
    %v4921 = vadd.f32 %v4659, %v4779
    %v4922 = vadd.f32 %v4660, %v4779
    %v4923 = vadd.f32 %v4661, %v4779
    %v4924 = vadd.f32 %v4662, %v4779
    %v4925 = vadd.f32 %v4663, %v4779
    %v4926 = vadd.f32 %v4664, %v4779
    %v4927 = vadd.f32 %v4665, %v4779
    %v4928 = vadd.f32 %v4666, %v4779
    %v4929 = vadd.f32 %v4667, %v4779
    %v4930 = vadd.f32 %v4668, %v4779
    %v4931 = vadd.f32 %v4669, %v4779
    %v4932 = vadd.f32 %v4670, %v4779
    %v4933 = vadd.f32 %v4671, %v4779
    %v4934 = vadd.f32 %v4672, %v4779
    %v4935 = vadd.f32 %v4673, %v4779
    %v4936 = vadd.f32 %v4674, %v4779
    %v4937 = vadd.f32 %v4675, %v4779
    %v4938 = vadd.f32 %v4676, %v4779
    %v4939 = vadd.f32 %v4677, %v4779
    %v4940 = vadd.f32 %v4678, %v4779
    %v4941 = vadd.f32 %v4679, %v4779
    %v4942 = vadd.f32 %v4680, %v4779
    %v4943 = vadd.f32 %v4681, %v4779
    %v4944 = vadd.f32 %v4682, %v4779
    %v4945 = vadd.f32 %v4683, %v4779
    %v4946 = vadd.f32 %v4684, %v4779
    %v4947 = vadd.f32 %v4685, %v4779
    %v4948 = vadd.f32 %v4686, %v4779
    %v4949 = vadd.f32 %v4687, %v4779
    %v4950 = vadd.f32 %v4688, %v4779
    %v4951 = vadd.f32 %v4689, %v4779
    %v4952 = vadd.f32 %v4690, %v4779
    %v4953 = vadd.f32 %v4691, %v4779
    %v4954 = vadd.f32 %v4692, %v4779
    %v4955 = vadd.f32 %v4693, %v4779
    %v4956 = vadd.f32 %v4694, %v4779
    %v4957 = vadd.f32 %v4695, %v4779
    %v4958 = vadd.f32 %v4696, %v4779
    %v4959 = vadd.f32 %v4697, %v4779
    %v4960 = vadd.f32 %v4698, %v4779
    %v4961 = vadd.f32 %v4699, %v4779
    %v4962 = vadd.f32 %v4700, %v4779
    %v4963 = vadd.f32 %v4701, %v4779
    %v4964 = vadd.f32 %v4702, %v4779
    %v4965 = vadd.f32 %v4703, %v4779
    %v4966 = vadd.f32 %v4704, %v4779
    %v4967 = vadd.f32 %v4705, %v4779
    %v4968 = vadd.f32 %v4706, %v4779
    %v4969 = vadd.f32 %v4707, %v4779
    %v4970 = vadd.f32 %v4708, %v4779
    %v4971 = vadd.f32 %v4709, %v4779
    %v4972 = vadd.f32 %v4710, %v4779
    %v4973 = vadd.f32 %v4711, %v4779
    %v4974 = vadd.f32 %v4712, %v4779
    %v4975 = vadd.f32 %v4713, %v4779
    %v4976 = vadd.f32 %v4714, %v4779
    %v4977 = vadd.f32 %v4715, %v4779
    %v4978 = vadd.f32 %v4716, %v4779
    %v4979 = vadd.f32 %v4717, %v4779
    %v4980 = vadd.f32 %v4718, %v4779
    %v4981 = vadd.f32 %v4719, %v4779
    %v4982 = vadd.f32 %v4720, %v4779
    %v4983 = vadd.f32 %v4721, %v4779
    %v4984 = vadd.f32 %v4722, %v4779
    %v4985 = vadd.f32 %v4723, %v4779
    %v4986 = vadd.f32 %v4724, %v4779
    %v4987 = vadd.f32 %v4725, %v4779
    %v4988 = vadd.f32 %v4726, %v4779
    %v4989 = vadd.f32 %v4727, %v4779
    %v4990 = vadd.f32 %v4728, %v4779
    %v4991 = vadd.f32 %v4729, %v4779
    %v4992 = vadd.f32 %v4730, %v4779
    %v4993 = vadd.f32 %v4731, %v4779
    %v4994 = vadd.f32 %v4732, %v4779
    %v4995 = vadd.f32 %v4733, %v4779
    %v4996 = vadd.f32 %v4734, %v4779
    %v4997 = vadd.f32 %v4735, %v4779
    %v4998 = vadd.f32 %v4736, %v4779
    %v4999 = vadd.f32 %v4737, %v4779
    %v5000 = vadd.f32 %v4738, %v4779
    %v5001 = vadd.f32 %v4739, %v4779
    %v5002 = vadd.f32 %v4740, %v4779
    %v5003 = vadd.f32 %v4741, %v4779
    %v5004 = vadd.f32 %v4742, %v4779
    %v5005 = vadd.f32 %v4743, %v4779
    %v5006 = vadd.f32 %v4744, %v4779
    %v5007 = vadd.f32 %v4745, %v4779
    %v5008 = vadd.f32 %v4746, %v4779
    %v5009 = vadd.f32 %v4747, %v4779
    %v5010 = vadd.f32 %v4748, %v4779
    %v5011 = vadd.f32 %v4749, %v4779
    %v5012 = vadd.f32 %v4750, %v4779
    %v5013 = vadd.f32 %v4751, %v4779
    %v5014 = vadd.f32 %v4752, %v4779
    %v5015 = vadd.f32 %v4753, %v4779
    %v5016 = vadd.f32 %v4754, %v4779
    %v5017 = vadd.f32 %v4755, %v4779
    %v5018 = vadd.f32 %v4756, %v4779
    %v5019 = vadd.f32 %v4757, %v4779
    %v5020 = vadd.f32 %v4758, %v4779
    %v5021 = vadd.f32 %v4759, %v4779
    %v5022 = vadd.f32 %v4760, %v4779
    %v5023 = vadd.f32 %v4761, %v4779
    %v5024 = vadd.f32 %v4762, %v4779
    %v5025 = vadd.f32 %v4763, %v4779
    %v5026 = vadd.f32 %v4764, %v4779
    %v5027 = vadd.f32 %v4765, %v4779
    %v5028 = vadd.f32 %v4766, %v4779
    %v5029 = vadd.f32 %v4767, %v4779
    %v5030 = vadd.f32 %v4768, %v4779
    %v5031 = vadd.f32 %v4769, %v4779
    %v5032 = vadd.f32 %v4770, %v4779
    %v5033 = vadd.f32 %v4771, %v4779
    %v5034 = vadd.f32 %v4772, %v4779
    %v5035 = vadd.f32 %v4773, %v4779
    %v5036 = vadd.f32 %v4774, %v4779
    %v5037 = vmax.f32 %v4781, 0.0
    %v5038 = vmax.f32 %v4782, 0.0
    %v5039 = vmax.f32 %v4783, 0.0
    %v5040 = vmax.f32 %v4784, 0.0
    %v5041 = vmax.f32 %v4785, 0.0
    %v5042 = vmax.f32 %v4786, 0.0
    %v5043 = vmax.f32 %v4787, 0.0
    %v5044 = vmax.f32 %v4788, 0.0
    %v5045 = vmax.f32 %v4789, 0.0
    %v5046 = vmax.f32 %v4790, 0.0
    %v5047 = vmax.f32 %v4791, 0.0
    %v5048 = vmax.f32 %v4792, 0.0
    %v5049 = vmax.f32 %v4793, 0.0
    %v5050 = vmax.f32 %v4794, 0.0
    %v5051 = vmax.f32 %v4795, 0.0
    %v5052 = vmax.f32 %v4796, 0.0
    %v5053 = vmax.f32 %v4797, 0.0
    %v5054 = vmax.f32 %v4798, 0.0
    %v5055 = vmax.f32 %v4799, 0.0
    %v5056 = vmax.f32 %v4800, 0.0
    %v5057 = vmax.f32 %v4801, 0.0
    %v5058 = vmax.f32 %v4802, 0.0
    %v5059 = vmax.f32 %v4803, 0.0
    %v5060 = vmax.f32 %v4804, 0.0
    %v5061 = vmax.f32 %v4805, 0.0
    %v5062 = vmax.f32 %v4806, 0.0
    %v5063 = vmax.f32 %v4807, 0.0
    %v5064 = vmax.f32 %v4808, 0.0
    %v5065 = vmax.f32 %v4809, 0.0
    %v5066 = vmax.f32 %v4810, 0.0
    %v5067 = vmax.f32 %v4811, 0.0
    %v5068 = vmax.f32 %v4812, 0.0
    %v5069 = vmax.f32 %v4813, 0.0
    %v5070 = vmax.f32 %v4814, 0.0
    %v5071 = vmax.f32 %v4815, 0.0
    %v5072 = vmax.f32 %v4816, 0.0
    %v5073 = vmax.f32 %v4817, 0.0
    %v5074 = vmax.f32 %v4818, 0.0
    %v5075 = vmax.f32 %v4819, 0.0
    %v5076 = vmax.f32 %v4820, 0.0
    %v5077 = vmax.f32 %v4821, 0.0
    %v5078 = vmax.f32 %v4822, 0.0
    %v5079 = vmax.f32 %v4823, 0.0
    %v5080 = vmax.f32 %v4824, 0.0
    %v5081 = vmax.f32 %v4825, 0.0
    %v5082 = vmax.f32 %v4826, 0.0
    %v5083 = vmax.f32 %v4827, 0.0
    %v5084 = vmax.f32 %v4828, 0.0
    %v5085 = vmax.f32 %v4829, 0.0
    %v5086 = vmax.f32 %v4830, 0.0
    %v5087 = vmax.f32 %v4831, 0.0
    %v5088 = vmax.f32 %v4832, 0.0
    %v5089 = vmax.f32 %v4833, 0.0
    %v5090 = vmax.f32 %v4834, 0.0
    %v5091 = vmax.f32 %v4835, 0.0
    %v5092 = vmax.f32 %v4836, 0.0
    %v5093 = vmax.f32 %v4837, 0.0
    %v5094 = vmax.f32 %v4838, 0.0
    %v5095 = vmax.f32 %v4839, 0.0
    %v5096 = vmax.f32 %v4840, 0.0
    %v5097 = vmax.f32 %v4841, 0.0
    %v5098 = vmax.f32 %v4842, 0.0
    %v5099 = vmax.f32 %v4843, 0.0
    %v5100 = vmax.f32 %v4844, 0.0
    %v5101 = vmax.f32 %v4845, 0.0
    %v5102 = vmax.f32 %v4846, 0.0
    %v5103 = vmax.f32 %v4847, 0.0
    %v5104 = vmax.f32 %v4848, 0.0
    %v5105 = vmax.f32 %v4849, 0.0
    %v5106 = vmax.f32 %v4850, 0.0
    %v5107 = vmax.f32 %v4851, 0.0
    %v5108 = vmax.f32 %v4852, 0.0
    %v5109 = vmax.f32 %v4853, 0.0
    %v5110 = vmax.f32 %v4854, 0.0
    %v5111 = vmax.f32 %v4855, 0.0
    %v5112 = vmax.f32 %v4856, 0.0
    %v5113 = vmax.f32 %v4857, 0.0
    %v5114 = vmax.f32 %v4858, 0.0
    %v5115 = vmax.f32 %v4859, 0.0
    %v5116 = vmax.f32 %v4860, 0.0
    %v5117 = vmax.f32 %v4861, 0.0
    %v5118 = vmax.f32 %v4862, 0.0
    %v5119 = vmax.f32 %v4863, 0.0
    %v5120 = vmax.f32 %v4864, 0.0
    %v5121 = vmax.f32 %v4865, 0.0
    %v5122 = vmax.f32 %v4866, 0.0
    %v5123 = vmax.f32 %v4867, 0.0
    %v5124 = vmax.f32 %v4868, 0.0
    %v5125 = vmax.f32 %v4869, 0.0
    %v5126 = vmax.f32 %v4870, 0.0
    %v5127 = vmax.f32 %v4871, 0.0
    %v5128 = vmax.f32 %v4872, 0.0
    %v5129 = vmax.f32 %v4873, 0.0
    %v5130 = vmax.f32 %v4874, 0.0
    %v5131 = vmax.f32 %v4875, 0.0
    %v5132 = vmax.f32 %v4876, 0.0
    %v5133 = vmax.f32 %v4877, 0.0
    %v5134 = vmax.f32 %v4878, 0.0
    %v5135 = vmax.f32 %v4879, 0.0
    %v5136 = vmax.f32 %v4880, 0.0
    %v5137 = vmax.f32 %v4881, 0.0
    %v5138 = vmax.f32 %v4882, 0.0
    %v5139 = vmax.f32 %v4883, 0.0
    %v5140 = vmax.f32 %v4884, 0.0
    %v5141 = vmax.f32 %v4885, 0.0
    %v5142 = vmax.f32 %v4886, 0.0
    %v5143 = vmax.f32 %v4887, 0.0
    %v5144 = vmax.f32 %v4888, 0.0
    %v5145 = vmax.f32 %v4889, 0.0
    %v5146 = vmax.f32 %v4890, 0.0
    %v5147 = vmax.f32 %v4891, 0.0
    %v5148 = vmax.f32 %v4892, 0.0
    %v5149 = vmax.f32 %v4893, 0.0
    %v5150 = vmax.f32 %v4894, 0.0
    %v5151 = vmax.f32 %v4895, 0.0
    %v5152 = vmax.f32 %v4896, 0.0
    %v5153 = vmax.f32 %v4897, 0.0
    %v5154 = vmax.f32 %v4898, 0.0
    %v5155 = vmax.f32 %v4899, 0.0
    %v5156 = vmax.f32 %v4900, 0.0
    %v5157 = vmax.f32 %v4901, 0.0
    %v5158 = vmax.f32 %v4902, 0.0
    %v5159 = vmax.f32 %v4903, 0.0
    %v5160 = vmax.f32 %v4904, 0.0
    %v5161 = vmax.f32 %v4905, 0.0
    %v5162 = vmax.f32 %v4906, 0.0
    %v5163 = vmax.f32 %v4907, 0.0
    %v5164 = vmax.f32 %v4908, 0.0
    %v5165 = vmax.f32 %v4909, 0.0
    %v5166 = vmax.f32 %v4910, 0.0
    %v5167 = vmax.f32 %v4911, 0.0
    %v5168 = vmax.f32 %v4912, 0.0
    %v5169 = vmax.f32 %v4913, 0.0
    %v5170 = vmax.f32 %v4914, 0.0
    %v5171 = vmax.f32 %v4915, 0.0
    %v5172 = vmax.f32 %v4916, 0.0
    %v5173 = vmax.f32 %v4917, 0.0
    %v5174 = vmax.f32 %v4918, 0.0
    %v5175 = vmax.f32 %v4919, 0.0
    %v5176 = vmax.f32 %v4920, 0.0
    %v5177 = vmax.f32 %v4921, 0.0
    %v5178 = vmax.f32 %v4922, 0.0
    %v5179 = vmax.f32 %v4923, 0.0
    %v5180 = vmax.f32 %v4924, 0.0
    %v5181 = vmax.f32 %v4925, 0.0
    %v5182 = vmax.f32 %v4926, 0.0
    %v5183 = vmax.f32 %v4927, 0.0
    %v5184 = vmax.f32 %v4928, 0.0
    %v5185 = vmax.f32 %v4929, 0.0
    %v5186 = vmax.f32 %v4930, 0.0
    %v5187 = vmax.f32 %v4931, 0.0
    %v5188 = vmax.f32 %v4932, 0.0
    %v5189 = vmax.f32 %v4933, 0.0
    %v5190 = vmax.f32 %v4934, 0.0
    %v5191 = vmax.f32 %v4935, 0.0
    %v5192 = vmax.f32 %v4936, 0.0
    %v5193 = vmax.f32 %v4937, 0.0
    %v5194 = vmax.f32 %v4938, 0.0
    %v5195 = vmax.f32 %v4939, 0.0
    %v5196 = vmax.f32 %v4940, 0.0
    %v5197 = vmax.f32 %v4941, 0.0
    %v5198 = vmax.f32 %v4942, 0.0
    %v5199 = vmax.f32 %v4943, 0.0
    %v5200 = vmax.f32 %v4944, 0.0
    %v5201 = vmax.f32 %v4945, 0.0
    %v5202 = vmax.f32 %v4946, 0.0
    %v5203 = vmax.f32 %v4947, 0.0
    %v5204 = vmax.f32 %v4948, 0.0
    %v5205 = vmax.f32 %v4949, 0.0
    %v5206 = vmax.f32 %v4950, 0.0
    %v5207 = vmax.f32 %v4951, 0.0
    %v5208 = vmax.f32 %v4952, 0.0
    %v5209 = vmax.f32 %v4953, 0.0
    %v5210 = vmax.f32 %v4954, 0.0
    %v5211 = vmax.f32 %v4955, 0.0
    %v5212 = vmax.f32 %v4956, 0.0
    %v5213 = vmax.f32 %v4957, 0.0
    %v5214 = vmax.f32 %v4958, 0.0
    %v5215 = vmax.f32 %v4959, 0.0
    %v5216 = vmax.f32 %v4960, 0.0
    %v5217 = vmax.f32 %v4961, 0.0
    %v5218 = vmax.f32 %v4962, 0.0
    %v5219 = vmax.f32 %v4963, 0.0
    %v5220 = vmax.f32 %v4964, 0.0
    %v5221 = vmax.f32 %v4965, 0.0
    %v5222 = vmax.f32 %v4966, 0.0
    %v5223 = vmax.f32 %v4967, 0.0
    %v5224 = vmax.f32 %v4968, 0.0
    %v5225 = vmax.f32 %v4969, 0.0
    %v5226 = vmax.f32 %v4970, 0.0
    %v5227 = vmax.f32 %v4971, 0.0
    %v5228 = vmax.f32 %v4972, 0.0
    %v5229 = vmax.f32 %v4973, 0.0
    %v5230 = vmax.f32 %v4974, 0.0
    %v5231 = vmax.f32 %v4975, 0.0
    %v5232 = vmax.f32 %v4976, 0.0
    %v5233 = vmax.f32 %v4977, 0.0
    %v5234 = vmax.f32 %v4978, 0.0
    %v5235 = vmax.f32 %v4979, 0.0
    %v5236 = vmax.f32 %v4980, 0.0
    %v5237 = vmax.f32 %v4981, 0.0
    %v5238 = vmax.f32 %v4982, 0.0
    %v5239 = vmax.f32 %v4983, 0.0
    %v5240 = vmax.f32 %v4984, 0.0
    %v5241 = vmax.f32 %v4985, 0.0
    %v5242 = vmax.f32 %v4986, 0.0
    %v5243 = vmax.f32 %v4987, 0.0
    %v5244 = vmax.f32 %v4988, 0.0
    %v5245 = vmax.f32 %v4989, 0.0
    %v5246 = vmax.f32 %v4990, 0.0
    %v5247 = vmax.f32 %v4991, 0.0
    %v5248 = vmax.f32 %v4992, 0.0
    %v5249 = vmax.f32 %v4993, 0.0
    %v5250 = vmax.f32 %v4994, 0.0
    %v5251 = vmax.f32 %v4995, 0.0
    %v5252 = vmax.f32 %v4996, 0.0
    %v5253 = vmax.f32 %v4997, 0.0
    %v5254 = vmax.f32 %v4998, 0.0
    %v5255 = vmax.f32 %v4999, 0.0
    %v5256 = vmax.f32 %v5000, 0.0
    %v5257 = vmax.f32 %v5001, 0.0
    %v5258 = vmax.f32 %v5002, 0.0
    %v5259 = vmax.f32 %v5003, 0.0
    %v5260 = vmax.f32 %v5004, 0.0
    %v5261 = vmax.f32 %v5005, 0.0
    %v5262 = vmax.f32 %v5006, 0.0
    %v5263 = vmax.f32 %v5007, 0.0
    %v5264 = vmax.f32 %v5008, 0.0
    %v5265 = vmax.f32 %v5009, 0.0
    %v5266 = vmax.f32 %v5010, 0.0
    %v5267 = vmax.f32 %v5011, 0.0
    %v5268 = vmax.f32 %v5012, 0.0
    %v5269 = vmax.f32 %v5013, 0.0
    %v5270 = vmax.f32 %v5014, 0.0
    %v5271 = vmax.f32 %v5015, 0.0
    %v5272 = vmax.f32 %v5016, 0.0
    %v5273 = vmax.f32 %v5017, 0.0
    %v5274 = vmax.f32 %v5018, 0.0
    %v5275 = vmax.f32 %v5019, 0.0
    %v5276 = vmax.f32 %v5020, 0.0
    %v5277 = vmax.f32 %v5021, 0.0
    %v5278 = vmax.f32 %v5022, 0.0
    %v5279 = vmax.f32 %v5023, 0.0
    %v5280 = vmax.f32 %v5024, 0.0
    %v5281 = vmax.f32 %v5025, 0.0
    %v5282 = vmax.f32 %v5026, 0.0
    %v5283 = vmax.f32 %v5027, 0.0
    %v5284 = vmax.f32 %v5028, 0.0
    %v5285 = vmax.f32 %v5029, 0.0
    %v5286 = vmax.f32 %v5030, 0.0
    %v5287 = vmax.f32 %v5031, 0.0
    %v5288 = vmax.f32 %v5032, 0.0
    %v5289 = vmax.f32 %v5033, 0.0
    %v5290 = vmax.f32 %v5034, 0.0
    %v5291 = vmax.f32 %v5035, 0.0
    %v5292 = vmax.f32 %v5036, 0.0
    %5293 = vst.msk [vmem:[#allocation2] sm:$0xff] %vm2961, %v5037
    %5294 = vst.msk [vmem:[#allocation2 + $0x8] sm:$0xff] %vm2961, %v5038
    %5295 = vst.msk [vmem:[#allocation2 + $0x10] sm:$0xff] %vm2961, %v5039
    %5296 = vst.msk [vmem:[#allocation2 + $0x18] sm:$0xff] %vm2961, %v5040
    %5297 = vst.msk [vmem:[#allocation2 + $0x20] sm:$0xff] %vm2961, %v5041
    %5298 = vst.msk [vmem:[#allocation2 + $0x28] sm:$0xff] %vm2961, %v5042
    %5299 = vst.msk [vmem:[#allocation2 + $0x30] sm:$0xff] %vm2961, %v5043
    %5300 = vst.msk [vmem:[#allocation2 + $0x38] sm:$0xff] %vm2961, %v5044
    %5301 = vst.msk [vmem:[#allocation2 + $0x40] sm:$0xff] %vm2961, %v5045
    %5302 = vst.msk [vmem:[#allocation2 + $0x48] sm:$0xff] %vm2961, %v5046
    %5303 = vst.msk [vmem:[#allocation2 + $0x50] sm:$0xff] %vm2961, %v5047
    %5304 = vst.msk [vmem:[#allocation2 + $0x58] sm:$0xff] %vm2961, %v5048
    %5305 = vst.msk [vmem:[#allocation2 + $0x60] sm:$0xff] %vm2961, %v5049
    %5306 = vst.msk [vmem:[#allocation2 + $0x68] sm:$0xff] %vm2961, %v5050
    %5307 = vst.msk [vmem:[#allocation2 + $0x70] sm:$0xff] %vm2961, %v5051
    %5308 = vst.msk [vmem:[#allocation2 + $0x78] sm:$0xff] %vm2961, %v5052
    %5309 = vst.msk [vmem:[#allocation2 + $0x80] sm:$0xff] %vm2961, %v5053
    %5310 = vst.msk [vmem:[#allocation2 + $0x88] sm:$0xff] %vm2961, %v5054
    %5311 = vst.msk [vmem:[#allocation2 + $0x90] sm:$0xff] %vm2961, %v5055
    %5312 = vst.msk [vmem:[#allocation2 + $0x98] sm:$0xff] %vm2961, %v5056
    %5313 = vst.msk [vmem:[#allocation2 + $0xa0] sm:$0xff] %vm2961, %v5057
    %5314 = vst.msk [vmem:[#allocation2 + $0xa8] sm:$0xff] %vm2961, %v5058
    %5315 = vst.msk [vmem:[#allocation2 + $0xb0] sm:$0xff] %vm2961, %v5059
    %5316 = vst.msk [vmem:[#allocation2 + $0xb8] sm:$0xff] %vm2961, %v5060
    %5317 = vst.msk [vmem:[#allocation2 + $0xc0] sm:$0xff] %vm2961, %v5061
    %5318 = vst.msk [vmem:[#allocation2 + $0xc8] sm:$0xff] %vm2961, %v5062
    %5319 = vst.msk [vmem:[#allocation2 + $0xd0] sm:$0xff] %vm2961, %v5063
    %5320 = vst.msk [vmem:[#allocation2 + $0xd8] sm:$0xff] %vm2961, %v5064
    %5321 = vst.msk [vmem:[#allocation2 + $0xe0] sm:$0xff] %vm2961, %v5065
    %5322 = vst.msk [vmem:[#allocation2 + $0xe8] sm:$0xff] %vm2961, %v5066
    %5323 = vst.msk [vmem:[#allocation2 + $0xf0] sm:$0xff] %vm2961, %v5067
    %5324 = vst.msk [vmem:[#allocation2 + $0xf8] sm:$0xff] %vm2961, %v5068
    %5325 = vst.msk [vmem:[#allocation2 + $0x100] sm:$0xff] %vm2961, %v5069
    %5326 = vst.msk [vmem:[#allocation2 + $0x108] sm:$0xff] %vm2961, %v5070
    %5327 = vst.msk [vmem:[#allocation2 + $0x110] sm:$0xff] %vm2961, %v5071
    %5328 = vst.msk [vmem:[#allocation2 + $0x118] sm:$0xff] %vm2961, %v5072
    %5329 = vst.msk [vmem:[#allocation2 + $0x120] sm:$0xff] %vm2961, %v5073
    %5330 = vst.msk [vmem:[#allocation2 + $0x128] sm:$0xff] %vm2961, %v5074
    %5331 = vst.msk [vmem:[#allocation2 + $0x130] sm:$0xff] %vm2961, %v5075
    %5332 = vst.msk [vmem:[#allocation2 + $0x138] sm:$0xff] %vm2961, %v5076
    %5333 = vst.msk [vmem:[#allocation2 + $0x140] sm:$0xff] %vm2961, %v5077
    %5334 = vst.msk [vmem:[#allocation2 + $0x148] sm:$0xff] %vm2961, %v5078
    %5335 = vst.msk [vmem:[#allocation2 + $0x150] sm:$0xff] %vm2961, %v5079
    %5336 = vst.msk [vmem:[#allocation2 + $0x158] sm:$0xff] %vm2961, %v5080
    %5337 = vst.msk [vmem:[#allocation2 + $0x160] sm:$0xff] %vm2961, %v5081
    %5338 = vst.msk [vmem:[#allocation2 + $0x168] sm:$0xff] %vm2961, %v5082
    %5339 = vst.msk [vmem:[#allocation2 + $0x170] sm:$0xff] %vm2961, %v5083
    %5340 = vst.msk [vmem:[#allocation2 + $0x178] sm:$0xff] %vm2961, %v5084
    %5341 = vst.msk [vmem:[#allocation2 + $0x180] sm:$0xff] %vm2961, %v5085
    %5342 = vst.msk [vmem:[#allocation2 + $0x188] sm:$0xff] %vm2961, %v5086
    %5343 = vst.msk [vmem:[#allocation2 + $0x190] sm:$0xff] %vm2961, %v5087
    %5344 = vst.msk [vmem:[#allocation2 + $0x198] sm:$0xff] %vm2961, %v5088
    %5345 = vst.msk [vmem:[#allocation2 + $0x1a0] sm:$0xff] %vm2961, %v5089
    %5346 = vst.msk [vmem:[#allocation2 + $0x1a8] sm:$0xff] %vm2961, %v5090
    %5347 = vst.msk [vmem:[#allocation2 + $0x1b0] sm:$0xff] %vm2961, %v5091
    %5348 = vst.msk [vmem:[#allocation2 + $0x1b8] sm:$0xff] %vm2961, %v5092
    %5349 = vst.msk [vmem:[#allocation2 + $0x1c0] sm:$0xff] %vm2961, %v5093
    %5350 = vst.msk [vmem:[#allocation2 + $0x1c8] sm:$0xff] %vm2961, %v5094
    %5351 = vst.msk [vmem:[#allocation2 + $0x1d0] sm:$0xff] %vm2961, %v5095
    %5352 = vst.msk [vmem:[#allocation2 + $0x1d8] sm:$0xff] %vm2961, %v5096
    %5353 = vst.msk [vmem:[#allocation2 + $0x1e0] sm:$0xff] %vm2961, %v5097
    %5354 = vst.msk [vmem:[#allocation2 + $0x1e8] sm:$0xff] %vm2961, %v5098
    %5355 = vst.msk [vmem:[#allocation2 + $0x1f0] sm:$0xff] %vm2961, %v5099
    %5356 = vst.msk [vmem:[#allocation2 + $0x1f8] sm:$0xff] %vm2961, %v5100
    %5357 = vst.msk [vmem:[#allocation2 + $0x200] sm:$0xff] %vm2961, %v5101
    %5358 = vst.msk [vmem:[#allocation2 + $0x208] sm:$0xff] %vm2961, %v5102
    %5359 = vst.msk [vmem:[#allocation2 + $0x210] sm:$0xff] %vm2961, %v5103
    %5360 = vst.msk [vmem:[#allocation2 + $0x218] sm:$0xff] %vm2961, %v5104
    %5361 = vst.msk [vmem:[#allocation2 + $0x220] sm:$0xff] %vm2961, %v5105
    %5362 = vst.msk [vmem:[#allocation2 + $0x228] sm:$0xff] %vm2961, %v5106
    %5363 = vst.msk [vmem:[#allocation2 + $0x230] sm:$0xff] %vm2961, %v5107
    %5364 = vst.msk [vmem:[#allocation2 + $0x238] sm:$0xff] %vm2961, %v5108
    %5365 = vst.msk [vmem:[#allocation2 + $0x240] sm:$0xff] %vm2961, %v5109
    %5366 = vst.msk [vmem:[#allocation2 + $0x248] sm:$0xff] %vm2961, %v5110
    %5367 = vst.msk [vmem:[#allocation2 + $0x250] sm:$0xff] %vm2961, %v5111
    %5368 = vst.msk [vmem:[#allocation2 + $0x258] sm:$0xff] %vm2961, %v5112
    %5369 = vst.msk [vmem:[#allocation2 + $0x260] sm:$0xff] %vm2961, %v5113
    %5370 = vst.msk [vmem:[#allocation2 + $0x268] sm:$0xff] %vm2961, %v5114
    %5371 = vst.msk [vmem:[#allocation2 + $0x270] sm:$0xff] %vm2961, %v5115
    %5372 = vst.msk [vmem:[#allocation2 + $0x278] sm:$0xff] %vm2961, %v5116
    %5373 = vst.msk [vmem:[#allocation2 + $0x280] sm:$0xff] %vm2961, %v5117
    %5374 = vst.msk [vmem:[#allocation2 + $0x288] sm:$0xff] %vm2961, %v5118
    %5375 = vst.msk [vmem:[#allocation2 + $0x290] sm:$0xff] %vm2961, %v5119
    %5376 = vst.msk [vmem:[#allocation2 + $0x298] sm:$0xff] %vm2961, %v5120
    %5377 = vst.msk [vmem:[#allocation2 + $0x2a0] sm:$0xff] %vm2961, %v5121
    %5378 = vst.msk [vmem:[#allocation2 + $0x2a8] sm:$0xff] %vm2961, %v5122
    %5379 = vst.msk [vmem:[#allocation2 + $0x2b0] sm:$0xff] %vm2961, %v5123
    %5380 = vst.msk [vmem:[#allocation2 + $0x2b8] sm:$0xff] %vm2961, %v5124
    %5381 = vst.msk [vmem:[#allocation2 + $0x2c0] sm:$0xff] %vm2961, %v5125
    %5382 = vst.msk [vmem:[#allocation2 + $0x2c8] sm:$0xff] %vm2961, %v5126
    %5383 = vst.msk [vmem:[#allocation2 + $0x2d0] sm:$0xff] %vm2961, %v5127
    %5384 = vst.msk [vmem:[#allocation2 + $0x2d8] sm:$0xff] %vm2961, %v5128
    %5385 = vst.msk [vmem:[#allocation2 + $0x2e0] sm:$0xff] %vm2961, %v5129
    %5386 = vst.msk [vmem:[#allocation2 + $0x2e8] sm:$0xff] %vm2961, %v5130
    %5387 = vst.msk [vmem:[#allocation2 + $0x2f0] sm:$0xff] %vm2961, %v5131
    %5388 = vst.msk [vmem:[#allocation2 + $0x2f8] sm:$0xff] %vm2961, %v5132
    %5389 = vst.msk [vmem:[#allocation2 + $0x300] sm:$0xff] %vm2961, %v5133
    %5390 = vst.msk [vmem:[#allocation2 + $0x308] sm:$0xff] %vm2961, %v5134
    %5391 = vst.msk [vmem:[#allocation2 + $0x310] sm:$0xff] %vm2961, %v5135
    %5392 = vst.msk [vmem:[#allocation2 + $0x318] sm:$0xff] %vm2961, %v5136
    %5393 = vst.msk [vmem:[#allocation2 + $0x320] sm:$0xff] %vm2961, %v5137
    %5394 = vst.msk [vmem:[#allocation2 + $0x328] sm:$0xff] %vm2961, %v5138
    %5395 = vst.msk [vmem:[#allocation2 + $0x330] sm:$0xff] %vm2961, %v5139
    %5396 = vst.msk [vmem:[#allocation2 + $0x338] sm:$0xff] %vm2961, %v5140
    %5397 = vst.msk [vmem:[#allocation2 + $0x340] sm:$0xff] %vm2961, %v5141
    %5398 = vst.msk [vmem:[#allocation2 + $0x348] sm:$0xff] %vm2961, %v5142
    %5399 = vst.msk [vmem:[#allocation2 + $0x350] sm:$0xff] %vm2961, %v5143
    %5400 = vst.msk [vmem:[#allocation2 + $0x358] sm:$0xff] %vm2961, %v5144
    %5401 = vst.msk [vmem:[#allocation2 + $0x360] sm:$0xff] %vm2961, %v5145
    %5402 = vst.msk [vmem:[#allocation2 + $0x368] sm:$0xff] %vm2961, %v5146
    %5403 = vst.msk [vmem:[#allocation2 + $0x370] sm:$0xff] %vm2961, %v5147
    %5404 = vst.msk [vmem:[#allocation2 + $0x378] sm:$0xff] %vm2961, %v5148
    %5405 = vst.msk [vmem:[#allocation2 + $0x380] sm:$0xff] %vm2961, %v5149
    %5406 = vst.msk [vmem:[#allocation2 + $0x388] sm:$0xff] %vm2961, %v5150
    %5407 = vst.msk [vmem:[#allocation2 + $0x390] sm:$0xff] %vm2961, %v5151
    %5408 = vst.msk [vmem:[#allocation2 + $0x398] sm:$0xff] %vm2961, %v5152
    %5409 = vst.msk [vmem:[#allocation2 + $0x3a0] sm:$0xff] %vm2961, %v5153
    %5410 = vst.msk [vmem:[#allocation2 + $0x3a8] sm:$0xff] %vm2961, %v5154
    %5411 = vst.msk [vmem:[#allocation2 + $0x3b0] sm:$0xff] %vm2961, %v5155
    %5412 = vst.msk [vmem:[#allocation2 + $0x3b8] sm:$0xff] %vm2961, %v5156
    %5413 = vst.msk [vmem:[#allocation2 + $0x3c0] sm:$0xff] %vm2961, %v5157
    %5414 = vst.msk [vmem:[#allocation2 + $0x3c8] sm:$0xff] %vm2961, %v5158
    %5415 = vst.msk [vmem:[#allocation2 + $0x3d0] sm:$0xff] %vm2961, %v5159
    %5416 = vst.msk [vmem:[#allocation2 + $0x3d8] sm:$0xff] %vm2961, %v5160
    %5417 = vst.msk [vmem:[#allocation2 + $0x3e0] sm:$0xff] %vm2961, %v5161
    %5418 = vst.msk [vmem:[#allocation2 + $0x3e8] sm:$0xff] %vm2961, %v5162
    %5419 = vst.msk [vmem:[#allocation2 + $0x3f0] sm:$0xff] %vm2961, %v5163
    %5420 = vst.msk [vmem:[#allocation2 + $0x3f8] sm:$0xff] %vm2961, %v5164
    %5421 = vst.msk [vmem:[#allocation2 + $0x400] sm:$0xff] %vm2961, %v5165
    %5422 = vst.msk [vmem:[#allocation2 + $0x408] sm:$0xff] %vm2961, %v5166
    %5423 = vst.msk [vmem:[#allocation2 + $0x410] sm:$0xff] %vm2961, %v5167
    %5424 = vst.msk [vmem:[#allocation2 + $0x418] sm:$0xff] %vm2961, %v5168
    %5425 = vst.msk [vmem:[#allocation2 + $0x420] sm:$0xff] %vm2961, %v5169
    %5426 = vst.msk [vmem:[#allocation2 + $0x428] sm:$0xff] %vm2961, %v5170
    %5427 = vst.msk [vmem:[#allocation2 + $0x430] sm:$0xff] %vm2961, %v5171
    %5428 = vst.msk [vmem:[#allocation2 + $0x438] sm:$0xff] %vm2961, %v5172
    %5429 = vst.msk [vmem:[#allocation2 + $0x440] sm:$0xff] %vm2961, %v5173
    %5430 = vst.msk [vmem:[#allocation2 + $0x448] sm:$0xff] %vm2961, %v5174
    %5431 = vst.msk [vmem:[#allocation2 + $0x450] sm:$0xff] %vm2961, %v5175
    %5432 = vst.msk [vmem:[#allocation2 + $0x458] sm:$0xff] %vm2961, %v5176
    %5433 = vst.msk [vmem:[#allocation2 + $0x460] sm:$0xff] %vm2961, %v5177
    %5434 = vst.msk [vmem:[#allocation2 + $0x468] sm:$0xff] %vm2961, %v5178
    %5435 = vst.msk [vmem:[#allocation2 + $0x470] sm:$0xff] %vm2961, %v5179
    %5436 = vst.msk [vmem:[#allocation2 + $0x478] sm:$0xff] %vm2961, %v5180
    %5437 = vst.msk [vmem:[#allocation2 + $0x480] sm:$0xff] %vm2961, %v5181
    %5438 = vst.msk [vmem:[#allocation2 + $0x488] sm:$0xff] %vm2961, %v5182
    %5439 = vst.msk [vmem:[#allocation2 + $0x490] sm:$0xff] %vm2961, %v5183
    %5440 = vst.msk [vmem:[#allocation2 + $0x498] sm:$0xff] %vm2961, %v5184
    %5441 = vst.msk [vmem:[#allocation2 + $0x4a0] sm:$0xff] %vm2961, %v5185
    %5442 = vst.msk [vmem:[#allocation2 + $0x4a8] sm:$0xff] %vm2961, %v5186
    %5443 = vst.msk [vmem:[#allocation2 + $0x4b0] sm:$0xff] %vm2961, %v5187
    %5444 = vst.msk [vmem:[#allocation2 + $0x4b8] sm:$0xff] %vm2961, %v5188
    %5445 = vst.msk [vmem:[#allocation2 + $0x4c0] sm:$0xff] %vm2961, %v5189
    %5446 = vst.msk [vmem:[#allocation2 + $0x4c8] sm:$0xff] %vm2961, %v5190
    %5447 = vst.msk [vmem:[#allocation2 + $0x4d0] sm:$0xff] %vm2961, %v5191
    %5448 = vst.msk [vmem:[#allocation2 + $0x4d8] sm:$0xff] %vm2961, %v5192
    %5449 = vst.msk [vmem:[#allocation2 + $0x4e0] sm:$0xff] %vm2961, %v5193
    %5450 = vst.msk [vmem:[#allocation2 + $0x4e8] sm:$0xff] %vm2961, %v5194
    %5451 = vst.msk [vmem:[#allocation2 + $0x4f0] sm:$0xff] %vm2961, %v5195
    %5452 = vst.msk [vmem:[#allocation2 + $0x4f8] sm:$0xff] %vm2961, %v5196
    %5453 = vst.msk [vmem:[#allocation2 + $0x500] sm:$0xff] %vm2961, %v5197
    %5454 = vst.msk [vmem:[#allocation2 + $0x508] sm:$0xff] %vm2961, %v5198
    %5455 = vst.msk [vmem:[#allocation2 + $0x510] sm:$0xff] %vm2961, %v5199
    %5456 = vst.msk [vmem:[#allocation2 + $0x518] sm:$0xff] %vm2961, %v5200
    %5457 = vst.msk [vmem:[#allocation2 + $0x520] sm:$0xff] %vm2961, %v5201
    %5458 = vst.msk [vmem:[#allocation2 + $0x528] sm:$0xff] %vm2961, %v5202
    %5459 = vst.msk [vmem:[#allocation2 + $0x530] sm:$0xff] %vm2961, %v5203
    %5460 = vst.msk [vmem:[#allocation2 + $0x538] sm:$0xff] %vm2961, %v5204
    %5461 = vst.msk [vmem:[#allocation2 + $0x540] sm:$0xff] %vm2961, %v5205
    %5462 = vst.msk [vmem:[#allocation2 + $0x548] sm:$0xff] %vm2961, %v5206
    %5463 = vst.msk [vmem:[#allocation2 + $0x550] sm:$0xff] %vm2961, %v5207
    %5464 = vst.msk [vmem:[#allocation2 + $0x558] sm:$0xff] %vm2961, %v5208
    %5465 = vst.msk [vmem:[#allocation2 + $0x560] sm:$0xff] %vm2961, %v5209
    %5466 = vst.msk [vmem:[#allocation2 + $0x568] sm:$0xff] %vm2961, %v5210
    %5467 = vst.msk [vmem:[#allocation2 + $0x570] sm:$0xff] %vm2961, %v5211
    %5468 = vst.msk [vmem:[#allocation2 + $0x578] sm:$0xff] %vm2961, %v5212
    %5469 = vst.msk [vmem:[#allocation2 + $0x580] sm:$0xff] %vm2961, %v5213
    %5470 = vst.msk [vmem:[#allocation2 + $0x588] sm:$0xff] %vm2961, %v5214
    %5471 = vst.msk [vmem:[#allocation2 + $0x590] sm:$0xff] %vm2961, %v5215
    %5472 = vst.msk [vmem:[#allocation2 + $0x598] sm:$0xff] %vm2961, %v5216
    %5473 = vst.msk [vmem:[#allocation2 + $0x5a0] sm:$0xff] %vm2961, %v5217
    %5474 = vst.msk [vmem:[#allocation2 + $0x5a8] sm:$0xff] %vm2961, %v5218
    %5475 = vst.msk [vmem:[#allocation2 + $0x5b0] sm:$0xff] %vm2961, %v5219
    %5476 = vst.msk [vmem:[#allocation2 + $0x5b8] sm:$0xff] %vm2961, %v5220
    %5477 = vst.msk [vmem:[#allocation2 + $0x5c0] sm:$0xff] %vm2961, %v5221
    %5478 = vst.msk [vmem:[#allocation2 + $0x5c8] sm:$0xff] %vm2961, %v5222
    %5479 = vst.msk [vmem:[#allocation2 + $0x5d0] sm:$0xff] %vm2961, %v5223
    %5480 = vst.msk [vmem:[#allocation2 + $0x5d8] sm:$0xff] %vm2961, %v5224
    %5481 = vst.msk [vmem:[#allocation2 + $0x5e0] sm:$0xff] %vm2961, %v5225
    %5482 = vst.msk [vmem:[#allocation2 + $0x5e8] sm:$0xff] %vm2961, %v5226
    %5483 = vst.msk [vmem:[#allocation2 + $0x5f0] sm:$0xff] %vm2961, %v5227
    %5484 = vst.msk [vmem:[#allocation2 + $0x5f8] sm:$0xff] %vm2961, %v5228
    %5485 = vst.msk [vmem:[#allocation2 + $0x600] sm:$0xff] %vm2961, %v5229
    %5486 = vst.msk [vmem:[#allocation2 + $0x608] sm:$0xff] %vm2961, %v5230
    %5487 = vst.msk [vmem:[#allocation2 + $0x610] sm:$0xff] %vm2961, %v5231
    %5488 = vst.msk [vmem:[#allocation2 + $0x618] sm:$0xff] %vm2961, %v5232
    %5489 = vst.msk [vmem:[#allocation2 + $0x620] sm:$0xff] %vm2961, %v5233
    %5490 = vst.msk [vmem:[#allocation2 + $0x628] sm:$0xff] %vm2961, %v5234
    %5491 = vst.msk [vmem:[#allocation2 + $0x630] sm:$0xff] %vm2961, %v5235
    %5492 = vst.msk [vmem:[#allocation2 + $0x638] sm:$0xff] %vm2961, %v5236
    %5493 = vst.msk [vmem:[#allocation2 + $0x640] sm:$0xff] %vm2961, %v5237
    %5494 = vst.msk [vmem:[#allocation2 + $0x648] sm:$0xff] %vm2961, %v5238
    %5495 = vst.msk [vmem:[#allocation2 + $0x650] sm:$0xff] %vm2961, %v5239
    %5496 = vst.msk [vmem:[#allocation2 + $0x658] sm:$0xff] %vm2961, %v5240
    %5497 = vst.msk [vmem:[#allocation2 + $0x660] sm:$0xff] %vm2961, %v5241
    %5498 = vst.msk [vmem:[#allocation2 + $0x668] sm:$0xff] %vm2961, %v5242
    %5499 = vst.msk [vmem:[#allocation2 + $0x670] sm:$0xff] %vm2961, %v5243
    %5500 = vst.msk [vmem:[#allocation2 + $0x678] sm:$0xff] %vm2961, %v5244
    %5501 = vst.msk [vmem:[#allocation2 + $0x680] sm:$0xff] %vm2961, %v5245
    %5502 = vst.msk [vmem:[#allocation2 + $0x688] sm:$0xff] %vm2961, %v5246
    %5503 = vst.msk [vmem:[#allocation2 + $0x690] sm:$0xff] %vm2961, %v5247
    %5504 = vst.msk [vmem:[#allocation2 + $0x698] sm:$0xff] %vm2961, %v5248
    %5505 = vst.msk [vmem:[#allocation2 + $0x6a0] sm:$0xff] %vm2961, %v5249
    %5506 = vst.msk [vmem:[#allocation2 + $0x6a8] sm:$0xff] %vm2961, %v5250
    %5507 = vst.msk [vmem:[#allocation2 + $0x6b0] sm:$0xff] %vm2961, %v5251
    %5508 = vst.msk [vmem:[#allocation2 + $0x6b8] sm:$0xff] %vm2961, %v5252
    %5509 = vst.msk [vmem:[#allocation2 + $0x6c0] sm:$0xff] %vm2961, %v5253
    %5510 = vst.msk [vmem:[#allocation2 + $0x6c8] sm:$0xff] %vm2961, %v5254
    %5511 = vst.msk [vmem:[#allocation2 + $0x6d0] sm:$0xff] %vm2961, %v5255
    %5512 = vst.msk [vmem:[#allocation2 + $0x6d8] sm:$0xff] %vm2961, %v5256
    %5513 = vst.msk [vmem:[#allocation2 + $0x6e0] sm:$0xff] %vm2961, %v5257
    %5514 = vst.msk [vmem:[#allocation2 + $0x6e8] sm:$0xff] %vm2961, %v5258
    %5515 = vst.msk [vmem:[#allocation2 + $0x6f0] sm:$0xff] %vm2961, %v5259
    %5516 = vst.msk [vmem:[#allocation2 + $0x6f8] sm:$0xff] %vm2961, %v5260
    %5517 = vst.msk [vmem:[#allocation2 + $0x700] sm:$0xff] %vm2961, %v5261
    %5518 = vst.msk [vmem:[#allocation2 + $0x708] sm:$0xff] %vm2961, %v5262
    %5519 = vst.msk [vmem:[#allocation2 + $0x710] sm:$0xff] %vm2961, %v5263
    %5520 = vst.msk [vmem:[#allocation2 + $0x718] sm:$0xff] %vm2961, %v5264
    %5521 = vst.msk [vmem:[#allocation2 + $0x720] sm:$0xff] %vm2961, %v5265
    %5522 = vst.msk [vmem:[#allocation2 + $0x728] sm:$0xff] %vm2961, %v5266
    %5523 = vst.msk [vmem:[#allocation2 + $0x730] sm:$0xff] %vm2961, %v5267
    %5524 = vst.msk [vmem:[#allocation2 + $0x738] sm:$0xff] %vm2961, %v5268
    %5525 = vst.msk [vmem:[#allocation2 + $0x740] sm:$0xff] %vm2961, %v5269
    %5526 = vst.msk [vmem:[#allocation2 + $0x748] sm:$0xff] %vm2961, %v5270
    %5527 = vst.msk [vmem:[#allocation2 + $0x750] sm:$0xff] %vm2961, %v5271
    %5528 = vst.msk [vmem:[#allocation2 + $0x758] sm:$0xff] %vm2961, %v5272
    %5529 = vst.msk [vmem:[#allocation2 + $0x760] sm:$0xff] %vm2961, %v5273
    %5530 = vst.msk [vmem:[#allocation2 + $0x768] sm:$0xff] %vm2961, %v5274
    %5531 = vst.msk [vmem:[#allocation2 + $0x770] sm:$0xff] %vm2961, %v5275
    %5532 = vst.msk [vmem:[#allocation2 + $0x778] sm:$0xff] %vm2961, %v5276
    %5533 = vst.msk [vmem:[#allocation2 + $0x780] sm:$0xff] %vm2961, %v5277
    %5534 = vst.msk [vmem:[#allocation2 + $0x788] sm:$0xff] %vm2961, %v5278
    %5535 = vst.msk [vmem:[#allocation2 + $0x790] sm:$0xff] %vm2961, %v5279
    %5536 = vst.msk [vmem:[#allocation2 + $0x798] sm:$0xff] %vm2961, %v5280
    %5537 = vst.msk [vmem:[#allocation2 + $0x7a0] sm:$0xff] %vm2961, %v5281
    %5538 = vst.msk [vmem:[#allocation2 + $0x7a8] sm:$0xff] %vm2961, %v5282
    %5539 = vst.msk [vmem:[#allocation2 + $0x7b0] sm:$0xff] %vm2961, %v5283
    %5540 = vst.msk [vmem:[#allocation2 + $0x7b8] sm:$0xff] %vm2961, %v5284
    %5541 = vst.msk [vmem:[#allocation2 + $0x7c0] sm:$0xff] %vm2961, %v5285
    %5542 = vst.msk [vmem:[#allocation2 + $0x7c8] sm:$0xff] %vm2961, %v5286
    %5543 = vst.msk [vmem:[#allocation2 + $0x7d0] sm:$0xff] %vm2961, %v5287
    %5544 = vst.msk [vmem:[#allocation2 + $0x7d8] sm:$0xff] %vm2961, %v5288
    %5545 = vst.msk [vmem:[#allocation2 + $0x7e0] sm:$0xff] %vm2961, %v5289
    %5546 = vst.msk [vmem:[#allocation2 + $0x7e8] sm:$0xff] %vm2961, %v5290
    %5547 = vst.msk [vmem:[#allocation2 + $0x7f0] sm:$0xff] %vm2961, %v5291
    %5548 = vst.msk [vmem:[#allocation2 + $0x7f8] sm:$0xff] %vm2961, %v5292
    // Predicated region
    $region22: #{head_forward.1} parent=1 // pred_check
      _
    $region23: #{head_forward.1} parent=1 // pred_check_branch
      %5550 = sbr.rel (0) target = $region25
    $region24: #{head_forward.1} parent=1 // pred_region
      %s5552 = ssub.s32 32768, 32768
      %5553 = vsyncadd [#allocation3], %s5552
      %s5554 = sshll.u32 [#allocation2], 4
      %s5555 = int_to_ptr.vmem [resolvable:$true] %s5554
      %5560 = dma.vmem_to_hbm [thread:$0]  %s5555, 32768, %s5, [#allocation3], 128, 128, 8
    $region25: #{head_forward.1} parent=1 // pred_fallthru
      _
    // Predicated region
    $region26: #{head_forward.1} parent=1 // pred_check
      _
    $region27: #{head_forward.1} parent=1 // pred_check_branch
      %5562 = sbr.rel (0) target = $region29
    $region28: #{head_forward.1} parent=1 // pred_region
      %5563 = dma.done [#allocation3], 32768
    $region29: #{head_forward.1} parent=1 // pred_fallthru
      _
    %5564 = vsyncpa [#allocation3], 1

</llo_original>
